<compile_context>
chip_gen: v6e
topology: v6e:2x2x1
jax: 0.10.0
libtpu: 0.0.40
codegen_flags: <defaults>
</compile_context>

<pallas_src>
import jax
import jax.numpy as jnp
from jax.experimental import pallas as pl
from jax.experimental.pallas import tpu as pltpu


def _make_mlla_kernel(H, W, CE, C2E):
    N = H * W
    f32 = jnp.float32
    bf16 = jnp.bfloat16

    def mxu(a, b):
        return jnp.dot(a.astype(bf16), b.astype(bf16), preferred_element_type=f32)

    def kernel(x_ref,
               cpe_w_ref, cpe_b_ref,
               ln_g_ref, ln_b_ref,
               actin_w_ref, actin_b_ref,
               dwc_w_ref, dwc_b_ref,
               qk_w_ref, qk_b_ref,
               lepe_w_ref, lepe_b_ref,
               out_w_ref, out_b_ref,
               cos_ref, sin_ref, pswap_ref, hmask_ref, mavg_ref,
               o_ref):

        def silu(v):
            return v * jax.nn.sigmoid(v)

        def elu_p1(v):  # ELU(alpha=1) + 1, with the exp branch clamped (no inf)
            return jnp.where(v > 0, v + 1.0, jnp.exp(jnp.minimum(v, 0.0)))

        # ---- boundary masks for the row-flattened depthwise conv (built once) ----
        w_idx = jax.lax.broadcasted_iota(jnp.int32, (N, CE), 0) % W   # w coordinate per row
        maskL = (w_idx != 0).astype(f32)        # tap reads w-1: invalid at w == 0
        maskR = (w_idx != W - 1).astype(f32)    # tap reads w+1: invalid at w == W-1

        def shift_rows(x2d, off):
            # y[n] = x2d[n + off] (zero outside [0, N)); x2d is (N, CE)
            if off == 0:
                return x2d
            if off > 0:
                return jnp.concatenate([x2d[off:, :], jnp.zeros((off, CE), f32)], axis=0)
            return jnp.concatenate([jnp.zeros((-off, CE), f32), x2d[:N + off, :]], axis=0)

        def dw3x3(x2d, w_ref, b_ref):
            # depthwise 3x3 conv, padding=1, on a lane-dense (N=H*W, CE) slab
            w9 = w_ref[...]                                    # (9, CE) taps, row = ky*3+kx
            acc = jnp.broadcast_to(b_ref[...], (N, CE))
            for ky in range(3):
                for kx in range(3):
                    t = shift_rows(x2d, (ky - 1) * W + (kx - 1))
                    if kx == 0:
                        t = t * maskL
                    elif kx == 2:
                        t = t * maskR
                    acc = acc + w9[3 * ky + kx:3 * ky + kx + 1, :] * t
            return acc

        xb = x_ref[0].astype(f32)                              # (N, CE) -- 4 packed images

        # x = x + cpe1(x)
        x1 = xb + dw3x3(xb, cpe_w_ref, cpe_b_ref)

        # LayerNorm over each packed image's own C channels (block-averaging matmul, f32)
        mavg = mavg_ref[...]
        mu = jnp.dot(x1, mavg, preferred_element_type=f32)
        xc = x1 - mu
        var = jnp.dot(xc * xc, mavg, preferred_element_type=f32)
        xn = xc * jax.lax.rsqrt(var + 1e-5) * ln_g_ref[...] + ln_b_ref[...]

        # fused act_proj | in_proj
        ai = mxu(xn, actin_w_ref[...]) + actin_b_ref[...]      # (N, 2*CE)
        act_res = silu(ai[:, :CE])
        xi = ai[:, CE:]

        # x = SiLU(dwc(x))
        xd = silu(dw3x3(xi, dwc_w_ref, dwc_b_ref))

        # ---- LinearAttention with LePE and RoPE ----
        qk = mxu(xd, qk_w_ref[...]) + qk_b_ref[...]            # fused q|k projection
        q = elu_p1(qk[:, :CE])
        k = elu_p1(qk[:, CE:])
        v = xd

        # RoPE: one pair-swap matmul on stacked [q; k]
        cosF = cos_ref[...]
        sinF = sin_ref[...]
        rot = mxu(jnp.concatenate([q, k], axis=0), pswap_ref[...])
        q_rope = cosF * q + sinF * rot[:N, :]
        k_rope = cosF * k + sinF * rot[N:, :]

        hmask = hmask_ref[...]                                 # per-image-per-head block-diag
        k_mean = jnp.mean(k, axis=0, keepdims=True)            # (1, CE)
        denom = mxu(q * k_mean, hmask) + 1e-6
        z = 1.0 / denom                                        # per-head normalizer

        scale = float(N) ** -0.5
        kv = jax.lax.dot_general((k_rope * scale).astype(bf16),
                                 (v * scale).astype(bf16),
                                 dimension_numbers=(((0,), (0,)), ((), ())),
                                 preferred_element_type=f32)   # (CE, CE)
        kv = kv * hmask                                        # keep within-head blocks only
        attn = mxu(q_rope, kv) * z

        a_out = attn + dw3x3(v, lepe_w_ref, lepe_b_ref)

        # out_proj(x * act_res)
        y = mxu(a_out * act_res, out_w_ref[...]) + out_b_ref[...]
        o_ref[0] = y

    return kernel


def pack_mlla_constants(params, num_heads, H, W, pack):
    """Build packed / fused weights and RoPE-mask constants once (hoisted)."""
    f32, bf16 = jnp.float32, jnp.bfloat16
    p = params
    C = p['q_w'].shape[0]
    C2 = p['out_w'].shape[1]
    P = pack
    CE, C2E, N = P * C, P * C2, H * W
    head_dim = C // num_heads

    eye = jnp.eye(P, dtype=f32)

    def kron_w(w):                      # (Cin, Cout) -> block-diag (P*Cin, P*Cout)
        return jnp.kron(eye, w)

    def tile_r(v):                      # (1, C) -> (1, P*C)
        return jnp.tile(v, (1, P))

    # RoPE tables (the torch module builds RoPE(dim), i.e. base = dim, not 10000)
    k_max = C // 4
    theta = 1.0 / (float(C) ** (jnp.arange(k_max, dtype=f32) / k_max))
    ang_h = jnp.broadcast_to(jnp.arange(H, dtype=f32)[:, None, None] * theta, (H, W, k_max))
    ang_w = jnp.broadcast_to(jnp.arange(W, dtype=f32)[None, :, None] * theta, (H, W, k_max))
    angles = jnp.concatenate([ang_h, ang_w], axis=-1)                     # (H, W, C//2)
    cosF = jnp.tile(jnp.repeat(jnp.cos(angles), 2, axis=-1).reshape(N, C), (1, P))
    sinF = jnp.tile(jnp.repeat(jnp.sin(angles), 2, axis=-1).reshape(N, C), (1, P))

    # pair-swap/sign matrix on the packed channel axis (pairs never straddle images)
    j = jnp.arange(CE // 2)
    pswap = jnp.zeros((CE, CE), f32)
    pswap = pswap.at[2 * j + 1, 2 * j].set(-1.0)
    pswap = pswap.at[2 * j, 2 * j + 1].set(1.0)

    cidx = jnp.arange(CE)
    hmask = (cidx[:, None] // head_dim == cidx[None, :] // head_dim).astype(f32)

    mavg = jnp.kron(eye, jnp.full((C, C), 1.0 / C, f32))       # per-image channel averaging

    packed = dict(
        cpe_w=jnp.tile(p['cpe_w'], (1, P)), cpe_b=tile_r(p['cpe_b']),
        ln_g=tile_r(p['ln_g']), ln_b=tile_r(p['ln_b']),
        actin_w=jnp.concatenate([kron_w(p['act_w']), kron_w(p['in_w'])], axis=1).astype(bf16),
        actin_b=jnp.concatenate([tile_r(p['act_b']), tile_r(p['in_b'])], axis=1),
        dwc_w=jnp.tile(p['dwc_w'], (1, P)), dwc_b=tile_r(p['dwc_b']),
        qk_w=jnp.concatenate([kron_w(p['q_w']), kron_w(p['k_w'])], axis=1).astype(bf16),
        qk_b=jnp.concatenate([tile_r(p['q_b']), tile_r(p['k_b'])], axis=1),
        lepe_w=jnp.tile(p['lepe_w'], (1, P)), lepe_b=tile_r(p['lepe_b']),
        out_w=kron_w(p['out_w']).astype(bf16), out_b=tile_r(p['out_b']),
        cosF=cosF, sinF=sinF,
        pswap=pswap.astype(bf16), hmask=hmask, mavg=mavg,
    )
    meta = dict(C=C, C2=C2, P=P, CE=CE, C2E=C2E, N=N, H=H, W=W)
    return packed, meta


def mlla_block_forward(x_nchw, packed, meta):
    B, C, H, W = x_nchw.shape
    P, CE, C2E, N, C2 = meta['P'], meta['CE'], meta['C2E'], meta['N'], meta['C2']
    G = -(-B // P)              # packed groups (4 images per grid step)
    Bp = G * P

    xb = jnp.transpose(x_nchw, (0, 2, 3, 1)).astype(jnp.float32)       # (B, H, W, C)
    if Bp != B:
        xb = jnp.concatenate([xb, jnp.zeros((Bp - B, H, W, C), jnp.float32)], axis=0)
    # pack 4 images onto the channel (lane) axis: (G, N, P*C)
    xg = xb.reshape(G, P, H, W, C).transpose(0, 2, 3, 1, 4).reshape(G, N, CE)

    kernel = _make_mlla_kernel(H, W, CE, C2E)

    pk = packed
    weights = (pk['cpe_w'], pk['cpe_b'], pk['ln_g'], pk['ln_b'],
               pk['actin_w'], pk['actin_b'],
               pk['dwc_w'], pk['dwc_b'],
               pk['qk_w'], pk['qk_b'],
               pk['lepe_w'], pk['lepe_b'],
               pk['out_w'], pk['out_b'],
               pk['cosF'], pk['sinF'], pk['pswap'], pk['hmask'], pk['mavg'])

    def full_spec(a):
        return pl.BlockSpec(a.shape, lambda g, _nd=a.ndim: (0,) * _nd)

    in_specs = [pl.BlockSpec((1, N, CE), lambda g: (g, 0, 0))]
    in_specs += [full_spec(a) for a in weights]

    flops_step = (2 * N * CE * (2 * CE) * 2          # fused act|in and q|k
                  + 2 * (2 * N) * CE * CE            # stacked RoPE pair-swap
                  + 2 * N * CE * CE * 6              # mu, var, denom, kv, attn, out
                  + 27 * 2 * N * CE)                 # three depthwise 3x3 convs
    bytes_accessed = int(xg.size * 4 + G * N * C2E * 4
                         + sum(int(a.size) * a.dtype.itemsize for a in weights))
    cost = pl.CostEstimate(flops=int(G * flops_step),
                           transcendentals=int(G * 5 * N * CE),
                           bytes_accessed=bytes_accessed)

    y = pl.pallas_call(
        kernel,
        out_shape=jax.ShapeDtypeStruct((G, N, C2E), jnp.float32),
        grid_spec=pltpu.PrefetchScalarGridSpec(
            num_scalar_prefetch=0,
            grid=(G,),
            in_specs=in_specs,
            out_specs=pl.BlockSpec((1, N, C2E), lambda g: (g, 0, 0))),
        compiler_params=pltpu.CompilerParams(
            dimension_semantics=("parallel",)),
        cost_estimate=cost,
    )(xg, *weights)

    # unpack (G, N, P*C2) -> (B, C2, H, W)
    y = y.reshape(G, H, W, P, C2).transpose(0, 3, 1, 2, 4).reshape(Bp, H, W, C2)[:B]
    return jnp.transpose(y, (0, 3, 1, 2))


# ---------------- pure-JAX reference (mirrors the torch code path) ----------------
def mlla_block_reference(x_nchw, p, num_heads):
    B, C, H, W = x_nchw.shape
    N = H * W
    head_dim = C // num_heads

    def dwconv(t, w9, b):  # t: (B, H, W, C)
        tp = jnp.pad(t, ((0, 0), (1, 1), (1, 1), (0, 0)))
        out = jnp.zeros_like(t) + b[0]
        for ky in range(3):
            for kx in range(3):
                out = out + w9[ky * 3 + kx] * tp[:, ky:ky + H, kx:kx + W, :]
        return out

    x = jnp.transpose(x_nchw, (0, 2, 3, 1))
    x = x + dwconv(x, p['cpe_w'], p['cpe_b'])
    mu = x.mean(-1, keepdims=True)
    var = ((x - mu) ** 2).mean(-1, keepdims=True)
    x = (x - mu) / jnp.sqrt(var + 1e-5) * p['ln_g'][0] + p['ln_b'][0]
    act_res = jax.nn.silu(x @ p['act_w'] + p['act_b'][0])
    x = x @ p['in_w'] + p['in_b'][0]
    x = jax.nn.silu(dwconv(x, p['dwc_w'], p['dwc_b']))

    xf = x.reshape(B, N, C)
    q = jax.nn.elu(xf @ p['q_w'] + p['q_b'][0]) + 1.0
    k = jax.nn.elu(xf @ p['k_w'] + p['k_b'][0]) + 1.0
    v = xf

    k_max = C // 4
    theta = 1.0 / (float(C) ** (jnp.arange(k_max, dtype=jnp.float32) / k_max))
    ang_h = jnp.broadcast_to(jnp.arange(H, dtype=jnp.float32)[:, None, None] * theta, (H, W, k_max))
    ang_w = jnp.broadcast_to(jnp.arange(W, dtype=jnp.float32)[None, :, None] * theta, (H, W, k_max))
    ang = jnp.concatenate([ang_h, ang_w], axis=-1)
    cosA, sinA = jnp.cos(ang)[None], jnp.sin(ang)[None]

    def rope(t):
        tc = t.reshape(B, H, W, C // 2, 2)
        re, im = tc[..., 0], tc[..., 1]
        return jnp.stack([cosA * re - sinA * im, sinA * re + cosA * im], -1).reshape(B, N, C)

    q_rope, k_rope = rope(q), rope(k)

    def heads(t):
        return t.reshape(B, N, num_heads, head_dim).transpose(0, 2, 1, 3)

    qh, kh, vh, qrh, krh = map(heads, (q, k, v, q_rope, k_rope))
    z = 1.0 / (qh @ jnp.swapaxes(kh.mean(axis=2, keepdims=True), -2, -1) + 1e-6)
    kv = (jnp.swapaxes(krh, -2, -1) * N ** -0.5) @ (vh * N ** -0.5)
    a = (qrh @ kv) * z
    a = a.transpose(0, 2, 1, 3).reshape(B, N, C)
    a = a + dwconv(v.reshape(B, H, W, C), p['lepe_w'], p['lepe_b']).reshape(B, N, C)

    y = (a.reshape(B, H, W, C) * act_res) @ p['out_w'] + p['out_b'][0]
    return jnp.transpose(y, (0, 3, 1, 2))


if __name__ == "__main__":
    B, C, H, W = 8, 32, 8, 8     # c1 = 32
    C2 = 32                      # c2 = 32
    num_heads = 4
    PACK = 4                     # 4 images packed on the 128-lane channel axis

    key = jax.random.PRNGKey(0)
    ks = jax.random.split(key, 20)

    def w_init(k, shape, scale):
        return jax.random.normal(k, shape, jnp.float32) * scale

    s = float(C) ** -0.5
    params = {
        'cpe_w': w_init(ks[0], (9, C), 0.1),  'cpe_b': w_init(ks[1], (1, C), 0.02),
        'ln_g': 1.0 + w_init(ks[2], (1, C), 0.1), 'ln_b': w_init(ks[3], (1, C), 0.05),
        'act_w': w_init(ks[4], (C, C), s),    'act_b': w_init(ks[5], (1, C), 0.02),
        'in_w': w_init(ks[6], (C, C), s),     'in_b': w_init(ks[7], (1, C), 0.02),
        'dwc_w': w_init(ks[8], (9, C), 0.1),  'dwc_b': w_init(ks[9], (1, C), 0.02),
        'q_w': w_init(ks[10], (C, C), s),     'q_b': w_init(ks[11], (1, C), 0.02),
        'k_w': w_init(ks[12], (C, C), s),     'k_b': w_init(ks[13], (1, C), 0.02),
        'lepe_w': w_init(ks[14], (9, C), 0.1), 'lepe_b': w_init(ks[15], (1, C), 0.02),
        'out_w': w_init(ks[16], (C, C2), s),  'out_b': w_init(ks[17], (1, C2), 0.02),
    }
    x = jax.random.normal(ks[18], (B, C, H, W), jnp.float32)

    # constants / packed weights built once (hoisted out of the jitted call path)
    packed, meta = pack_mlla_constants(params, num_heads, H, W, PACK)
    fwd = jax.jit(lambda xx: mlla_block_forward(xx, packed, meta))

    y = jax.block_until_ready(fwd(x))

    y_ref = mlla_block_reference(x, params, num_heads)
    err = float(jnp.max(jnp.abs(y - y_ref)))
    assert y.shape == (B, C2, H, W), y.shape
    assert err < 5e-2, f"max abs diff vs reference: {err}"
    print("KERNEL_OK")
</pallas_src>

<mosaic_0001>
module attributes {stable_mosaic.version = 11 : i64} {
  func.func @kernel(%arg0: i32, %arg1: memref<1x64x128xf32, #tpu.memory_space<vmem>>, %arg2: memref<9x128xf32, #tpu.memory_space<vmem>>, %arg3: memref<1x128xf32, #tpu.memory_space<vmem>>, %arg4: memref<1x128xf32, #tpu.memory_space<vmem>>, %arg5: memref<1x128xf32, #tpu.memory_space<vmem>>, %arg6: memref<128x256xbf16, #tpu.memory_space<vmem>>, %arg7: memref<1x256xf32, #tpu.memory_space<vmem>>, %arg8: memref<9x128xf32, #tpu.memory_space<vmem>>, %arg9: memref<1x128xf32, #tpu.memory_space<vmem>>, %arg10: memref<128x256xbf16, #tpu.memory_space<vmem>>, %arg11: memref<1x256xf32, #tpu.memory_space<vmem>>, %arg12: memref<9x128xf32, #tpu.memory_space<vmem>>, %arg13: memref<1x128xf32, #tpu.memory_space<vmem>>, %arg14: memref<128x128xbf16, #tpu.memory_space<vmem>>, %arg15: memref<1x128xf32, #tpu.memory_space<vmem>>, %arg16: memref<64x128xf32, #tpu.memory_space<vmem>>, %arg17: memref<64x128xf32, #tpu.memory_space<vmem>>, %arg18: memref<128x128xbf16, #tpu.memory_space<vmem>>, %arg19: memref<128x128xf32, #tpu.memory_space<vmem>>, %arg20: memref<128x128xf32, #tpu.memory_space<vmem>>, %arg21: memref<1x64x128xf32, #tpu.memory_space<vmem>>) attributes {dimension_semantics = [#tpu.dimension_semantics<parallel>], iteration_bounds = array<i64: 2>, scalar_prefetch = 0 : i64, scratch_operands = 0 : i64, tpu.core_type = #tpu.core_type<tc>, window_params = [{transform_indices = @transform_0, window_bounds = array<i64: 1, 64, 128>}, {pipeline_mode = #tpu.pipeline_mode<synchronous>, transform_indices = @transform_1, window_bounds = array<i64: 9, 128>}, {pipeline_mode = #tpu.pipeline_mode<synchronous>, transform_indices = @transform_2, window_bounds = array<i64: 1, 128>}, {pipeline_mode = #tpu.pipeline_mode<synchronous>, transform_indices = @transform_3, window_bounds = array<i64: 1, 128>}, {pipeline_mode = #tpu.pipeline_mode<synchronous>, transform_indices = @transform_4, window_bounds = array<i64: 1, 128>}, {pipeline_mode = #tpu.pipeline_mode<synchronous>, transform_indices = @transform_5, window_bounds = array<i64: 128, 256>}, {pipeline_mode = #tpu.pipeline_mode<synchronous>, transform_indices = @transform_6, window_bounds = array<i64: 1, 256>}, {pipeline_mode = #tpu.pipeline_mode<synchronous>, transform_indices = @transform_7, window_bounds = array<i64: 9, 128>}, {pipeline_mode = #tpu.pipeline_mode<synchronous>, transform_indices = @transform_8, window_bounds = array<i64: 1, 128>}, {pipeline_mode = #tpu.pipeline_mode<synchronous>, transform_indices = @transform_9, window_bounds = array<i64: 128, 256>}, {pipeline_mode = #tpu.pipeline_mode<synchronous>, transform_indices = @transform_10, window_bounds = array<i64: 1, 256>}, {pipeline_mode = #tpu.pipeline_mode<synchronous>, transform_indices = @transform_11, window_bounds = array<i64: 9, 128>}, {pipeline_mode = #tpu.pipeline_mode<synchronous>, transform_indices = @transform_12, window_bounds = array<i64: 1, 128>}, {pipeline_mode = #tpu.pipeline_mode<synchronous>, transform_indices = @transform_13, window_bounds = array<i64: 128, 128>}, {pipeline_mode = #tpu.pipeline_mode<synchronous>, transform_indices = @transform_14, window_bounds = array<i64: 1, 128>}, {pipeline_mode = #tpu.pipeline_mode<synchronous>, transform_indices = @transform_15, window_bounds = array<i64: 64, 128>}, {pipeline_mode = #tpu.pipeline_mode<synchronous>, transform_indices = @transform_16, window_bounds = array<i64: 64, 128>}, {pipeline_mode = #tpu.pipeline_mode<synchronous>, transform_indices = @transform_17, window_bounds = array<i64: 128, 128>}, {pipeline_mode = #tpu.pipeline_mode<synchronous>, transform_indices = @transform_18, window_bounds = array<i64: 128, 128>}, {pipeline_mode = #tpu.pipeline_mode<synchronous>, transform_indices = @transform_19, window_bounds = array<i64: 128, 128>}, {transform_indices = @transform_20, window_bounds = array<i64: 1, 64, 128>}]} {
    %0 = tpu.iota {dimensions = array<i32: 0>} : vector<64x128xi32>
    %c8_i32 = arith.constant 8 : i32
    %c0_i32 = arith.constant 0 : i32
    %1 = arith.cmpi eq, %c8_i32, %c0_i32 : i32
    %c1_i32 = arith.constant 1 : i32
    %2 = arith.select %1, %c1_i32, %c8_i32 : i32
    %3 = vector.broadcast %2 : i32 to vector<64x128xi32>
    %4 = arith.remsi %0, %3 : vector<64x128xi32>
    %c0_i32_0 = arith.constant 0 : i32
    %5 = vector.broadcast %c0_i32_0 : i32 to vector<64x128xi32>
    %6 = arith.cmpi ne, %4, %5 : vector<64x128xi32>
    %c0_i32_1 = arith.constant 0 : i32
    %7 = vector.broadcast %c0_i32_1 : i32 to vector<64x128xi32>
    %8 = arith.cmpi slt, %4, %7 : vector<64x128xi32>
    %c0_i32_2 = arith.constant 0 : i32
    %9 = arith.cmpi slt, %2, %c0_i32_2 : i32
    %10 = vector.broadcast %9 : i1 to vector<64x128xi1>
    %11 = vector.broadcast %10 : vector<64x128xi1> to vector<64x128xi1>
    %12 = arith.xori %8, %11 : vector<64x128xi1>
    %13 = arith.andi %12, %6 : vector<64x128xi1>
    %14 = vector.broadcast %2 : i32 to vector<64x128xi32>
    %15 = arith.addi %4, %14 : vector<64x128xi32>
    %16 = arith.select %13, %15, %4 : vector<64x128xi1>, vector<64x128xi32>
    %c0_i32_3 = arith.constant 0 : i32
    %17 = vector.broadcast %c0_i32_3 : i32 to vector<64x128xi32>
    %18 = arith.cmpi ne, %16, %17 : vector<64x128xi32>
    %19 = arith.extui %18 : vector<64x128xi1> to vector<64x128xi32>
    %20 = arith.sitofp %19 : vector<64x128xi32> to vector<64x128xf32>
    %c7_i32 = arith.constant 7 : i32
    %21 = vector.broadcast %c7_i32 : i32 to vector<64x128xi32>
    %22 = arith.cmpi ne, %16, %21 : vector<64x128xi32>
    %23 = arith.extui %22 : vector<64x128xi1> to vector<64x128xi32>
    %24 = arith.sitofp %23 : vector<64x128xi32> to vector<64x128xf32>
    %c0 = arith.constant 0 : index
    %c0_4 = arith.constant 0 : index
    %c0_5 = arith.constant 0 : index
    %25 = vector.load %arg1[%c0, %c0_4, %c0_5] : memref<1x64x128xf32, #tpu.memory_space<vmem>>, vector<1x64x128xf32>
    %26 = vector.shape_cast %25 : vector<1x64x128xf32> to vector<64x128xf32>
    %c0_6 = arith.constant 0 : index
    %c0_7 = arith.constant 0 : index
    %27 = vector.load %arg2[%c0_6, %c0_7] : memref<9x128xf32, #tpu.memory_space<vmem>>, vector<9x128xf32>
    %c0_8 = arith.constant 0 : index
    %c0_9 = arith.constant 0 : index
    %28 = vector.load %arg3[%c0_8, %c0_9] : memref<1x128xf32, #tpu.memory_space<vmem>>, vector<1x128xf32>
    %29 = vector.shape_cast %28 : vector<1x128xf32> to vector<1x128xf32>
    %30 = vector.broadcast %29 : vector<1x128xf32> to vector<64x128xf32>
    %cst = arith.constant 0.000000e+00 : f32
    %31 = vector.broadcast %cst : f32 to vector<9x128xf32>
    %32 = vector.extract_strided_slice %26 {offsets = [0, 0], sizes = [55, 128], strides = [1, 1]} : vector<64x128xf32> to vector<55x128xf32>
    %33 = tpu.concatenate %31, %32 in 0 : vector<9x128xf32>, vector<55x128xf32> -> vector<64x128xf32>
    %34 = arith.mulf %33, %20 : vector<64x128xf32>
    %35 = vector.extract_strided_slice %27 {offsets = [0, 0], sizes = [1, 128], strides = [1, 1]} : vector<9x128xf32> to vector<1x128xf32>
    %36 = vector.broadcast %35 : vector<1x128xf32> to vector<64x128xf32>
    %37 = arith.mulf %36, %34 : vector<64x128xf32>
    %38 = arith.addf %30, %37 : vector<64x128xf32>
    %cst_10 = arith.constant 0.000000e+00 : f32
    %39 = vector.broadcast %cst_10 : f32 to vector<8x128xf32>
    %40 = vector.extract_strided_slice %26 {offsets = [0, 0], sizes = [56, 128], strides = [1, 1]} : vector<64x128xf32> to vector<56x128xf32>
    %41 = tpu.concatenate %39, %40 in 0 : vector<8x128xf32>, vector<56x128xf32> -> vector<64x128xf32>
    %42 = vector.extract_strided_slice %27 {offsets = [1, 0], sizes = [1, 128], strides = [1, 1]} : vector<9x128xf32> to vector<1x128xf32>
    %43 = vector.broadcast %42 : vector<1x128xf32> to vector<64x128xf32>
    %44 = arith.mulf %43, %41 : vector<64x128xf32>
    %45 = arith.addf %38, %44 : vector<64x128xf32>
    %cst_11 = arith.constant 0.000000e+00 : f32
    %46 = vector.broadcast %cst_11 : f32 to vector<7x128xf32>
    %47 = vector.extract_strided_slice %26 {offsets = [0, 0], sizes = [57, 128], strides = [1, 1]} : vector<64x128xf32> to vector<57x128xf32>
    %48 = tpu.concatenate %46, %47 in 0 : vector<7x128xf32>, vector<57x128xf32> -> vector<64x128xf32>
    %49 = arith.mulf %48, %24 : vector<64x128xf32>
    %50 = vector.extract_strided_slice %27 {offsets = [2, 0], sizes = [1, 128], strides = [1, 1]} : vector<9x128xf32> to vector<1x128xf32>
    %51 = vector.broadcast %50 : vector<1x128xf32> to vector<64x128xf32>
    %52 = arith.mulf %51, %49 : vector<64x128xf32>
    %53 = arith.addf %45, %52 : vector<64x128xf32>
    %cst_12 = arith.constant 0.000000e+00 : f32
    %54 = vector.broadcast %cst_12 : f32 to vector<1x128xf32>
    %55 = vector.extract_strided_slice %26 {offsets = [0, 0], sizes = [63, 128], strides = [1, 1]} : vector<64x128xf32> to vector<63x128xf32>
    %56 = tpu.concatenate %54, %55 in 0 : vector<1x128xf32>, vector<63x128xf32> -> vector<64x128xf32>
    %57 = arith.mulf %56, %20 : vector<64x128xf32>
    %58 = vector.extract_strided_slice %27 {offsets = [3, 0], sizes = [1, 128], strides = [1, 1]} : vector<9x128xf32> to vector<1x128xf32>
    %59 = vector.broadcast %58 : vector<1x128xf32> to vector<64x128xf32>
    %60 = arith.mulf %59, %57 : vector<64x128xf32>
    %61 = arith.addf %53, %60 : vector<64x128xf32>
    %62 = vector.extract_strided_slice %27 {offsets = [4, 0], sizes = [1, 128], strides = [1, 1]} : vector<9x128xf32> to vector<1x128xf32>
    %63 = vector.broadcast %62 : vector<1x128xf32> to vector<64x128xf32>
    %64 = arith.mulf %63, %26 : vector<64x128xf32>
    %65 = arith.addf %61, %64 : vector<64x128xf32>
    %66 = vector.extract_strided_slice %26 {offsets = [1, 0], sizes = [63, 128], strides = [1, 1]} : vector<64x128xf32> to vector<63x128xf32>
    %cst_13 = arith.constant 0.000000e+00 : f32
    %67 = vector.broadcast %cst_13 : f32 to vector<1x128xf32>
    %68 = tpu.concatenate %66, %67 in 0 : vector<63x128xf32>, vector<1x128xf32> -> vector<64x128xf32>
    %69 = arith.mulf %68, %24 : vector<64x128xf32>
    %70 = vector.extract_strided_slice %27 {offsets = [5, 0], sizes = [1, 128], strides = [1, 1]} : vector<9x128xf32> to vector<1x128xf32>
    %71 = vector.broadcast %70 : vector<1x128xf32> to vector<64x128xf32>
    %72 = arith.mulf %71, %69 : vector<64x128xf32>
    %73 = arith.addf %65, %72 : vector<64x128xf32>
    %74 = vector.extract_strided_slice %26 {offsets = [7, 0], sizes = [57, 128], strides = [1, 1]} : vector<64x128xf32> to vector<57x128xf32>
    %cst_14 = arith.constant 0.000000e+00 : f32
    %75 = vector.broadcast %cst_14 : f32 to vector<7x128xf32>
    %76 = tpu.concatenate %74, %75 in 0 : vector<57x128xf32>, vector<7x128xf32> -> vector<64x128xf32>
    %77 = arith.mulf %76, %20 : vector<64x128xf32>
    %78 = vector.extract_strided_slice %27 {offsets = [6, 0], sizes = [1, 128], strides = [1, 1]} : vector<9x128xf32> to vector<1x128xf32>
    %79 = vector.broadcast %78 : vector<1x128xf32> to vector<64x128xf32>
    %80 = arith.mulf %79, %77 : vector<64x128xf32>
    %81 = arith.addf %73, %80 : vector<64x128xf32>
    %82 = vector.extract_strided_slice %26 {offsets = [8, 0], sizes = [56, 128], strides = [1, 1]} : vector<64x128xf32> to vector<56x128xf32>
    %cst_15 = arith.constant 0.000000e+00 : f32
    %83 = vector.broadcast %cst_15 : f32 to vector<8x128xf32>
    %84 = tpu.concatenate %82, %83 in 0 : vector<56x128xf32>, vector<8x128xf32> -> vector<64x128xf32>
    %85 = vector.extract_strided_slice %27 {offsets = [7, 0], sizes = [1, 128], strides = [1, 1]} : vector<9x128xf32> to vector<1x128xf32>
    %86 = vector.broadcast %85 : vector<1x128xf32> to vector<64x128xf32>
    %87 = arith.mulf %86, %84 : vector<64x128xf32>
    %88 = arith.addf %81, %87 : vector<64x128xf32>
    %89 = vector.extract_strided_slice %26 {offsets = [9, 0], sizes = [55, 128], strides = [1, 1]} : vector<64x128xf32> to vector<55x128xf32>
    %cst_16 = arith.constant 0.000000e+00 : f32
    %90 = vector.broadcast %cst_16 : f32 to vector<9x128xf32>
    %91 = tpu.concatenate %89, %90 in 0 : vector<55x128xf32>, vector<9x128xf32> -> vector<64x128xf32>
    %92 = arith.mulf %91, %24 : vector<64x128xf32>
    %93 = vector.extract_strided_slice %27 {offsets = [8, 0], sizes = [1, 128], strides = [1, 1]} : vector<9x128xf32> to vector<1x128xf32>
    %94 = vector.broadcast %93 : vector<1x128xf32> to vector<64x128xf32>
    %95 = arith.mulf %94, %92 : vector<64x128xf32>
    %96 = arith.addf %88, %95 : vector<64x128xf32>
    %97 = arith.addf %26, %96 : vector<64x128xf32>
    %c0_17 = arith.constant 0 : index
    %c0_18 = arith.constant 0 : index
    %98 = vector.load %arg20[%c0_17, %c0_18] : memref<128x128xf32, #tpu.memory_space<vmem>>, vector<128x128xf32>
    %cst_19 = arith.constant dense<0.000000e+00> : vector<64x128xf32>
    %99 = tpu.matmul %97, %98, %cst_19 {dimension_numbers = #tpu.dot_dimension_numbers<[1], [0], [0], [1], [0, 0, 1, 1], [], []>} : vector<64x128xf32>, vector<128x128xf32>, vector<64x128xf32> -> vector<64x128xf32>
    %100 = arith.subf %97, %99 : vector<64x128xf32>
    %101 = arith.mulf %100, %100 : vector<64x128xf32>
    %cst_20 = arith.constant dense<0.000000e+00> : vector<64x128xf32>
    %102 = tpu.matmul %101, %98, %cst_20 {dimension_numbers = #tpu.dot_dimension_numbers<[1], [0], [0], [1], [0, 0, 1, 1], [], []>} : vector<64x128xf32>, vector<128x128xf32>, vector<64x128xf32> -> vector<64x128xf32>
    %cst_21 = arith.constant 9.99999974E-6 : f32
    %103 = vector.broadcast %cst_21 : f32 to vector<64x128xf32>
    %104 = arith.addf %102, %103 : vector<64x128xf32>
    %105 = math.rsqrt %104 : vector<64x128xf32>
    %106 = arith.mulf %100, %105 : vector<64x128xf32>
    %c0_22 = arith.constant 0 : index
    %c0_23 = arith.constant 0 : index
    %107 = vector.load %arg4[%c0_22, %c0_23] : memref<1x128xf32, #tpu.memory_space<vmem>>, vector<1x128xf32>
    %108 = vector.broadcast %107 : vector<1x128xf32> to vector<64x128xf32>
    %109 = arith.mulf %106, %108 : vector<64x128xf32>
    %c0_24 = arith.constant 0 : index
    %c0_25 = arith.constant 0 : index
    %110 = vector.load %arg5[%c0_24, %c0_25] : memref<1x128xf32, #tpu.memory_space<vmem>>, vector<1x128xf32>
    %111 = vector.broadcast %110 : vector<1x128xf32> to vector<64x128xf32>
    %112 = arith.addf %109, %111 : vector<64x128xf32>
    %c0_26 = arith.constant 0 : index
    %c0_27 = arith.constant 0 : index
    %113 = vector.load %arg6[%c0_26, %c0_27] : memref<128x256xbf16, #tpu.memory_space<vmem>>, vector<128x256xbf16>
    %114 = arith.truncf %112 : vector<64x128xf32> to vector<64x128xbf16>
    %cst_28 = arith.constant dense<0.000000e+00> : vector<64x256xf32>
    %115 = tpu.matmul %114, %113, %cst_28 {dimension_numbers = #tpu.dot_dimension_numbers<[1], [0], [0], [1], [0, 0, 1, 1], [], []>} : vector<64x128xbf16>, vector<128x256xbf16>, vector<64x256xf32> -> vector<64x256xf32>
    %c0_29 = arith.constant 0 : index
    %c0_30 = arith.constant 0 : index
    %116 = vector.load %arg7[%c0_29, %c0_30] : memref<1x256xf32, #tpu.memory_space<vmem>>, vector<1x256xf32>
    %117 = vector.broadcast %116 : vector<1x256xf32> to vector<64x256xf32>
    %118 = arith.addf %115, %117 : vector<64x256xf32>
    %119 = vector.extract_strided_slice %118 {offsets = [0, 0], sizes = [64, 128], strides = [1, 1]} : vector<64x256xf32> to vector<64x128xf32>
    %120 = arith.negf %119 : vector<64x128xf32>
    %121 = math.exp %120 : vector<64x128xf32>
    %cst_31 = arith.constant 1.000000e+00 : f32
    %122 = vector.broadcast %cst_31 : f32 to vector<64x128xf32>
    %123 = arith.addf %122, %121 : vector<64x128xf32>
    %124 = arith.divf %122, %123 : vector<64x128xf32>
    %125 = arith.mulf %119, %124 : vector<64x128xf32>
    %126 = vector.extract_strided_slice %118 {offsets = [0, 128], sizes = [64, 128], strides = [1, 1]} : vector<64x256xf32> to vector<64x128xf32>
    %c0_32 = arith.constant 0 : index
    %c0_33 = arith.constant 0 : index
    %127 = vector.load %arg8[%c0_32, %c0_33] : memref<9x128xf32, #tpu.memory_space<vmem>>, vector<9x128xf32>
    %c0_34 = arith.constant 0 : index
    %c0_35 = arith.constant 0 : index
    %128 = vector.load %arg9[%c0_34, %c0_35] : memref<1x128xf32, #tpu.memory_space<vmem>>, vector<1x128xf32>
    %129 = vector.shape_cast %128 : vector<1x128xf32> to vector<1x128xf32>
    %130 = vector.broadcast %129 : vector<1x128xf32> to vector<64x128xf32>
    %cst_36 = arith.constant 0.000000e+00 : f32
    %131 = vector.broadcast %cst_36 : f32 to vector<9x128xf32>
    %132 = vector.extract_strided_slice %126 {offsets = [0, 0], sizes = [55, 128], strides = [1, 1]} : vector<64x128xf32> to vector<55x128xf32>
    %133 = tpu.concatenate %131, %132 in 0 : vector<9x128xf32>, vector<55x128xf32> -> vector<64x128xf32>
    %134 = arith.mulf %133, %20 : vector<64x128xf32>
    %135 = vector.extract_strided_slice %127 {offsets = [0, 0], sizes = [1, 128], strides = [1, 1]} : vector<9x128xf32> to vector<1x128xf32>
    %136 = vector.broadcast %135 : vector<1x128xf32> to vector<64x128xf32>
    %137 = arith.mulf %136, %134 : vector<64x128xf32>
    %138 = arith.addf %130, %137 : vector<64x128xf32>
    %cst_37 = arith.constant 0.000000e+00 : f32
    %139 = vector.broadcast %cst_37 : f32 to vector<8x128xf32>
    %140 = vector.extract_strided_slice %126 {offsets = [0, 0], sizes = [56, 128], strides = [1, 1]} : vector<64x128xf32> to vector<56x128xf32>
    %141 = tpu.concatenate %139, %140 in 0 : vector<8x128xf32>, vector<56x128xf32> -> vector<64x128xf32>
    %142 = vector.extract_strided_slice %127 {offsets = [1, 0], sizes = [1, 128], strides = [1, 1]} : vector<9x128xf32> to vector<1x128xf32>
    %143 = vector.broadcast %142 : vector<1x128xf32> to vector<64x128xf32>
    %144 = arith.mulf %143, %141 : vector<64x128xf32>
    %145 = arith.addf %138, %144 : vector<64x128xf32>
    %cst_38 = arith.constant 0.000000e+00 : f32
    %146 = vector.broadcast %cst_38 : f32 to vector<7x128xf32>
    %147 = vector.extract_strided_slice %126 {offsets = [0, 0], sizes = [57, 128], strides = [1, 1]} : vector<64x128xf32> to vector<57x128xf32>
    %148 = tpu.concatenate %146, %147 in 0 : vector<7x128xf32>, vector<57x128xf32> -> vector<64x128xf32>
    %149 = arith.mulf %148, %24 : vector<64x128xf32>
    %150 = vector.extract_strided_slice %127 {offsets = [2, 0], sizes = [1, 128], strides = [1, 1]} : vector<9x128xf32> to vector<1x128xf32>
    %151 = vector.broadcast %150 : vector<1x128xf32> to vector<64x128xf32>
    %152 = arith.mulf %151, %149 : vector<64x128xf32>
    %153 = arith.addf %145, %152 : vector<64x128xf32>
    %cst_39 = arith.constant 0.000000e+00 : f32
    %154 = vector.broadcast %cst_39 : f32 to vector<1x128xf32>
    %155 = vector.extract_strided_slice %126 {offsets = [0, 0], sizes = [63, 128], strides = [1, 1]} : vector<64x128xf32> to vector<63x128xf32>
    %156 = tpu.concatenate %154, %155 in 0 : vector<1x128xf32>, vector<63x128xf32> -> vector<64x128xf32>
    %157 = arith.mulf %156, %20 : vector<64x128xf32>
    %158 = vector.extract_strided_slice %127 {offsets = [3, 0], sizes = [1, 128], strides = [1, 1]} : vector<9x128xf32> to vector<1x128xf32>
    %159 = vector.broadcast %158 : vector<1x128xf32> to vector<64x128xf32>
    %160 = arith.mulf %159, %157 : vector<64x128xf32>
    %161 = arith.addf %153, %160 : vector<64x128xf32>
    %162 = vector.extract_strided_slice %127 {offsets = [4, 0], sizes = [1, 128], strides = [1, 1]} : vector<9x128xf32> to vector<1x128xf32>
    %163 = vector.broadcast %162 : vector<1x128xf32> to vector<64x128xf32>
    %164 = arith.mulf %163, %126 : vector<64x128xf32>
    %165 = arith.addf %161, %164 : vector<64x128xf32>
    %166 = vector.extract_strided_slice %126 {offsets = [1, 0], sizes = [63, 128], strides = [1, 1]} : vector<64x128xf32> to vector<63x128xf32>
    %cst_40 = arith.constant 0.000000e+00 : f32
    %167 = vector.broadcast %cst_40 : f32 to vector<1x128xf32>
    %168 = tpu.concatenate %166, %167 in 0 : vector<63x128xf32>, vector<1x128xf32> -> vector<64x128xf32>
    %169 = arith.mulf %168, %24 : vector<64x128xf32>
    %170 = vector.extract_strided_slice %127 {offsets = [5, 0], sizes = [1, 128], strides = [1, 1]} : vector<9x128xf32> to vector<1x128xf32>
    %171 = vector.broadcast %170 : vector<1x128xf32> to vector<64x128xf32>
    %172 = arith.mulf %171, %169 : vector<64x128xf32>
    %173 = arith.addf %165, %172 : vector<64x128xf32>
    %174 = vector.extract_strided_slice %126 {offsets = [7, 0], sizes = [57, 128], strides = [1, 1]} : vector<64x128xf32> to vector<57x128xf32>
    %cst_41 = arith.constant 0.000000e+00 : f32
    %175 = vector.broadcast %cst_41 : f32 to vector<7x128xf32>
    %176 = tpu.concatenate %174, %175 in 0 : vector<57x128xf32>, vector<7x128xf32> -> vector<64x128xf32>
    %177 = arith.mulf %176, %20 : vector<64x128xf32>
    %178 = vector.extract_strided_slice %127 {offsets = [6, 0], sizes = [1, 128], strides = [1, 1]} : vector<9x128xf32> to vector<1x128xf32>
    %179 = vector.broadcast %178 : vector<1x128xf32> to vector<64x128xf32>
    %180 = arith.mulf %179, %177 : vector<64x128xf32>
    %181 = arith.addf %173, %180 : vector<64x128xf32>
    %182 = vector.extract_strided_slice %126 {offsets = [8, 0], sizes = [56, 128], strides = [1, 1]} : vector<64x128xf32> to vector<56x128xf32>
    %cst_42 = arith.constant 0.000000e+00 : f32
    %183 = vector.broadcast %cst_42 : f32 to vector<8x128xf32>
    %184 = tpu.concatenate %182, %183 in 0 : vector<56x128xf32>, vector<8x128xf32> -> vector<64x128xf32>
    %185 = vector.extract_strided_slice %127 {offsets = [7, 0], sizes = [1, 128], strides = [1, 1]} : vector<9x128xf32> to vector<1x128xf32>
    %186 = vector.broadcast %185 : vector<1x128xf32> to vector<64x128xf32>
    %187 = arith.mulf %186, %184 : vector<64x128xf32>
    %188 = arith.addf %181, %187 : vector<64x128xf32>
    %189 = vector.extract_strided_slice %126 {offsets = [9, 0], sizes = [55, 128], strides = [1, 1]} : vector<64x128xf32> to vector<55x128xf32>
    %cst_43 = arith.constant 0.000000e+00 : f32
    %190 = vector.broadcast %cst_43 : f32 to vector<9x128xf32>
    %191 = tpu.concatenate %189, %190 in 0 : vector<55x128xf32>, vector<9x128xf32> -> vector<64x128xf32>
    %192 = arith.mulf %191, %24 : vector<64x128xf32>
    %193 = vector.extract_strided_slice %127 {offsets = [8, 0], sizes = [1, 128], strides = [1, 1]} : vector<9x128xf32> to vector<1x128xf32>
    %194 = vector.broadcast %193 : vector<1x128xf32> to vector<64x128xf32>
    %195 = arith.mulf %194, %192 : vector<64x128xf32>
    %196 = arith.addf %188, %195 : vector<64x128xf32>
    %197 = arith.negf %196 : vector<64x128xf32>
    %198 = math.exp %197 : vector<64x128xf32>
    %cst_44 = arith.constant 1.000000e+00 : f32
    %199 = vector.broadcast %cst_44 : f32 to vector<64x128xf32>
    %200 = arith.addf %199, %198 : vector<64x128xf32>
    %201 = arith.divf %199, %200 : vector<64x128xf32>
    %202 = arith.mulf %196, %201 : vector<64x128xf32>
    %c0_45 = arith.constant 0 : index
    %c0_46 = arith.constant 0 : index
    %203 = vector.load %arg10[%c0_45, %c0_46] : memref<128x256xbf16, #tpu.memory_space<vmem>>, vector<128x256xbf16>
    %204 = arith.truncf %202 : vector<64x128xf32> to vector<64x128xbf16>
    %cst_47 = arith.constant dense<0.000000e+00> : vector<64x256xf32>
    %205 = tpu.matmul %204, %203, %cst_47 {dimension_numbers = #tpu.dot_dimension_numbers<[1], [0], [0], [1], [0, 0, 1, 1], [], []>} : vector<64x128xbf16>, vector<128x256xbf16>, vector<64x256xf32> -> vector<64x256xf32>
    %c0_48 = arith.constant 0 : index
    %c0_49 = arith.constant 0 : index
    %206 = vector.load %arg11[%c0_48, %c0_49] : memref<1x256xf32, #tpu.memory_space<vmem>>, vector<1x256xf32>
    %207 = vector.broadcast %206 : vector<1x256xf32> to vector<64x256xf32>
    %208 = arith.addf %205, %207 : vector<64x256xf32>
    %209 = vector.extract_strided_slice %208 {offsets = [0, 0], sizes = [64, 128], strides = [1, 1]} : vector<64x256xf32> to vector<64x128xf32>
    %cst_50 = arith.constant 0.000000e+00 : f32
    %210 = vector.broadcast %cst_50 : f32 to vector<64x128xf32>
    %211 = arith.cmpf ogt, %209, %210 : vector<64x128xf32>
    %cst_51 = arith.constant 1.000000e+00 : f32
    %212 = vector.broadcast %cst_51 : f32 to vector<64x128xf32>
    %213 = arith.addf %209, %212 : vector<64x128xf32>
    %cst_52 = arith.constant 0.000000e+00 : f32
    %214 = vector.broadcast %cst_52 : f32 to vector<64x128xf32>
    %215 = arith.minimumf %209, %214 : vector<64x128xf32>
    %216 = math.exp %215 : vector<64x128xf32>
    %217 = arith.select %211, %213, %216 : vector<64x128xi1>, vector<64x128xf32>
    %218 = vector.extract_strided_slice %208 {offsets = [0, 128], sizes = [64, 128], strides = [1, 1]} : vector<64x256xf32> to vector<64x128xf32>
    %cst_53 = arith.constant 0.000000e+00 : f32
    %219 = vector.broadcast %cst_53 : f32 to vector<64x128xf32>
    %220 = arith.cmpf ogt, %218, %219 : vector<64x128xf32>
    %cst_54 = arith.constant 1.000000e+00 : f32
    %221 = vector.broadcast %cst_54 : f32 to vector<64x128xf32>
    %222 = arith.addf %218, %221 : vector<64x128xf32>
    %cst_55 = arith.constant 0.000000e+00 : f32
    %223 = vector.broadcast %cst_55 : f32 to vector<64x128xf32>
    %224 = arith.minimumf %218, %223 : vector<64x128xf32>
    %225 = math.exp %224 : vector<64x128xf32>
    %226 = arith.select %220, %222, %225 : vector<64x128xi1>, vector<64x128xf32>
    %c0_56 = arith.constant 0 : index
    %c0_57 = arith.constant 0 : index
    %227 = vector.load %arg16[%c0_56, %c0_57] : memref<64x128xf32, #tpu.memory_space<vmem>>, vector<64x128xf32>
    %c0_58 = arith.constant 0 : index
    %c0_59 = arith.constant 0 : index
    %228 = vector.load %arg17[%c0_58, %c0_59] : memref<64x128xf32, #tpu.memory_space<vmem>>, vector<64x128xf32>
    %229 = tpu.concatenate %217, %226 in 0 : vector<64x128xf32>, vector<64x128xf32> -> vector<128x128xf32>
    %c0_60 = arith.constant 0 : index
    %c0_61 = arith.constant 0 : index
    %230 = vector.load %arg18[%c0_60, %c0_61] : memref<128x128xbf16, #tpu.memory_space<vmem>>, vector<128x128xbf16>
    %231 = arith.truncf %229 : vector<128x128xf32> to vector<128x128xbf16>
    %cst_62 = arith.constant dense<0.000000e+00> : vector<128x128xf32>
    %232 = tpu.matmul %231, %230, %cst_62 {dimension_numbers = #tpu.dot_dimension_numbers<[1], [0], [0], [1], [0, 0, 1, 1], [], []>} : vector<128x128xbf16>, vector<128x128xbf16>, vector<128x128xf32> -> vector<128x128xf32>
    %233 = arith.mulf %227, %217 : vector<64x128xf32>
    %234 = vector.extract_strided_slice %232 {offsets = [0, 0], sizes = [64, 128], strides = [1, 1]} : vector<128x128xf32> to vector<64x128xf32>
    %235 = arith.mulf %228, %234 : vector<64x128xf32>
    %236 = arith.addf %233, %235 : vector<64x128xf32>
    %237 = arith.mulf %227, %226 : vector<64x128xf32>
    %238 = vector.extract_strided_slice %232 {offsets = [64, 0], sizes = [64, 128], strides = [1, 1]} : vector<128x128xf32> to vector<64x128xf32>
    %239 = arith.mulf %228, %238 : vector<64x128xf32>
    %240 = arith.addf %237, %239 : vector<64x128xf32>
    %c0_63 = arith.constant 0 : index
    %c0_64 = arith.constant 0 : index
    %241 = vector.load %arg19[%c0_63, %c0_64] : memref<128x128xf32, #tpu.memory_space<vmem>>, vector<128x128xf32>
    %cst_65 = arith.constant dense<0.000000e+00> : vector<128xf32>
    %242 = vector.multi_reduction <add>, %226, %cst_65 [0] : vector<64x128xf32> to vector<128xf32>
    %243 = vector.shape_cast %242 : vector<128xf32> to vector<1x128xf32>
    %cst_66 = arith.constant 6.400000e+01 : f32
    %244 = vector.broadcast %cst_66 : f32 to vector<1x128xf32>
    %245 = arith.divf %243, %244 : vector<1x128xf32>
    %246 = vector.broadcast %245 : vector<1x128xf32> to vector<64x128xf32>
    %247 = arith.mulf %217, %246 : vector<64x128xf32>
    %248 = arith.truncf %247 : vector<64x128xf32> to vector<64x128xbf16>
    %249 = arith.truncf %241 : vector<128x128xf32> to vector<128x128xbf16>
    %cst_67 = arith.constant dense<0.000000e+00> : vector<64x128xf32>
    %250 = tpu.matmul %248, %249, %cst_67 {dimension_numbers = #tpu.dot_dimension_numbers<[1], [0], [0], [1], [0, 0, 1, 1], [], []>} : vector<64x128xbf16>, vector<128x128xbf16>, vector<64x128xf32> -> vector<64x128xf32>
    %cst_68 = arith.constant 9.99999997E-7 : f32
    %251 = vector.broadcast %cst_68 : f32 to vector<64x128xf32>
    %252 = arith.addf %250, %251 : vector<64x128xf32>
    %cst_69 = arith.constant 1.000000e+00 : f32
    %253 = vector.broadcast %cst_69 : f32 to vector<64x128xf32>
    %254 = arith.divf %253, %252 : vector<64x128xf32>
    %cst_70 = arith.constant 1.250000e-01 : f32
    %255 = vector.broadcast %cst_70 : f32 to vector<64x128xf32>
    %256 = arith.mulf %240, %255 : vector<64x128xf32>
    %257 = arith.truncf %256 : vector<64x128xf32> to vector<64x128xbf16>
    %cst_71 = arith.constant 1.250000e-01 : f32
    %258 = vector.broadcast %cst_71 : f32 to vector<64x128xf32>
    %259 = arith.mulf %202, %258 : vector<64x128xf32>
    %260 = arith.truncf %259 : vector<64x128xf32> to vector<64x128xbf16>
    %cst_72 = arith.constant dense<0.000000e+00> : vector<128x128xf32>
    %261 = tpu.matmul %257, %260, %cst_72 {dimension_numbers = #tpu.dot_dimension_numbers<[0], [0], [1], [1], [0, 1, 1, 1], [], []>} : vector<64x128xbf16>, vector<64x128xbf16>, vector<128x128xf32> -> vector<128x128xf32>
    %262 = arith.mulf %261, %241 : vector<128x128xf32>
    %263 = arith.truncf %236 : vector<64x128xf32> to vector<64x128xbf16>
    %264 = arith.truncf %262 : vector<128x128xf32> to vector<128x128xbf16>
    %cst_73 = arith.constant dense<0.000000e+00> : vector<64x128xf32>
    %265 = tpu.matmul %263, %264, %cst_73 {dimension_numbers = #tpu.dot_dimension_numbers<[1], [0], [0], [1], [0, 0, 1, 1], [], []>} : vector<64x128xbf16>, vector<128x128xbf16>, vector<64x128xf32> -> vector<64x128xf32>
    %266 = arith.mulf %265, %254 : vector<64x128xf32>
    %c0_74 = arith.constant 0 : index
    %c0_75 = arith.constant 0 : index
    %267 = vector.load %arg12[%c0_74, %c0_75] : memref<9x128xf32, #tpu.memory_space<vmem>>, vector<9x128xf32>
    %c0_76 = arith.constant 0 : index
    %c0_77 = arith.constant 0 : index
    %268 = vector.load %arg13[%c0_76, %c0_77] : memref<1x128xf32, #tpu.memory_space<vmem>>, vector<1x128xf32>
    %269 = vector.shape_cast %268 : vector<1x128xf32> to vector<1x128xf32>
    %270 = vector.broadcast %269 : vector<1x128xf32> to vector<64x128xf32>
    %cst_78 = arith.constant 0.000000e+00 : f32
    %271 = vector.broadcast %cst_78 : f32 to vector<9x128xf32>
    %272 = vector.extract_strided_slice %202 {offsets = [0, 0], sizes = [55, 128], strides = [1, 1]} : vector<64x128xf32> to vector<55x128xf32>
    %273 = tpu.concatenate %271, %272 in 0 : vector<9x128xf32>, vector<55x128xf32> -> vector<64x128xf32>
    %274 = arith.mulf %273, %20 : vector<64x128xf32>
    %275 = vector.extract_strided_slice %267 {offsets = [0, 0], sizes = [1, 128], strides = [1, 1]} : vector<9x128xf32> to vector<1x128xf32>
    %276 = vector.broadcast %275 : vector<1x128xf32> to vector<64x128xf32>
    %277 = arith.mulf %276, %274 : vector<64x128xf32>
    %278 = arith.addf %270, %277 : vector<64x128xf32>
    %cst_79 = arith.constant 0.000000e+00 : f32
    %279 = vector.broadcast %cst_79 : f32 to vector<8x128xf32>
    %280 = vector.extract_strided_slice %202 {offsets = [0, 0], sizes = [56, 128], strides = [1, 1]} : vector<64x128xf32> to vector<56x128xf32>
    %281 = tpu.concatenate %279, %280 in 0 : vector<8x128xf32>, vector<56x128xf32> -> vector<64x128xf32>
    %282 = vector.extract_strided_slice %267 {offsets = [1, 0], sizes = [1, 128], strides = [1, 1]} : vector<9x128xf32> to vector<1x128xf32>
    %283 = vector.broadcast %282 : vector<1x128xf32> to vector<64x128xf32>
    %284 = arith.mulf %283, %281 : vector<64x128xf32>
    %285 = arith.addf %278, %284 : vector<64x128xf32>
    %cst_80 = arith.constant 0.000000e+00 : f32
    %286 = vector.broadcast %cst_80 : f32 to vector<7x128xf32>
    %287 = vector.extract_strided_slice %202 {offsets = [0, 0], sizes = [57, 128], strides = [1, 1]} : vector<64x128xf32> to vector<57x128xf32>
    %288 = tpu.concatenate %286, %287 in 0 : vector<7x128xf32>, vector<57x128xf32> -> vector<64x128xf32>
    %289 = arith.mulf %288, %24 : vector<64x128xf32>
    %290 = vector.extract_strided_slice %267 {offsets = [2, 0], sizes = [1, 128], strides = [1, 1]} : vector<9x128xf32> to vector<1x128xf32>
    %291 = vector.broadcast %290 : vector<1x128xf32> to vector<64x128xf32>
    %292 = arith.mulf %291, %289 : vector<64x128xf32>
    %293 = arith.addf %285, %292 : vector<64x128xf32>
    %cst_81 = arith.constant 0.000000e+00 : f32
    %294 = vector.broadcast %cst_81 : f32 to vector<1x128xf32>
    %295 = vector.extract_strided_slice %202 {offsets = [0, 0], sizes = [63, 128], strides = [1, 1]} : vector<64x128xf32> to vector<63x128xf32>
    %296 = tpu.concatenate %294, %295 in 0 : vector<1x128xf32>, vector<63x128xf32> -> vector<64x128xf32>
    %297 = arith.mulf %296, %20 : vector<64x128xf32>
    %298 = vector.extract_strided_slice %267 {offsets = [3, 0], sizes = [1, 128], strides = [1, 1]} : vector<9x128xf32> to vector<1x128xf32>
    %299 = vector.broadcast %298 : vector<1x128xf32> to vector<64x128xf32>
    %300 = arith.mulf %299, %297 : vector<64x128xf32>
    %301 = arith.addf %293, %300 : vector<64x128xf32>
    %302 = vector.extract_strided_slice %267 {offsets = [4, 0], sizes = [1, 128], strides = [1, 1]} : vector<9x128xf32> to vector<1x128xf32>
    %303 = vector.broadcast %302 : vector<1x128xf32> to vector<64x128xf32>
    %304 = arith.mulf %303, %202 : vector<64x128xf32>
    %305 = arith.addf %301, %304 : vector<64x128xf32>
    %306 = vector.extract_strided_slice %202 {offsets = [1, 0], sizes = [63, 128], strides = [1, 1]} : vector<64x128xf32> to vector<63x128xf32>
    %cst_82 = arith.constant 0.000000e+00 : f32
    %307 = vector.broadcast %cst_82 : f32 to vector<1x128xf32>
    %308 = tpu.concatenate %306, %307 in 0 : vector<63x128xf32>, vector<1x128xf32> -> vector<64x128xf32>
    %309 = arith.mulf %308, %24 : vector<64x128xf32>
    %310 = vector.extract_strided_slice %267 {offsets = [5, 0], sizes = [1, 128], strides = [1, 1]} : vector<9x128xf32> to vector<1x128xf32>
    %311 = vector.broadcast %310 : vector<1x128xf32> to vector<64x128xf32>
    %312 = arith.mulf %311, %309 : vector<64x128xf32>
    %313 = arith.addf %305, %312 : vector<64x128xf32>
    %314 = vector.extract_strided_slice %202 {offsets = [7, 0], sizes = [57, 128], strides = [1, 1]} : vector<64x128xf32> to vector<57x128xf32>
    %cst_83 = arith.constant 0.000000e+00 : f32
    %315 = vector.broadcast %cst_83 : f32 to vector<7x128xf32>
    %316 = tpu.concatenate %314, %315 in 0 : vector<57x128xf32>, vector<7x128xf32> -> vector<64x128xf32>
    %317 = arith.mulf %316, %20 : vector<64x128xf32>
    %318 = vector.extract_strided_slice %267 {offsets = [6, 0], sizes = [1, 128], strides = [1, 1]} : vector<9x128xf32> to vector<1x128xf32>
    %319 = vector.broadcast %318 : vector<1x128xf32> to vector<64x128xf32>
    %320 = arith.mulf %319, %317 : vector<64x128xf32>
    %321 = arith.addf %313, %320 : vector<64x128xf32>
    %322 = vector.extract_strided_slice %202 {offsets = [8, 0], sizes = [56, 128], strides = [1, 1]} : vector<64x128xf32> to vector<56x128xf32>
    %cst_84 = arith.constant 0.000000e+00 : f32
    %323 = vector.broadcast %cst_84 : f32 to vector<8x128xf32>
    %324 = tpu.concatenate %322, %323 in 0 : vector<56x128xf32>, vector<8x128xf32> -> vector<64x128xf32>
    %325 = vector.extract_strided_slice %267 {offsets = [7, 0], sizes = [1, 128], strides = [1, 1]} : vector<9x128xf32> to vector<1x128xf32>
    %326 = vector.broadcast %325 : vector<1x128xf32> to vector<64x128xf32>
    %327 = arith.mulf %326, %324 : vector<64x128xf32>
    %328 = arith.addf %321, %327 : vector<64x128xf32>
    %329 = vector.extract_strided_slice %202 {offsets = [9, 0], sizes = [55, 128], strides = [1, 1]} : vector<64x128xf32> to vector<55x128xf32>
    %cst_85 = arith.constant 0.000000e+00 : f32
    %330 = vector.broadcast %cst_85 : f32 to vector<9x128xf32>
    %331 = tpu.concatenate %329, %330 in 0 : vector<55x128xf32>, vector<9x128xf32> -> vector<64x128xf32>
    %332 = arith.mulf %331, %24 : vector<64x128xf32>
    %333 = vector.extract_strided_slice %267 {offsets = [8, 0], sizes = [1, 128], strides = [1, 1]} : vector<9x128xf32> to vector<1x128xf32>
    %334 = vector.broadcast %333 : vector<1x128xf32> to vector<64x128xf32>
    %335 = arith.mulf %334, %332 : vector<64x128xf32>
    %336 = arith.addf %328, %335 : vector<64x128xf32>
    %337 = arith.addf %266, %336 : vector<64x128xf32>
    %338 = arith.mulf %337, %125 : vector<64x128xf32>
    %c0_86 = arith.constant 0 : index
    %c0_87 = arith.constant 0 : index
    %339 = vector.load %arg14[%c0_86, %c0_87] : memref<128x128xbf16, #tpu.memory_space<vmem>>, vector<128x128xbf16>
    %340 = arith.truncf %338 : vector<64x128xf32> to vector<64x128xbf16>
    %cst_88 = arith.constant dense<0.000000e+00> : vector<64x128xf32>
    %341 = tpu.matmul %340, %339, %cst_88 {dimension_numbers = #tpu.dot_dimension_numbers<[1], [0], [0], [1], [0, 0, 1, 1], [], []>} : vector<64x128xbf16>, vector<128x128xbf16>, vector<64x128xf32> -> vector<64x128xf32>
    %c0_89 = arith.constant 0 : index
    %c0_90 = arith.constant 0 : index
    %342 = vector.load %arg15[%c0_89, %c0_90] : memref<1x128xf32, #tpu.memory_space<vmem>>, vector<1x128xf32>
    %343 = vector.broadcast %342 : vector<1x128xf32> to vector<64x128xf32>
    %344 = arith.addf %341, %343 : vector<64x128xf32>
    %c0_91 = arith.constant 0 : index
    %c0_92 = arith.constant 0 : index
    %c0_93 = arith.constant 0 : index
    %345 = vector.load %arg21[%c0_91, %c0_92, %c0_93] : memref<1x64x128xf32, #tpu.memory_space<vmem>>, vector<1x64x128xf32>
    %346 = vector.shape_cast %345 : vector<1x64x128xf32> to vector<64x128xf32>
    %347 = vector.shape_cast %344 : vector<64x128xf32> to vector<1x64x128xf32>
    tpu.vector_store %arg21[%c0_91, %c0_92, %c0_93], %347 {strides = array<i32>} : memref<1x64x128xf32, #tpu.memory_space<vmem>>, vector<1x64x128xf32>,
    return
  }
  func.func @transform_0(%arg0: i32) -> (i32, i32, i32) {
    %c0_i32 = arith.constant 0 : i32
    %c0_i32_0 = arith.constant 0 : i32
    %c0_i32_1 = arith.constant 0 : i32
    return %arg0, %c0_i32, %c0_i32_0 : i32, i32, i32
  }
  func.func @transform_1(%arg0: i32) -> (i32, i32) {
    %c0_i32 = arith.constant 0 : i32
    %c0_i32_0 = arith.constant 0 : i32
    %c0_i32_1 = arith.constant 0 : i32
    return %c0_i32, %c0_i32_0 : i32, i32
  }
  func.func @transform_2(%arg0: i32) -> (i32, i32) {
    %c0_i32 = arith.constant 0 : i32
    %c0_i32_0 = arith.constant 0 : i32
    %c0_i32_1 = arith.constant 0 : i32
    return %c0_i32, %c0_i32_0 : i32, i32
  }
  func.func @transform_3(%arg0: i32) -> (i32, i32) {
    %c0_i32 = arith.constant 0 : i32
    %c0_i32_0 = arith.constant 0 : i32
    %c0_i32_1 = arith.constant 0 : i32
    return %c0_i32, %c0_i32_0 : i32, i32
  }
  func.func @transform_4(%arg0: i32) -> (i32, i32) {
    %c0_i32 = arith.constant 0 : i32
    %c0_i32_0 = arith.constant 0 : i32
    %c0_i32_1 = arith.constant 0 : i32
    return %c0_i32, %c0_i32_0 : i32, i32
  }
  func.func @transform_5(%arg0: i32) -> (i32, i32) {
    %c0_i32 = arith.constant 0 : i32
    %c0_i32_0 = arith.constant 0 : i32
    %c0_i32_1 = arith.constant 0 : i32
    return %c0_i32, %c0_i32_0 : i32, i32
  }
  func.func @transform_6(%arg0: i32) -> (i32, i32) {
    %c0_i32 = arith.constant 0 : i32
    %c0_i32_0 = arith.constant 0 : i32
    %c0_i32_1 = arith.constant 0 : i32
    return %c0_i32, %c0_i32_0 : i32, i32
  }
  func.func @transform_7(%arg0: i32) -> (i32, i32) {
    %c0_i32 = arith.constant 0 : i32
    %c0_i32_0 = arith.constant 0 : i32
    %c0_i32_1 = arith.constant 0 : i32
    return %c0_i32, %c0_i32_0 : i32, i32
  }
  func.func @transform_8(%arg0: i32) -> (i32, i32) {
    %c0_i32 = arith.constant 0 : i32
    %c0_i32_0 = arith.constant 0 : i32
    %c0_i32_1 = arith.constant 0 : i32
    return %c0_i32, %c0_i32_0 : i32, i32
  }
  func.func @transform_9(%arg0: i32) -> (i32, i32) {
    %c0_i32 = arith.constant 0 : i32
    %c0_i32_0 = arith.constant 0 : i32
    %c0_i32_1 = arith.constant 0 : i32
    return %c0_i32, %c0_i32_0 : i32, i32
  }
  func.func @transform_10(%arg0: i32) -> (i32, i32) {
    %c0_i32 = arith.constant 0 : i32
    %c0_i32_0 = arith.constant 0 : i32
    %c0_i32_1 = arith.constant 0 : i32
    return %c0_i32, %c0_i32_0 : i32, i32
  }
  func.func @transform_11(%arg0: i32) -> (i32, i32) {
    %c0_i32 = arith.constant 0 : i32
    %c0_i32_0 = arith.constant 0 : i32
    %c0_i32_1 = arith.constant 0 : i32
    return %c0_i32, %c0_i32_0 : i32, i32
  }
  func.func @transform_12(%arg0: i32) -> (i32, i32) {
    %c0_i32 = arith.constant 0 : i32
    %c0_i32_0 = arith.constant 0 : i32
    %c0_i32_1 = arith.constant 0 : i32
    return %c0_i32, %c0_i32_0 : i32, i32
  }
  func.func @transform_13(%arg0: i32) -> (i32, i32) {
    %c0_i32 = arith.constant 0 : i32
    %c0_i32_0 = arith.constant 0 : i32
    %c0_i32_1 = arith.constant 0 : i32
    return %c0_i32, %c0_i32_0 : i32, i32
  }
  func.func @transform_14(%arg0: i32) -> (i32, i32) {
    %c0_i32 = arith.constant 0 : i32
    %c0_i32_0 = arith.constant 0 : i32
    %c0_i32_1 = arith.constant 0 : i32
    return %c0_i32, %c0_i32_0 : i32, i32
  }
  func.func @transform_15(%arg0: i32) -> (i32, i32) {
    %c0_i32 = arith.constant 0 : i32
    %c0_i32_0 = arith.constant 0 : i32
    %c0_i32_1 = arith.constant 0 : i32
    return %c0_i32, %c0_i32_0 : i32, i32
  }
  func.func @transform_16(%arg0: i32) -> (i32, i32) {
    %c0_i32 = arith.constant 0 : i32
    %c0_i32_0 = arith.constant 0 : i32
    %c0_i32_1 = arith.constant 0 : i32
    return %c0_i32, %c0_i32_0 : i32, i32
  }
  func.func @transform_17(%arg0: i32) -> (i32, i32) {
    %c0_i32 = arith.constant 0 : i32
    %c0_i32_0 = arith.constant 0 : i32
    %c0_i32_1 = arith.constant 0 : i32
    return %c0_i32, %c0_i32_0 : i32, i32
  }
  func.func @transform_18(%arg0: i32) -> (i32, i32) {
    %c0_i32 = arith.constant 0 : i32
    %c0_i32_0 = arith.constant 0 : i32
    %c0_i32_1 = arith.constant 0 : i32
    return %c0_i32, %c0_i32_0 : i32, i32
  }
  func.func @transform_19(%arg0: i32) -> (i32, i32) {
    %c0_i32 = arith.constant 0 : i32
    %c0_i32_0 = arith.constant 0 : i32
    %c0_i32_1 = arith.constant 0 : i32
    return %c0_i32, %c0_i32_0 : i32, i32
  }
  func.func @transform_20(%arg0: i32) -> (i32, i32, i32) {
    %c0_i32 = arith.constant 0 : i32
    %c0_i32_0 = arith.constant 0 : i32
    %c0_i32_1 = arith.constant 0 : i32
    return %arg0, %c0_i32, %c0_i32_0 : i32, i32, i32
  }
}

</mosaic_0001>

<llo_original>
// kernel: _lambda_.1
$region0: #{_lambda_.1}
  #allocation0 [shape = 'u32[]', space=smem, size = 0x4, offset = 0x4, fixed_abs, tag = 'smem constant byte address 0x4 - core index']
  #allocation1 [shape = 'u32[144,128]{1,0:T(1,128)}', space=vmem, size = 0x12000, scoped, tag = 'internal scratch']
  %s0 = inlined_call_operand.vmem [shape: f32[2,64,128], index: 0, kind: input, shape index: {}]
  %s1 = inlined_call_operand.vmem [shape: f32[9,128], index: 1, kind: input, shape index: {}]
  %s2 = inlined_call_operand.vmem [shape: f32[1,128], index: 2, kind: input, shape index: {}]
  %s3 = inlined_call_operand.vmem [shape: f32[1,128], index: 3, kind: input, shape index: {}]
  %s4 = inlined_call_operand.vmem [shape: f32[1,128], index: 4, kind: input, shape index: {}]
  %s5 = inlined_call_operand.vmem [shape: bf16[128,256], index: 5, kind: input, shape index: {}]
  %s6 = inlined_call_operand.vmem [shape: f32[1,256], index: 6, kind: input, shape index: {}]
  %s7 = inlined_call_operand.vmem [shape: f32[9,128], index: 7, kind: input, shape index: {}]
  %s8 = inlined_call_operand.vmem [shape: f32[1,128], index: 8, kind: input, shape index: {}]
  %s9 = inlined_call_operand.vmem [shape: bf16[128,256], index: 9, kind: input, shape index: {}]
  %s10 = inlined_call_operand.vmem [shape: f32[1,256], index: 10, kind: input, shape index: {}]
  %s11 = inlined_call_operand.vmem [shape: f32[9,128], index: 11, kind: input, shape index: {}]
  %s12 = inlined_call_operand.vmem [shape: f32[1,128], index: 12, kind: input, shape index: {}]
  %s13 = inlined_call_operand.vmem [shape: bf16[128,128], index: 13, kind: input, shape index: {}]
  %s14 = inlined_call_operand.vmem [shape: f32[1,128], index: 14, kind: input, shape index: {}]
  %s15 = inlined_call_operand.vmem [shape: f32[64,128], index: 15, kind: input, shape index: {}]
  %s16 = inlined_call_operand.vmem [shape: f32[64,128], index: 16, kind: input, shape index: {}]
  %s17 = inlined_call_operand.vmem [shape: bf16[128,128], index: 17, kind: input, shape index: {}]
  %s18 = inlined_call_operand.vmem [shape: f32[128,128], index: 18, kind: input, shape index: {}]
  %s19 = inlined_call_operand.vmem [shape: f32[128,128], index: 19, kind: input, shape index: {}]
  %s20 = inlined_call_operand.vmem [shape: f32[2,64,128], index: 20, kind: output, shape index: {}]
  %s21 = sld [smem:[#allocation0]]
  $region113: #{_lambda_.1} parent=0
    _
  %s23 = ssub.s32 1, %s21
  %s24 = scalar_select 0, %s23, %s21
  loop: start=0, step=1, limit=4
  $region2: #{_lambda_.1} parent=0 // loop_pre_header
    _
  $region3: #{_lambda_.1} parent=0 // loop_header
    %s26 = sphi 0, %s30
    %p27 = scmp.ge.s32.totalorder %s26, 4
    %s36 = sphi 0, %s38
    %s39 = sphi 0, %s36
    %s40 = sphi 0, %s39
    %s56 = sphi 0, %s40
    %s60 = sphi 0, %s60
    %s62 = sphi 0, %s60
    %s63 = sphi 0, %s62
    %s77 = sphi 0, %s63
    %s81 = sphi 0, %s81
    %s83 = sphi 0, %s81
    %s84 = sphi 0, %s83
    %s98 = sphi 0, %s84
    %s102 = sphi 0, %s102
    %s104 = sphi 0, %s102
    %s105 = sphi 0, %s104
    %s119 = sphi 0, %s105
    %s123 = sphi 0, %s123
    %s125 = sphi 0, %s123
    %s126 = sphi 0, %s125
    %s140 = sphi 0, %s126
    %s144 = sphi 0, %s144
    %s146 = sphi 0, %s144
    %s147 = sphi 0, %s146
    %s161 = sphi 0, %s147
    %s165 = sphi 0, %s165
    %s167 = sphi 0, %s165
    %s168 = sphi 0, %s167
    %s182 = sphi 0, %s168
    %s186 = sphi 0, %s186
    %s188 = sphi 0, %s186
    %s189 = sphi 0, %s188
    %s203 = sphi 0, %s189
    %s207 = sphi 0, %s207
    %s209 = sphi 0, %s207
    %s210 = sphi 0, %s209
    %s224 = sphi 0, %s210
    %s228 = sphi 0, %s228
    %s230 = sphi 0, %s228
    %s231 = sphi 0, %s230
    %s245 = sphi 0, %s231
    %s249 = sphi 0, %s249
    %s251 = sphi 0, %s249
    %s252 = sphi 0, %s251
    %s266 = sphi 0, %s252
    %s270 = sphi 0, %s270
    %s272 = sphi 0, %s270
    %s273 = sphi 0, %s272
    %s287 = sphi 0, %s273
    %s291 = sphi 0, %s291
    %s293 = sphi 0, %s291
    %s294 = sphi 0, %s293
    %s308 = sphi 0, %s294
    %s312 = sphi 0, %s312
    %s314 = sphi 0, %s312
    %s315 = sphi 0, %s314
    %s329 = sphi 0, %s315
    %s333 = sphi 0, %s333
    %s335 = sphi 0, %s333
    %s336 = sphi 0, %s335
    %s350 = sphi 0, %s336
    %s354 = sphi 0, %s354
    %s356 = sphi 0, %s354
    %s357 = sphi 0, %s356
    %s371 = sphi 0, %s357
    %s375 = sphi 0, %s375
    %s377 = sphi 0, %s375
    %s378 = sphi 0, %s377
    %s392 = sphi 0, %s378
    %s396 = sphi 0, %s396
    %s398 = sphi 0, %s396
    %s399 = sphi 0, %s398
    %s413 = sphi 0, %s399
    %s417 = sphi 0, %s417
    %s419 = sphi 0, %s417
    %s420 = sphi 0, %s419
    %s434 = sphi 0, %s420
    %s438 = sphi 0, %s438
    %s440 = sphi 0, %s438
    %s441 = sphi 0, %s440
    %s455 = sphi 0, %s441
    %s461 = sphi 0, %s463
    %s464 = sphi 0, %s461
    %s465 = sphi 0, %s464
    %s481 = sphi 0, %s465
  $region4: #{_lambda_.1} parent=0 // loop_header_branch
    %29 = sbr.rel (%p27) target = $region8
  $region5: #{_lambda_.1} parent=0 // loop_body
    %s31 = ssub.s32 %s26, 1
    %s32 = ssub.s32 %s26, 2
    %s33 = sadd.s32 %s26, 1
    %s34 = ssub.s32 %s26, %s33
    %p35 = scmp.eq.s32.totalorder %s34, 0
    %s37 = sadd.s32 %s36, 1
    %s38 = scalar_select %p35, %s36, %s37
    %p41 = pneg %p35
    %p42 = scmp.eq.s32.totalorder %s26, 1
    %p43 = por %p41, %p42
    %p44 = scmp.ne.s32.totalorder %s36, %s39
    %p45 = scmp.eq.s32.totalorder %s26, 0
    %p46 = por %p44, %p45
    %p47 = scmp.ne.s32.totalorder %s36, %s39
    %p48 = scmp.eq.s32.totalorder %s31, 1
    %p49 = por %p47, %p48
    %p50 = scmp.ne.s32.totalorder %s39, %s40
    %p51 = scmp.eq.s32.totalorder %s31, 0
    %p52 = por %p50, %p51
    %p53 = scmp.ne.s32.totalorder %s39, %s40
    %p54 = scmp.eq.s32.totalorder %s32, 1
    %p55 = por %p53, %p54
    %p57 = scmp.ne.s32.totalorder %s40, %s56
    %p58 = scmp.eq.s32.totalorder %s32, 0
    %p59 = por %p57, %p58
    %s61 = sadd.s32 %s60, 1
    %p64 = scmp.eq.s32.totalorder %s26, 1
    %p65 = scmp.ne.s32.totalorder %s60, %s62
    %p66 = scmp.eq.s32.totalorder %s26, 0
    %p67 = por %p65, %p66
    %p68 = scmp.ne.s32.totalorder %s60, %s62
    %p69 = scmp.eq.s32.totalorder %s31, 1
    %p70 = por %p68, %p69
    %p71 = scmp.ne.s32.totalorder %s62, %s63
    %p72 = scmp.eq.s32.totalorder %s31, 0
    %p73 = por %p71, %p72
    %p74 = scmp.ne.s32.totalorder %s62, %s63
    %p75 = scmp.eq.s32.totalorder %s32, 1
    %p76 = por %p74, %p75
    %p78 = scmp.ne.s32.totalorder %s63, %s77
    %p79 = scmp.eq.s32.totalorder %s32, 0
    %p80 = por %p78, %p79
    %s82 = sadd.s32 %s81, 1
    %p85 = scmp.eq.s32.totalorder %s26, 1
    %p86 = scmp.ne.s32.totalorder %s81, %s83
    %p87 = scmp.eq.s32.totalorder %s26, 0
    %p88 = por %p86, %p87
    %p89 = scmp.ne.s32.totalorder %s81, %s83
    %p90 = scmp.eq.s32.totalorder %s31, 1
    %p91 = por %p89, %p90
    %p92 = scmp.ne.s32.totalorder %s83, %s84
    %p93 = scmp.eq.s32.totalorder %s31, 0
    %p94 = por %p92, %p93
    %p95 = scmp.ne.s32.totalorder %s83, %s84
    %p96 = scmp.eq.s32.totalorder %s32, 1
    %p97 = por %p95, %p96
    %p99 = scmp.ne.s32.totalorder %s84, %s98
    %p100 = scmp.eq.s32.totalorder %s32, 0
    %p101 = por %p99, %p100
    %s103 = sadd.s32 %s102, 1
    %p106 = scmp.eq.s32.totalorder %s26, 1
    %p107 = scmp.ne.s32.totalorder %s102, %s104
    %p108 = scmp.eq.s32.totalorder %s26, 0
    %p109 = por %p107, %p108
    %p110 = scmp.ne.s32.totalorder %s102, %s104
    %p111 = scmp.eq.s32.totalorder %s31, 1
    %p112 = por %p110, %p111
    %p113 = scmp.ne.s32.totalorder %s104, %s105
    %p114 = scmp.eq.s32.totalorder %s31, 0
    %p115 = por %p113, %p114
    %p116 = scmp.ne.s32.totalorder %s104, %s105
    %p117 = scmp.eq.s32.totalorder %s32, 1
    %p118 = por %p116, %p117
    %p120 = scmp.ne.s32.totalorder %s105, %s119
    %p121 = scmp.eq.s32.totalorder %s32, 0
    %p122 = por %p120, %p121
    %s124 = sadd.s32 %s123, 1
    %p127 = scmp.eq.s32.totalorder %s26, 1
    %p128 = scmp.ne.s32.totalorder %s123, %s125
    %p129 = scmp.eq.s32.totalorder %s26, 0
    %p130 = por %p128, %p129
    %p131 = scmp.ne.s32.totalorder %s123, %s125
    %p132 = scmp.eq.s32.totalorder %s31, 1
    %p133 = por %p131, %p132
    %p134 = scmp.ne.s32.totalorder %s125, %s126
    %p135 = scmp.eq.s32.totalorder %s31, 0
    %p136 = por %p134, %p135
    %p137 = scmp.ne.s32.totalorder %s125, %s126
    %p138 = scmp.eq.s32.totalorder %s32, 1
    %p139 = por %p137, %p138
    %p141 = scmp.ne.s32.totalorder %s126, %s140
    %p142 = scmp.eq.s32.totalorder %s32, 0
    %p143 = por %p141, %p142
    %s145 = sadd.s32 %s144, 1
    %p148 = scmp.eq.s32.totalorder %s26, 1
    %p149 = scmp.ne.s32.totalorder %s144, %s146
    %p150 = scmp.eq.s32.totalorder %s26, 0
    %p151 = por %p149, %p150
    %p152 = scmp.ne.s32.totalorder %s144, %s146
    %p153 = scmp.eq.s32.totalorder %s31, 1
    %p154 = por %p152, %p153
    %p155 = scmp.ne.s32.totalorder %s146, %s147
    %p156 = scmp.eq.s32.totalorder %s31, 0
    %p157 = por %p155, %p156
    %p158 = scmp.ne.s32.totalorder %s146, %s147
    %p159 = scmp.eq.s32.totalorder %s32, 1
    %p160 = por %p158, %p159
    %p162 = scmp.ne.s32.totalorder %s147, %s161
    %p163 = scmp.eq.s32.totalorder %s32, 0
    %p164 = por %p162, %p163
    %s166 = sadd.s32 %s165, 1
    %p169 = scmp.eq.s32.totalorder %s26, 1
    %p170 = scmp.ne.s32.totalorder %s165, %s167
    %p171 = scmp.eq.s32.totalorder %s26, 0
    %p172 = por %p170, %p171
    %p173 = scmp.ne.s32.totalorder %s165, %s167
    %p174 = scmp.eq.s32.totalorder %s31, 1
    %p175 = por %p173, %p174
    %p176 = scmp.ne.s32.totalorder %s167, %s168
    %p177 = scmp.eq.s32.totalorder %s31, 0
    %p178 = por %p176, %p177
    %p179 = scmp.ne.s32.totalorder %s167, %s168
    %p180 = scmp.eq.s32.totalorder %s32, 1
    %p181 = por %p179, %p180
    %p183 = scmp.ne.s32.totalorder %s168, %s182
    %p184 = scmp.eq.s32.totalorder %s32, 0
    %p185 = por %p183, %p184
    %s187 = sadd.s32 %s186, 1
    %p190 = scmp.eq.s32.totalorder %s26, 1
    %p191 = scmp.ne.s32.totalorder %s186, %s188
    %p192 = scmp.eq.s32.totalorder %s26, 0
    %p193 = por %p191, %p192
    %p194 = scmp.ne.s32.totalorder %s186, %s188
    %p195 = scmp.eq.s32.totalorder %s31, 1
    %p196 = por %p194, %p195
    %p197 = scmp.ne.s32.totalorder %s188, %s189
    %p198 = scmp.eq.s32.totalorder %s31, 0
    %p199 = por %p197, %p198
    %p200 = scmp.ne.s32.totalorder %s188, %s189
    %p201 = scmp.eq.s32.totalorder %s32, 1
    %p202 = por %p200, %p201
    %p204 = scmp.ne.s32.totalorder %s189, %s203
    %p205 = scmp.eq.s32.totalorder %s32, 0
    %p206 = por %p204, %p205
    %s208 = sadd.s32 %s207, 1
    %p211 = scmp.eq.s32.totalorder %s26, 1
    %p212 = scmp.ne.s32.totalorder %s207, %s209
    %p213 = scmp.eq.s32.totalorder %s26, 0
    %p214 = por %p212, %p213
    %p215 = scmp.ne.s32.totalorder %s207, %s209
    %p216 = scmp.eq.s32.totalorder %s31, 1
    %p217 = por %p215, %p216
    %p218 = scmp.ne.s32.totalorder %s209, %s210
    %p219 = scmp.eq.s32.totalorder %s31, 0
    %p220 = por %p218, %p219
    %p221 = scmp.ne.s32.totalorder %s209, %s210
    %p222 = scmp.eq.s32.totalorder %s32, 1
    %p223 = por %p221, %p222
    %p225 = scmp.ne.s32.totalorder %s210, %s224
    %p226 = scmp.eq.s32.totalorder %s32, 0
    %p227 = por %p225, %p226
    %s229 = sadd.s32 %s228, 1
    %p232 = scmp.eq.s32.totalorder %s26, 1
    %p233 = scmp.ne.s32.totalorder %s228, %s230
    %p234 = scmp.eq.s32.totalorder %s26, 0
    %p235 = por %p233, %p234
    %p236 = scmp.ne.s32.totalorder %s228, %s230
    %p237 = scmp.eq.s32.totalorder %s31, 1
    %p238 = por %p236, %p237
    %p239 = scmp.ne.s32.totalorder %s230, %s231
    %p240 = scmp.eq.s32.totalorder %s31, 0
    %p241 = por %p239, %p240
    %p242 = scmp.ne.s32.totalorder %s230, %s231
    %p243 = scmp.eq.s32.totalorder %s32, 1
    %p244 = por %p242, %p243
    %p246 = scmp.ne.s32.totalorder %s231, %s245
    %p247 = scmp.eq.s32.totalorder %s32, 0
    %p248 = por %p246, %p247
    %s250 = sadd.s32 %s249, 1
    %p253 = scmp.eq.s32.totalorder %s26, 1
    %p254 = scmp.ne.s32.totalorder %s249, %s251
    %p255 = scmp.eq.s32.totalorder %s26, 0
    %p256 = por %p254, %p255
    %p257 = scmp.ne.s32.totalorder %s249, %s251
    %p258 = scmp.eq.s32.totalorder %s31, 1
    %p259 = por %p257, %p258
    %p260 = scmp.ne.s32.totalorder %s251, %s252
    %p261 = scmp.eq.s32.totalorder %s31, 0
    %p262 = por %p260, %p261
    %p263 = scmp.ne.s32.totalorder %s251, %s252
    %p264 = scmp.eq.s32.totalorder %s32, 1
    %p265 = por %p263, %p264
    %p267 = scmp.ne.s32.totalorder %s252, %s266
    %p268 = scmp.eq.s32.totalorder %s32, 0
    %p269 = por %p267, %p268
    %s271 = sadd.s32 %s270, 1
    %p274 = scmp.eq.s32.totalorder %s26, 1
    %p275 = scmp.ne.s32.totalorder %s270, %s272
    %p276 = scmp.eq.s32.totalorder %s26, 0
    %p277 = por %p275, %p276
    %p278 = scmp.ne.s32.totalorder %s270, %s272
    %p279 = scmp.eq.s32.totalorder %s31, 1
    %p280 = por %p278, %p279
    %p281 = scmp.ne.s32.totalorder %s272, %s273
    %p282 = scmp.eq.s32.totalorder %s31, 0
    %p283 = por %p281, %p282
    %p284 = scmp.ne.s32.totalorder %s272, %s273
    %p285 = scmp.eq.s32.totalorder %s32, 1
    %p286 = por %p284, %p285
    %p288 = scmp.ne.s32.totalorder %s273, %s287
    %p289 = scmp.eq.s32.totalorder %s32, 0
    %p290 = por %p288, %p289
    %s292 = sadd.s32 %s291, 1
    %p295 = scmp.eq.s32.totalorder %s26, 1
    %p296 = scmp.ne.s32.totalorder %s291, %s293
    %p297 = scmp.eq.s32.totalorder %s26, 0
    %p298 = por %p296, %p297
    %p299 = scmp.ne.s32.totalorder %s291, %s293
    %p300 = scmp.eq.s32.totalorder %s31, 1
    %p301 = por %p299, %p300
    %p302 = scmp.ne.s32.totalorder %s293, %s294
    %p303 = scmp.eq.s32.totalorder %s31, 0
    %p304 = por %p302, %p303
    %p305 = scmp.ne.s32.totalorder %s293, %s294
    %p306 = scmp.eq.s32.totalorder %s32, 1
    %p307 = por %p305, %p306
    %p309 = scmp.ne.s32.totalorder %s294, %s308
    %p310 = scmp.eq.s32.totalorder %s32, 0
    %p311 = por %p309, %p310
    %s313 = sadd.s32 %s312, 1
    %p316 = scmp.eq.s32.totalorder %s26, 1
    %p317 = scmp.ne.s32.totalorder %s312, %s314
    %p318 = scmp.eq.s32.totalorder %s26, 0
    %p319 = por %p317, %p318
    %p320 = scmp.ne.s32.totalorder %s312, %s314
    %p321 = scmp.eq.s32.totalorder %s31, 1
    %p322 = por %p320, %p321
    %p323 = scmp.ne.s32.totalorder %s314, %s315
    %p324 = scmp.eq.s32.totalorder %s31, 0
    %p325 = por %p323, %p324
    %p326 = scmp.ne.s32.totalorder %s314, %s315
    %p327 = scmp.eq.s32.totalorder %s32, 1
    %p328 = por %p326, %p327
    %p330 = scmp.ne.s32.totalorder %s315, %s329
    %p331 = scmp.eq.s32.totalorder %s32, 0
    %p332 = por %p330, %p331
    %s334 = sadd.s32 %s333, 1
    %p337 = scmp.eq.s32.totalorder %s26, 1
    %p338 = scmp.ne.s32.totalorder %s333, %s335
    %p339 = scmp.eq.s32.totalorder %s26, 0
    %p340 = por %p338, %p339
    %p341 = scmp.ne.s32.totalorder %s333, %s335
    %p342 = scmp.eq.s32.totalorder %s31, 1
    %p343 = por %p341, %p342
    %p344 = scmp.ne.s32.totalorder %s335, %s336
    %p345 = scmp.eq.s32.totalorder %s31, 0
    %p346 = por %p344, %p345
    %p347 = scmp.ne.s32.totalorder %s335, %s336
    %p348 = scmp.eq.s32.totalorder %s32, 1
    %p349 = por %p347, %p348
    %p351 = scmp.ne.s32.totalorder %s336, %s350
    %p352 = scmp.eq.s32.totalorder %s32, 0
    %p353 = por %p351, %p352
    %s355 = sadd.s32 %s354, 1
    %p358 = scmp.eq.s32.totalorder %s26, 1
    %p359 = scmp.ne.s32.totalorder %s354, %s356
    %p360 = scmp.eq.s32.totalorder %s26, 0
    %p361 = por %p359, %p360
    %p362 = scmp.ne.s32.totalorder %s354, %s356
    %p363 = scmp.eq.s32.totalorder %s31, 1
    %p364 = por %p362, %p363
    %p365 = scmp.ne.s32.totalorder %s356, %s357
    %p366 = scmp.eq.s32.totalorder %s31, 0
    %p367 = por %p365, %p366
    %p368 = scmp.ne.s32.totalorder %s356, %s357
    %p369 = scmp.eq.s32.totalorder %s32, 1
    %p370 = por %p368, %p369
    %p372 = scmp.ne.s32.totalorder %s357, %s371
    %p373 = scmp.eq.s32.totalorder %s32, 0
    %p374 = por %p372, %p373
    %s376 = sadd.s32 %s375, 1
    %p379 = scmp.eq.s32.totalorder %s26, 1
    %p380 = scmp.ne.s32.totalorder %s375, %s377
    %p381 = scmp.eq.s32.totalorder %s26, 0
    %p382 = por %p380, %p381
    %p383 = scmp.ne.s32.totalorder %s375, %s377
    %p384 = scmp.eq.s32.totalorder %s31, 1
    %p385 = por %p383, %p384
    %p386 = scmp.ne.s32.totalorder %s377, %s378
    %p387 = scmp.eq.s32.totalorder %s31, 0
    %p388 = por %p386, %p387
    %p389 = scmp.ne.s32.totalorder %s377, %s378
    %p390 = scmp.eq.s32.totalorder %s32, 1
    %p391 = por %p389, %p390
    %p393 = scmp.ne.s32.totalorder %s378, %s392
    %p394 = scmp.eq.s32.totalorder %s32, 0
    %p395 = por %p393, %p394
    %s397 = sadd.s32 %s396, 1
    %p400 = scmp.eq.s32.totalorder %s26, 1
    %p401 = scmp.ne.s32.totalorder %s396, %s398
    %p402 = scmp.eq.s32.totalorder %s26, 0
    %p403 = por %p401, %p402
    %p404 = scmp.ne.s32.totalorder %s396, %s398
    %p405 = scmp.eq.s32.totalorder %s31, 1
    %p406 = por %p404, %p405
    %p407 = scmp.ne.s32.totalorder %s398, %s399
    %p408 = scmp.eq.s32.totalorder %s31, 0
    %p409 = por %p407, %p408
    %p410 = scmp.ne.s32.totalorder %s398, %s399
    %p411 = scmp.eq.s32.totalorder %s32, 1
    %p412 = por %p410, %p411
    %p414 = scmp.ne.s32.totalorder %s399, %s413
    %p415 = scmp.eq.s32.totalorder %s32, 0
    %p416 = por %p414, %p415
    %s418 = sadd.s32 %s417, 1
    %p421 = scmp.eq.s32.totalorder %s26, 1
    %p422 = scmp.ne.s32.totalorder %s417, %s419
    %p423 = scmp.eq.s32.totalorder %s26, 0
    %p424 = por %p422, %p423
    %p425 = scmp.ne.s32.totalorder %s417, %s419
    %p426 = scmp.eq.s32.totalorder %s31, 1
    %p427 = por %p425, %p426
    %p428 = scmp.ne.s32.totalorder %s419, %s420
    %p429 = scmp.eq.s32.totalorder %s31, 0
    %p430 = por %p428, %p429
    %p431 = scmp.ne.s32.totalorder %s419, %s420
    %p432 = scmp.eq.s32.totalorder %s32, 1
    %p433 = por %p431, %p432
    %p435 = scmp.ne.s32.totalorder %s420, %s434
    %p436 = scmp.eq.s32.totalorder %s32, 0
    %p437 = por %p435, %p436
    %s439 = sadd.s32 %s438, 1
    %p442 = scmp.eq.s32.totalorder %s26, 1
    %p443 = scmp.ne.s32.totalorder %s438, %s440
    %p444 = scmp.eq.s32.totalorder %s26, 0
    %p445 = por %p443, %p444
    %p446 = scmp.ne.s32.totalorder %s438, %s440
    %p447 = scmp.eq.s32.totalorder %s31, 1
    %p448 = por %p446, %p447
    %p449 = scmp.ne.s32.totalorder %s440, %s441
    %p450 = scmp.eq.s32.totalorder %s31, 0
    %p451 = por %p449, %p450
    %p452 = scmp.ne.s32.totalorder %s440, %s441
    %p453 = scmp.eq.s32.totalorder %s32, 1
    %p454 = por %p452, %p453
    %p456 = scmp.ne.s32.totalorder %s441, %s455
    %p457 = scmp.eq.s32.totalorder %s32, 0
    %p458 = por %p456, %p457
    %s459 = ssub.s32 %s26, %s33
    %p460 = scmp.eq.s32.totalorder %s459, 0
    %s462 = sadd.s32 %s461, 1
    %s463 = scalar_select %p460, %s461, %s462
    %p466 = pneg %p460
    %p467 = scmp.eq.s32.totalorder %s26, 1
    %p468 = por %p466, %p467
    %p469 = scmp.ne.s32.totalorder %s461, %s464
    %p470 = scmp.eq.s32.totalorder %s26, 0
    %p471 = por %p469, %p470
    %p472 = scmp.ne.s32.totalorder %s461, %s464
    %p473 = scmp.eq.s32.totalorder %s31, 1
    %p474 = por %p472, %p473
    %p475 = scmp.ne.s32.totalorder %s464, %s465
    %p476 = scmp.eq.s32.totalorder %s31, 0
    %p477 = por %p475, %p476
    %p478 = scmp.ne.s32.totalorder %s464, %s465
    %p479 = scmp.eq.s32.totalorder %s32, 1
    %p480 = por %p478, %p479
    %p482 = scmp.ne.s32.totalorder %s465, %s481
    %p483 = scmp.eq.s32.totalorder %s32, 0
    %p484 = por %p482, %p483
    %p485 = scmp.le.s32.totalorder 1, %s26
    %p486 = scmp.lt.s32.totalorder %s26, 3
    %p487 = pnand %p485, %p486
    %p488 = pneg %p487
    // Predicated region
    $region9: #{_lambda_.1} parent=5 // pred_check
      _
    $region10: #{_lambda_.1} parent=5 // pred_check_branch
      %490 = sbr.rel (%p487) target = $region12
    $region11: #{_lambda_.1} parent=5 // pred_region
      %s491 = ssub.s32 %s26, 1
      // Predicated region
      $region13: #{_lambda_.1} parent=11 // pred_check
        %p492 = pneg %p73
      $region14: #{_lambda_.1} parent=11 // pred_check_branch
        %494 = sbr.rel (%p492) target = $region16
      $region15: #{_lambda_.1} parent=11 // pred_region
        _
      $region16: #{_lambda_.1} parent=11 // pred_fallthru
        _
      // Predicated region
      $region17: #{_lambda_.1} parent=11 // pred_check
        %p495 = pneg %p94
      $region18: #{_lambda_.1} parent=11 // pred_check_branch
        %497 = sbr.rel (%p495) target = $region20
      $region19: #{_lambda_.1} parent=11 // pred_region
        _
      $region20: #{_lambda_.1} parent=11 // pred_fallthru
        _
      // Predicated region
      $region21: #{_lambda_.1} parent=11 // pred_check
        %p498 = pneg %p115
      $region22: #{_lambda_.1} parent=11 // pred_check_branch
        %500 = sbr.rel (%p498) target = $region24
      $region23: #{_lambda_.1} parent=11 // pred_region
        _
      $region24: #{_lambda_.1} parent=11 // pred_fallthru
        _
      // Predicated region
      $region25: #{_lambda_.1} parent=11 // pred_check
        %p501 = pneg %p136
      $region26: #{_lambda_.1} parent=11 // pred_check_branch
        %503 = sbr.rel (%p501) target = $region28
      $region27: #{_lambda_.1} parent=11 // pred_region
        _
      $region28: #{_lambda_.1} parent=11 // pred_fallthru
        _
      // Predicated region
      $region29: #{_lambda_.1} parent=11 // pred_check
        %p504 = pneg %p157
      $region30: #{_lambda_.1} parent=11 // pred_check_branch
        %506 = sbr.rel (%p504) target = $region32
      $region31: #{_lambda_.1} parent=11 // pred_region
        _
      $region32: #{_lambda_.1} parent=11 // pred_fallthru
        _
      // Predicated region
      $region33: #{_lambda_.1} parent=11 // pred_check
        %p507 = pneg %p178
      $region34: #{_lambda_.1} parent=11 // pred_check_branch
        %509 = sbr.rel (%p507) target = $region36
      $region35: #{_lambda_.1} parent=11 // pred_region
        _
      $region36: #{_lambda_.1} parent=11 // pred_fallthru
        _
      // Predicated region
      $region37: #{_lambda_.1} parent=11 // pred_check
        %p510 = pneg %p199
      $region38: #{_lambda_.1} parent=11 // pred_check_branch
        %512 = sbr.rel (%p510) target = $region40
      $region39: #{_lambda_.1} parent=11 // pred_region
        _
      $region40: #{_lambda_.1} parent=11 // pred_fallthru
        _
      // Predicated region
      $region41: #{_lambda_.1} parent=11 // pred_check
        %p513 = pneg %p220
      $region42: #{_lambda_.1} parent=11 // pred_check_branch
        %515 = sbr.rel (%p513) target = $region44
      $region43: #{_lambda_.1} parent=11 // pred_region
        _
      $region44: #{_lambda_.1} parent=11 // pred_fallthru
        _
      // Predicated region
      $region45: #{_lambda_.1} parent=11 // pred_check
        %p516 = pneg %p241
      $region46: #{_lambda_.1} parent=11 // pred_check_branch
        %518 = sbr.rel (%p516) target = $region48
      $region47: #{_lambda_.1} parent=11 // pred_region
        _
      $region48: #{_lambda_.1} parent=11 // pred_fallthru
        _
      // Predicated region
      $region49: #{_lambda_.1} parent=11 // pred_check
        %p519 = pneg %p262
      $region50: #{_lambda_.1} parent=11 // pred_check_branch
        %521 = sbr.rel (%p519) target = $region52
      $region51: #{_lambda_.1} parent=11 // pred_region
        _
      $region52: #{_lambda_.1} parent=11 // pred_fallthru
        _
      // Predicated region
      $region53: #{_lambda_.1} parent=11 // pred_check
        %p522 = pneg %p283
      $region54: #{_lambda_.1} parent=11 // pred_check_branch
        %524 = sbr.rel (%p522) target = $region56
      $region55: #{_lambda_.1} parent=11 // pred_region
        _
      $region56: #{_lambda_.1} parent=11 // pred_fallthru
        _
      // Predicated region
      $region57: #{_lambda_.1} parent=11 // pred_check
        %p525 = pneg %p304
      $region58: #{_lambda_.1} parent=11 // pred_check_branch
        %527 = sbr.rel (%p525) target = $region60
      $region59: #{_lambda_.1} parent=11 // pred_region
        _
      $region60: #{_lambda_.1} parent=11 // pred_fallthru
        _
      // Predicated region
      $region61: #{_lambda_.1} parent=11 // pred_check
        %p528 = pneg %p325
      $region62: #{_lambda_.1} parent=11 // pred_check_branch
        %530 = sbr.rel (%p528) target = $region64
      $region63: #{_lambda_.1} parent=11 // pred_region
        _
      $region64: #{_lambda_.1} parent=11 // pred_fallthru
        _
      // Predicated region
      $region65: #{_lambda_.1} parent=11 // pred_check
        %p531 = pneg %p346
      $region66: #{_lambda_.1} parent=11 // pred_check_branch
        %533 = sbr.rel (%p531) target = $region68
      $region67: #{_lambda_.1} parent=11 // pred_region
        _
      $region68: #{_lambda_.1} parent=11 // pred_fallthru
        _
      // Predicated region
      $region69: #{_lambda_.1} parent=11 // pred_check
        %p534 = pneg %p367
      $region70: #{_lambda_.1} parent=11 // pred_check_branch
        %536 = sbr.rel (%p534) target = $region72
      $region71: #{_lambda_.1} parent=11 // pred_region
        _
      $region72: #{_lambda_.1} parent=11 // pred_fallthru
        _
      // Predicated region
      $region73: #{_lambda_.1} parent=11 // pred_check
        %p537 = pneg %p388
      $region74: #{_lambda_.1} parent=11 // pred_check_branch
        %539 = sbr.rel (%p537) target = $region76
      $region75: #{_lambda_.1} parent=11 // pred_region
        _
      $region76: #{_lambda_.1} parent=11 // pred_fallthru
        _
      // Predicated region
      $region77: #{_lambda_.1} parent=11 // pred_check
        %p540 = pneg %p409
      $region78: #{_lambda_.1} parent=11 // pred_check_branch
        %542 = sbr.rel (%p540) target = $region80
      $region79: #{_lambda_.1} parent=11 // pred_region
        _
      $region80: #{_lambda_.1} parent=11 // pred_fallthru
        _
      // Predicated region
      $region81: #{_lambda_.1} parent=11 // pred_check
        %p543 = pneg %p430
      $region82: #{_lambda_.1} parent=11 // pred_check_branch
        %545 = sbr.rel (%p543) target = $region84
      $region83: #{_lambda_.1} parent=11 // pred_region
        _
      $region84: #{_lambda_.1} parent=11 // pred_fallthru
        _
      // Predicated region
      $region85: #{_lambda_.1} parent=11 // pred_check
        %p546 = pneg %p451
      $region86: #{_lambda_.1} parent=11 // pred_check_branch
        %548 = sbr.rel (%p546) target = $region88
      $region87: #{_lambda_.1} parent=11 // pred_region
        _
      $region88: #{_lambda_.1} parent=11 // pred_fallthru
        _
    $region12: #{_lambda_.1} parent=5 // pred_fallthru
      _
    %p549 = scmp.lt.s32.totalorder %s26, 2
    // Predicated region
    $region89: #{_lambda_.1} parent=5 // pred_check
      %p550 = pneg %p549
    $region90: #{_lambda_.1} parent=5 // pred_check_branch
      %552 = sbr.rel (%p550) target = $region92
    $region91: #{_lambda_.1} parent=5 // pred_region
      // Predicated region
      $region93: #{_lambda_.1} parent=91 // pred_check
        %p553 = pneg %p46
      $region94: #{_lambda_.1} parent=91 // pred_check_branch
        %555 = sbr.rel (%p553) target = $region96
      $region95: #{_lambda_.1} parent=91 // pred_region
        %p556 = scmp.lt.s32.totalorder %s26, 1
        %s557 = scalar_select %p556, %s26, 1
        %s558 = smul.addr %s557, 8
        %s559 = smul.addr %s558, 8
        %s560 = scalar_lea.vmem %s0, %s559
      $region96: #{_lambda_.1} parent=91 // pred_fallthru
        _
    $region92: #{_lambda_.1} parent=5 // pred_fallthru
      _
    %p561 = scmp.le.s32.totalorder 1, %s26
    %p562 = scmp.lt.s32.totalorder %s26, 3
    %p563 = pnand %p561, %p562
    %p564 = pneg %p563
    // Predicated region
    $region97: #{_lambda_.1} parent=5 // pred_check
      _
    $region98: #{_lambda_.1} parent=5 // pred_check_branch
      %566 = sbr.rel (%p563) target = $region100
    $region99: #{_lambda_.1} parent=5 // pred_region
      %s567 = ssub.s32 %s26, 1
      %p568 = scmp.lt.s32.totalorder %s31, 1
      %s569 = scalar_select %p568, %s31, 1
      %s570 = smul.addr %s569, 8
      %s571 = smul.addr %s570, 8
      %s572 = scalar_lea.vmem %s0, %s571
      %p573 = pneg %p52
      %p574 = pneg %p49
      %p575 = pneg %p73
      %p576 = pneg %p70
      %p577 = pneg %p94
      %p578 = pneg %p91
      %p579 = pneg %p115
      %p580 = pneg %p112
      %p581 = pneg %p136
      %p582 = pneg %p133
      %p583 = pneg %p157
      %p584 = pneg %p154
      %p585 = pneg %p178
      %p586 = pneg %p175
      %p587 = pneg %p199
      %p588 = pneg %p196
      %p589 = pneg %p220
      %p590 = pneg %p217
      %p591 = pneg %p241
      %p592 = pneg %p238
      %p593 = pneg %p262
      %p594 = pneg %p259
      %p595 = pneg %p283
      %p596 = pneg %p280
      %p597 = pneg %p304
      %p598 = pneg %p301
      %p599 = pneg %p325
      %p600 = pneg %p322
      %p601 = pneg %p346
      %p602 = pneg %p343
      %p603 = pneg %p367
      %p604 = pneg %p364
      %p605 = pneg %p388
      %p606 = pneg %p385
      %p607 = pneg %p409
      %p608 = pneg %p406
      %p609 = pneg %p430
      %p610 = pneg %p427
      %p611 = pneg %p451
      %p612 = pneg %p448
      %p613 = pneg %p477
      %p614 = pneg %p474
      %p615 = scmp.lt.s32.totalorder %s31, 1
      %s616 = scalar_select %p615, %s31, 1
      %s617 = smul.addr %s616, 8
      %s618 = smul.addr %s617, 8
      %s619 = scalar_lea.vmem %s20, %s618
      %p620 = scmp.lt.s32.totalorder %s31, 1
      %s621 = scalar_select %p620, %s31, 1
      %s622 = smul.addr %s621, 8
      %s623 = smul.addr %s622, 8
      %s624 = scalar_lea.vmem %s0, %s623
      %p625 = scmp.lt.s32.totalorder %s31, 1
      %s626 = scalar_select %p625, %s31, 1
      %s627 = smul.addr %s626, 8
      %s628 = smul.addr %s627, 8
      %s629 = scalar_lea.vmem %s20, %s628
      %v631 = vlaneseq
      %v632 = vshrl.u32 %v631, 7
      %v633 = vadd.s32 %v632, 8
      %v634 = vadd.s32 %v632, 16
      %v635 = vadd.s32 %v632, 24
      %v636 = vadd.s32 %v632, 32
      %v637 = vadd.s32 %v632, 40
      %v638 = vadd.s32 %v632, 48
      %v639 = vadd.s32 %v632, 56
      %vm640 = vcmp.lt.s32.totalorder %v632, 0
      %v641 = vsub.s32 0, %v632
      %v642 = vsel %vm640, %v641, %v632
      %v643 = vshrl.u32 %v642, 3
      %v644 = vand.u32 %v642, 7
      %v645 = vsub.s32 0, %v644
      %v646 = vsel %vm640, %v645, %v644
      %vm647 = vcmp.lt.s32.totalorder %v633, 0
      %v648 = vsub.s32 0, %v633
      %v649 = vsel %vm647, %v648, %v633
      %v650 = vshrl.u32 %v649, 3
      %v651 = vand.u32 %v649, 7
      %v652 = vsub.s32 0, %v651
      %v653 = vsel %vm647, %v652, %v651
      %vm654 = vcmp.lt.s32.totalorder %v634, 0
      %v655 = vsub.s32 0, %v634
      %v656 = vsel %vm654, %v655, %v634
      %v657 = vshrl.u32 %v656, 3
      %v658 = vand.u32 %v656, 7
      %v659 = vsub.s32 0, %v658
      %v660 = vsel %vm654, %v659, %v658
      %vm661 = vcmp.lt.s32.totalorder %v635, 0
      %v662 = vsub.s32 0, %v635
      %v663 = vsel %vm661, %v662, %v635
      %v664 = vshrl.u32 %v663, 3
      %v665 = vand.u32 %v663, 7
      %v666 = vsub.s32 0, %v665
      %v667 = vsel %vm661, %v666, %v665
      %vm668 = vcmp.lt.s32.totalorder %v636, 0
      %v669 = vsub.s32 0, %v636
      %v670 = vsel %vm668, %v669, %v636
      %v671 = vshrl.u32 %v670, 3
      %v672 = vand.u32 %v670, 7
      %v673 = vsub.s32 0, %v672
      %v674 = vsel %vm668, %v673, %v672
      %vm675 = vcmp.lt.s32.totalorder %v637, 0
      %v676 = vsub.s32 0, %v637
      %v677 = vsel %vm675, %v676, %v637
      %v678 = vshrl.u32 %v677, 3
      %v679 = vand.u32 %v677, 7
      %v680 = vsub.s32 0, %v679
      %v681 = vsel %vm675, %v680, %v679
      %vm682 = vcmp.lt.s32.totalorder %v638, 0
      %v683 = vsub.s32 0, %v638
      %v684 = vsel %vm682, %v683, %v638
      %v685 = vshrl.u32 %v684, 3
      %v686 = vand.u32 %v684, 7
      %v687 = vsub.s32 0, %v686
      %v688 = vsel %vm682, %v687, %v686
      %vm689 = vcmp.lt.s32.totalorder %v639, 0
      %v690 = vsub.s32 0, %v639
      %v691 = vsel %vm689, %v690, %v639
      %v692 = vshrl.u32 %v691, 3
      %v693 = vand.u32 %v691, 7
      %v694 = vsub.s32 0, %v693
      %v695 = vsel %vm689, %v694, %v693
      %vm696 = vcmp.ne.s32.totalorder %v646, 0
      %vm697 = vcmp.ne.s32.totalorder %v653, 0
      %vm698 = vcmp.ne.s32.totalorder %v660, 0
      %vm699 = vcmp.ne.s32.totalorder %v667, 0
      %vm700 = vcmp.ne.s32.totalorder %v674, 0
      %vm701 = vcmp.ne.s32.totalorder %v681, 0
      %vm702 = vcmp.ne.s32.totalorder %v688, 0
      %vm703 = vcmp.ne.s32.totalorder %v695, 0
      %vm704 = vcmp.lt.s32.totalorder %v646, 0
      %vm705 = vcmp.lt.s32.totalorder %v653, 0
      %vm706 = vcmp.lt.s32.totalorder %v660, 0
      %vm707 = vcmp.lt.s32.totalorder %v667, 0
      %vm708 = vcmp.lt.s32.totalorder %v674, 0
      %vm709 = vcmp.lt.s32.totalorder %v681, 0
      %vm710 = vcmp.lt.s32.totalorder %v688, 0
      %vm711 = vcmp.lt.s32.totalorder %v695, 0
      %vm712 = vmand %vm704, %vm696
      %vm713 = vmand %vm705, %vm697
      %vm714 = vmand %vm706, %vm698
      %vm715 = vmand %vm707, %vm699
      %vm716 = vmand %vm708, %vm700
      %vm717 = vmand %vm709, %vm701
      %vm718 = vmand %vm710, %vm702
      %vm719 = vmand %vm711, %vm703
      %v720 = vadd.s32 %v646, 8
      %v721 = vadd.s32 %v653, 8
      %v722 = vadd.s32 %v660, 8
      %v723 = vadd.s32 %v667, 8
      %v724 = vadd.s32 %v674, 8
      %v725 = vadd.s32 %v681, 8
      %v726 = vadd.s32 %v688, 8
      %v727 = vadd.s32 %v695, 8
      %v728 = vsel %vm712, %v720, %v646
      %v729 = vsel %vm713, %v721, %v653
      %v730 = vsel %vm714, %v722, %v660
      %v731 = vsel %vm715, %v723, %v667
      %v732 = vsel %vm716, %v724, %v674
      %v733 = vsel %vm717, %v725, %v681
      %v734 = vsel %vm718, %v726, %v688
      %v735 = vsel %vm719, %v727, %v695
      %vm736 = vcmp.ne.s32.totalorder %v728, 0
      %vm737 = vcmp.ne.s32.totalorder %v729, 0
      %vm738 = vcmp.ne.s32.totalorder %v730, 0
      %vm739 = vcmp.ne.s32.totalorder %v731, 0
      %vm740 = vcmp.ne.s32.totalorder %v732, 0
      %vm741 = vcmp.ne.s32.totalorder %v733, 0
      %vm742 = vcmp.ne.s32.totalorder %v734, 0
      %vm743 = vcmp.ne.s32.totalorder %v735, 0
      %v744 = vsel %vm736, 1, 0
      %v745 = vsel %vm737, 1, 0
      %v746 = vsel %vm738, 1, 0
      %v747 = vsel %vm739, 1, 0
      %v748 = vsel %vm740, 1, 0
      %v749 = vsel %vm741, 1, 0
      %v750 = vsel %vm742, 1, 0
      %v751 = vsel %vm743, 1, 0
      %v752 = vcvt.s32.f32 %v744
      %v753 = vcvt.s32.f32 %v745
      %v754 = vcvt.s32.f32 %v746
      %v755 = vcvt.s32.f32 %v747
      %v756 = vcvt.s32.f32 %v748
      %v757 = vcvt.s32.f32 %v749
      %v758 = vcvt.s32.f32 %v750
      %v759 = vcvt.s32.f32 %v751
      %vm760 = vcmp.ne.s32.totalorder %v728, 7
      %vm761 = vcmp.ne.s32.totalorder %v729, 7
      %vm762 = vcmp.ne.s32.totalorder %v730, 7
      %vm763 = vcmp.ne.s32.totalorder %v731, 7
      %vm764 = vcmp.ne.s32.totalorder %v732, 7
      %vm765 = vcmp.ne.s32.totalorder %v733, 7
      %vm766 = vcmp.ne.s32.totalorder %v734, 7
      %vm767 = vcmp.ne.s32.totalorder %v735, 7
      %v768 = vsel %vm760, 1, 0
      %v769 = vsel %vm761, 1, 0
      %v770 = vsel %vm762, 1, 0
      %v771 = vsel %vm763, 1, 0
      %v772 = vsel %vm764, 1, 0
      %v773 = vsel %vm765, 1, 0
      %v774 = vsel %vm766, 1, 0
      %v775 = vsel %vm767, 1, 0
      %v776 = vcvt.s32.f32 %v768
      %v777 = vcvt.s32.f32 %v769
      %v778 = vcvt.s32.f32 %v770
      %v779 = vcvt.s32.f32 %v771
      %v780 = vcvt.s32.f32 %v772
      %v781 = vcvt.s32.f32 %v773
      %v782 = vcvt.s32.f32 %v774
      %v783 = vcvt.s32.f32 %v775
      %v784 = vld [vmem:[%s624] sm:$0xff]
      %v785 = vld [vmem:[%s624 + $0x8] sm:$0xff]
      %v786 = vld [vmem:[%s624 + $0x10] sm:$0xff]
      %v787 = vld [vmem:[%s624 + $0x18] sm:$0xff]
      %v788 = vld [vmem:[%s624 + $0x20] sm:$0xff]
      %v789 = vld [vmem:[%s624 + $0x28] sm:$0xff]
      %v790 = vld [vmem:[%s624 + $0x30] sm:$0xff]
      %v791 = vld [vmem:[%s624 + $0x38] sm:$0xff]
      %v792 = vld [vmem:[%s1] sm:$0xff]
      %v793 = vld [vmem:[%s1 + $0x8] sm:$0x1]
      %v794 = vld [vmem:[%s2] sm:$0x1]
      %v796 = vlaneseq
      %v797 = vshrl.u32 %v796, 7
      %v798 = vsub.s32 0, %v797
      %v799 = vrot.slane %v794, %v798
      %vm808 = vcmask 1040384
      %v809 = vrot.slane %v784, 7
      %v810 = vrot.slane %v785, 7
      %v811 = vsel %vm808, %v809, %v810
      %v812 = vrot.slane %v786, 7
      %v813 = vsel %vm808, %v810, %v812
      %v814 = vrot.slane %v787, 7
      %v815 = vsel %vm808, %v812, %v814
      %v816 = vrot.slane %v788, 7
      %v817 = vsel %vm808, %v814, %v816
      %v818 = vrot.slane %v789, 7
      %v819 = vsel %vm808, %v816, %v818
      %v820 = vrot.slane %v790, 7
      %v821 = vsel %vm808, %v818, %v820
      %v829 = vsel %vm808, 0.0, %v809
      %v830 = vmul.f32 %v752, 0.0
      %v831 = vmul.f32 %v829, %v753
      %v832 = vmul.f32 %v811, %v754
      %v833 = vmul.f32 %v813, %v755
      %v834 = vmul.f32 %v815, %v756
      %v835 = vmul.f32 %v817, %v757
      %v836 = vmul.f32 %v819, %v758
      %v837 = vmul.f32 %v821, %v759
      %v838 = vlaneseq
      %v839 = vshrl.u32 %v838, 7
      %v840 = vsub.s32 0, %v839
      %v841 = vrot.slane %v792, %v840
      %v842 = vmul.f32 %v841, %v830
      %v843 = vmul.f32 %v841, %v831
      %v844 = vmul.f32 %v841, %v832
      %v845 = vmul.f32 %v841, %v833
      %v846 = vmul.f32 %v841, %v834
      %v847 = vmul.f32 %v841, %v835
      %v848 = vmul.f32 %v841, %v836
      %v849 = vmul.f32 %v841, %v837
      %v850 = vadd.f32 %v799, %v842
      %v851 = vadd.f32 %v799, %v843
      %v852 = vadd.f32 %v799, %v844
      %v853 = vadd.f32 %v799, %v845
      %v854 = vadd.f32 %v799, %v846
      %v855 = vadd.f32 %v799, %v847
      %v856 = vadd.f32 %v799, %v848
      %v857 = vadd.f32 %v799, %v849
      %v858 = vlaneseq
      %v859 = vshrl.u32 %v858, 7
      %v860 = vsub.s32 1, %v859
      %v861 = vrot.slane %v792, %v860
      %v862 = vmul.f32 %v861, 0.0
      %v863 = vmul.f32 %v861, %v784
      %v864 = vmul.f32 %v861, %v785
      %v865 = vmul.f32 %v861, %v786
      %v866 = vmul.f32 %v861, %v787
      %v867 = vmul.f32 %v861, %v788
      %v868 = vmul.f32 %v861, %v789
      %v869 = vmul.f32 %v861, %v790
      %v870 = vadd.f32 %v850, %v862
      %v871 = vadd.f32 %v851, %v863
      %v872 = vadd.f32 %v852, %v864
      %v873 = vadd.f32 %v853, %v865
      %v874 = vadd.f32 %v854, %v866
      %v875 = vadd.f32 %v855, %v867
      %v876 = vadd.f32 %v856, %v868
      %v877 = vadd.f32 %v857, %v869
      %vm879 = vcmask 1046528
      %v880 = vrot.slane %v784, 1
      %v881 = vrot.slane %v785, 1
      %v882 = vsel %vm879, %v880, %v881
      %v883 = vrot.slane %v786, 1
      %v884 = vsel %vm879, %v881, %v883
      %v885 = vrot.slane %v787, 1
      %v886 = vsel %vm879, %v883, %v885
      %v887 = vrot.slane %v788, 1
      %v888 = vsel %vm879, %v885, %v887
      %v889 = vrot.slane %v789, 1
      %v890 = vsel %vm879, %v887, %v889
      %v891 = vrot.slane %v790, 1
      %v892 = vsel %vm879, %v889, %v891
      %v893 = vrot.slane %v791, 1
      %v894 = vsel %vm879, %v891, %v893
      %v903 = vsel %vm879, 0.0, %v880
      %v904 = vmul.f32 %v903, %v776
      %v905 = vmul.f32 %v882, %v777
      %v906 = vmul.f32 %v884, %v778
      %v907 = vmul.f32 %v886, %v779
      %v908 = vmul.f32 %v888, %v780
      %v909 = vmul.f32 %v890, %v781
      %v910 = vmul.f32 %v892, %v782
      %v911 = vmul.f32 %v894, %v783
      %v912 = vlaneseq
      %v913 = vshrl.u32 %v912, 7
      %v914 = vsub.s32 2, %v913
      %v915 = vrot.slane %v792, %v914
      %v916 = vmul.f32 %v915, %v904
      %v917 = vmul.f32 %v915, %v905
      %v918 = vmul.f32 %v915, %v906
      %v919 = vmul.f32 %v915, %v907
      %v920 = vmul.f32 %v915, %v908
      %v921 = vmul.f32 %v915, %v909
      %v922 = vmul.f32 %v915, %v910
      %v923 = vmul.f32 %v915, %v911
      %v924 = vadd.f32 %v870, %v916
      %v925 = vadd.f32 %v871, %v917
      %v926 = vadd.f32 %v872, %v918
      %v927 = vadd.f32 %v873, %v919
      %v928 = vadd.f32 %v874, %v920
      %v929 = vadd.f32 %v875, %v921
      %v930 = vadd.f32 %v876, %v922
      %v931 = vadd.f32 %v877, %v923
      %v932 = vrot.slane %v791, 7
      %v933 = vsel %vm808, %v820, %v932
      %v935 = vmul.f32 %v829, %v752
      %v936 = vmul.f32 %v811, %v753
      %v937 = vmul.f32 %v813, %v754
      %v938 = vmul.f32 %v815, %v755
      %v939 = vmul.f32 %v817, %v756
      %v940 = vmul.f32 %v819, %v757
      %v941 = vmul.f32 %v821, %v758
      %v942 = vmul.f32 %v933, %v759
      %v943 = vlaneseq
      %v944 = vshrl.u32 %v943, 7
      %v945 = vsub.s32 3, %v944
      %v946 = vrot.slane %v792, %v945
      %v947 = vmul.f32 %v946, %v935
      %v948 = vmul.f32 %v946, %v936
      %v949 = vmul.f32 %v946, %v937
      %v950 = vmul.f32 %v946, %v938
      %v951 = vmul.f32 %v946, %v939
      %v952 = vmul.f32 %v946, %v940
      %v953 = vmul.f32 %v946, %v941
      %v954 = vmul.f32 %v946, %v942
      %v955 = vadd.f32 %v924, %v947
      %v956 = vadd.f32 %v925, %v948
      %v957 = vadd.f32 %v926, %v949
      %v958 = vadd.f32 %v927, %v950
      %v959 = vadd.f32 %v928, %v951
      %v960 = vadd.f32 %v929, %v952
      %v961 = vadd.f32 %v930, %v953
      %v962 = vadd.f32 %v931, %v954
      %v963 = vlaneseq
      %v964 = vshrl.u32 %v963, 7
      %v965 = vsub.s32 4, %v964
      %v966 = vrot.slane %v792, %v965
      %v967 = vmul.f32 %v966, %v784
      %v968 = vmul.f32 %v966, %v785
      %v969 = vmul.f32 %v966, %v786
      %v970 = vmul.f32 %v966, %v787
      %v971 = vmul.f32 %v966, %v788
      %v972 = vmul.f32 %v966, %v789
      %v973 = vmul.f32 %v966, %v790
      %v974 = vmul.f32 %v966, %v791
      %v975 = vadd.f32 %v955, %v967
      %v976 = vadd.f32 %v956, %v968
      %v977 = vadd.f32 %v957, %v969
      %v978 = vadd.f32 %v958, %v970
      %v979 = vadd.f32 %v959, %v971
      %v980 = vadd.f32 %v960, %v972
      %v981 = vadd.f32 %v961, %v973
      %v982 = vadd.f32 %v962, %v974
      %v984 = vsel %vm879, %v893, 0.0
      %v985 = vmul.f32 %v882, %v776
      %v986 = vmul.f32 %v884, %v777
      %v987 = vmul.f32 %v886, %v778
      %v988 = vmul.f32 %v888, %v779
      %v989 = vmul.f32 %v890, %v780
      %v990 = vmul.f32 %v892, %v781
      %v991 = vmul.f32 %v894, %v782
      %v992 = vmul.f32 %v984, %v783
      %v993 = vlaneseq
      %v994 = vshrl.u32 %v993, 7
      %v995 = vsub.s32 5, %v994
      %v996 = vrot.slane %v792, %v995
      %v997 = vmul.f32 %v996, %v985
      %v998 = vmul.f32 %v996, %v986
      %v999 = vmul.f32 %v996, %v987
      %v1000 = vmul.f32 %v996, %v988
      %v1001 = vmul.f32 %v996, %v989
      %v1002 = vmul.f32 %v996, %v990
      %v1003 = vmul.f32 %v996, %v991
      %v1004 = vmul.f32 %v996, %v992
      %v1005 = vadd.f32 %v975, %v997
      %v1006 = vadd.f32 %v976, %v998
      %v1007 = vadd.f32 %v977, %v999
      %v1008 = vadd.f32 %v978, %v1000
      %v1009 = vadd.f32 %v979, %v1001
      %v1010 = vadd.f32 %v980, %v1002
      %v1011 = vadd.f32 %v981, %v1003
      %v1012 = vadd.f32 %v982, %v1004
      %v1014 = vsel %vm808, %v932, 0.0
      %v1015 = vmul.f32 %v811, %v752
      %v1016 = vmul.f32 %v813, %v753
      %v1017 = vmul.f32 %v815, %v754
      %v1018 = vmul.f32 %v817, %v755
      %v1019 = vmul.f32 %v819, %v756
      %v1020 = vmul.f32 %v821, %v757
      %v1021 = vmul.f32 %v933, %v758
      %v1022 = vmul.f32 %v1014, %v759
      %v1023 = vlaneseq
      %v1024 = vshrl.u32 %v1023, 7
      %v1025 = vsub.s32 6, %v1024
      %v1026 = vrot.slane %v792, %v1025
      %v1027 = vmul.f32 %v1026, %v1015
      %v1028 = vmul.f32 %v1026, %v1016
      %v1029 = vmul.f32 %v1026, %v1017
      %v1030 = vmul.f32 %v1026, %v1018
      %v1031 = vmul.f32 %v1026, %v1019
      %v1032 = vmul.f32 %v1026, %v1020
      %v1033 = vmul.f32 %v1026, %v1021
      %v1034 = vmul.f32 %v1026, %v1022
      %v1035 = vadd.f32 %v1005, %v1027
      %v1036 = vadd.f32 %v1006, %v1028
      %v1037 = vadd.f32 %v1007, %v1029
      %v1038 = vadd.f32 %v1008, %v1030
      %v1039 = vadd.f32 %v1009, %v1031
      %v1040 = vadd.f32 %v1010, %v1032
      %v1041 = vadd.f32 %v1011, %v1033
      %v1042 = vadd.f32 %v1012, %v1034
      %v1043 = vlaneseq
      %v1044 = vshrl.u32 %v1043, 7
      %v1045 = vsub.s32 7, %v1044
      %v1046 = vrot.slane %v792, %v1045
      %v1047 = vmul.f32 %v1046, %v785
      %v1048 = vmul.f32 %v1046, %v786
      %v1049 = vmul.f32 %v1046, %v787
      %v1050 = vmul.f32 %v1046, %v788
      %v1051 = vmul.f32 %v1046, %v789
      %v1052 = vmul.f32 %v1046, %v790
      %v1053 = vmul.f32 %v1046, %v791
      %v1054 = vmul.f32 %v1046, 0.0
      %v1055 = vadd.f32 %v1035, %v1047
      %v1056 = vadd.f32 %v1036, %v1048
      %v1057 = vadd.f32 %v1037, %v1049
      %v1058 = vadd.f32 %v1038, %v1050
      %v1059 = vadd.f32 %v1039, %v1051
      %v1060 = vadd.f32 %v1040, %v1052
      %v1061 = vadd.f32 %v1041, %v1053
      %v1062 = vadd.f32 %v1042, %v1054
      %v1063 = vmul.f32 %v884, %v776
      %v1064 = vmul.f32 %v886, %v777
      %v1065 = vmul.f32 %v888, %v778
      %v1066 = vmul.f32 %v890, %v779
      %v1067 = vmul.f32 %v892, %v780
      %v1068 = vmul.f32 %v894, %v781
      %v1069 = vmul.f32 %v984, %v782
      %v1070 = vmul.f32 %v783, 0.0
      %v1071 = vlaneseq
      %v1072 = vshrl.u32 %v1071, 7
      %v1073 = vsub.s32 0, %v1072
      %v1074 = vrot.slane %v793, %v1073
      %v1075 = vmul.f32 %v1074, %v1063
      %v1076 = vmul.f32 %v1074, %v1064
      %v1077 = vmul.f32 %v1074, %v1065
      %v1078 = vmul.f32 %v1074, %v1066
      %v1079 = vmul.f32 %v1074, %v1067
      %v1080 = vmul.f32 %v1074, %v1068
      %v1081 = vmul.f32 %v1074, %v1069
      %v1082 = vmul.f32 %v1074, %v1070
      %v1083 = vadd.f32 %v1055, %v1075
      %v1084 = vadd.f32 %v1056, %v1076
      %v1085 = vadd.f32 %v1057, %v1077
      %v1086 = vadd.f32 %v1058, %v1078
      %v1087 = vadd.f32 %v1059, %v1079
      %v1088 = vadd.f32 %v1060, %v1080
      %v1089 = vadd.f32 %v1061, %v1081
      %v1090 = vadd.f32 %v1062, %v1082
      %v1091 = vadd.f32 %v784, %v1083
      %v1092 = vadd.f32 %v785, %v1084
      %v1093 = vadd.f32 %v786, %v1085
      %v1094 = vadd.f32 %v787, %v1086
      %v1095 = vadd.f32 %v788, %v1087
      %v1096 = vadd.f32 %v789, %v1088
      %v1097 = vadd.f32 %v790, %v1089
      %v1098 = vadd.f32 %v791, %v1090
      %v1099 = vld [vmem:[%s19] sm:$0xff]
      %v1100 = vld [vmem:[%s19 + $0x8] sm:$0xff]
      %v1101 = vld [vmem:[%s19 + $0x10] sm:$0xff]
      %v1102 = vld [vmem:[%s19 + $0x18] sm:$0xff]
      %v1103 = vld [vmem:[%s19 + $0x20] sm:$0xff]
      %v1104 = vld [vmem:[%s19 + $0x28] sm:$0xff]
      %v1105 = vld [vmem:[%s19 + $0x30] sm:$0xff]
      %v1106 = vld [vmem:[%s19 + $0x38] sm:$0xff]
      %v1107 = vld [vmem:[%s19 + $0x40] sm:$0xff]
      %v1108 = vld [vmem:[%s19 + $0x48] sm:$0xff]
      %v1109 = vld [vmem:[%s19 + $0x50] sm:$0xff]
      %v1110 = vld [vmem:[%s19 + $0x58] sm:$0xff]
      %v1111 = vld [vmem:[%s19 + $0x60] sm:$0xff]
      %v1112 = vld [vmem:[%s19 + $0x68] sm:$0xff]
      %v1113 = vld [vmem:[%s19 + $0x70] sm:$0xff]
      %v1114 = vld [vmem:[%s19 + $0x78] sm:$0xff]
      %1115 = vmatprep.subr.mxu0 0.0
      %1116 = vmatpush1.msra.mxu0 %v1114
      %1117 = vmatprep.subr.mxu0 0.0
      %1118 = vmatpush1.msra.mxu0 %v1113
      %1119 = vmatprep.subr.mxu0 0.0
      %1120 = vmatpush1.msra.mxu0 %v1112
      %1121 = vmatprep.subr.mxu0 0.0
      %1122 = vmatpush1.msra.mxu0 %v1111
      %1123 = vmatprep.subr.mxu0 0.0
      %1124 = vmatpush1.msra.mxu0 %v1110
      %1125 = vmatprep.subr.mxu0 0.0
      %1126 = vmatpush1.msra.mxu0 %v1109
      %1127 = vmatprep.subr.mxu0 0.0
      %1128 = vmatpush1.msra.mxu0 %v1108
      %1129 = vmatprep.subr.mxu0 0.0
      %1130 = vmatpush1.msra.mxu0 %v1107
      %1131 = vmatprep.subr.mxu0 0.0
      %1132 = vmatpush1.msra.mxu0 %v1106
      %1133 = vmatprep.subr.mxu0 0.0
      %1134 = vmatpush1.msra.mxu0 %v1105
      %1135 = vmatprep.subr.mxu0 0.0
      %1136 = vmatpush1.msra.mxu0 %v1104
      %1137 = vmatprep.subr.mxu0 0.0
      %1138 = vmatpush1.msra.mxu0 %v1103
      %1139 = vmatprep.subr.mxu0 0.0
      %1140 = vmatpush1.msra.mxu0 %v1102
      %1141 = vmatprep.subr.mxu0 0.0
      %1142 = vmatpush1.msra.mxu0 %v1101
      %1143 = vmatprep.subr.mxu0 0.0
      %1144 = vmatpush1.msra.mxu0 %v1100
      %1145 = vmatprep.subr.mxu0 0.0
      %1146 = vmatpush1.msra.mxu0 %v1099
      %1147 = vmatprep.subr.mxu0 0.0
      %1148 = vmatpush2.msra.mxu0 0.0
      %1149 = vmatprep.subr.mxu0 0.0
      %1150 = vmatpush2.msra.mxu0 0.0
      %1151 = vmatprep.subr.mxu0 0.0
      %1152 = vmatpush2.msra.mxu0 0.0
      %1153 = vmatprep.subr.mxu0 0.0
      %1154 = vmatpush2.msra.mxu0 0.0
      %1155 = vmatprep.subr.mxu0 0.0
      %1156 = vmatpush2.msra.mxu0 0.0
      %1157 = vmatprep.subr.mxu0 0.0
      %1158 = vmatpush2.msra.mxu0 0.0
      %1159 = vmatprep.subr.mxu0 0.0
      %1160 = vmatpush2.msra.mxu0 0.0
      %1161 = vmatprep.subr.mxu0 0.0
      %1162 = vmatpush2.msra.mxu0 0.0
      %1163 = vmatprep.subr.mxu0 0.0
      %1164 = vmatpush2.msra.mxu0 0.0
      %1165 = vmatprep.subr.mxu0 0.0
      %1166 = vmatpush2.msra.mxu0 0.0
      %1167 = vmatprep.subr.mxu0 0.0
      %1168 = vmatpush2.msra.mxu0 0.0
      %1169 = vmatprep.subr.mxu0 0.0
      %1170 = vmatpush2.msra.mxu0 0.0
      %1171 = vmatprep.subr.mxu0 0.0
      %1172 = vmatpush2.msra.mxu0 0.0
      %1173 = vmatprep.subr.mxu0 0.0
      %1174 = vmatpush2.msra.mxu0 0.0
      %1175 = vmatprep.subr.mxu0 0.0
      %1176 = vmatpush2.msra.mxu0 0.0
      %1177 = vmatprep.subr.mxu0 0.0
      %1178 = vmatpush2.msra.mxu0 0.0
      %1179 = vmatprep.mubr.f32.mxu0 0.0
      %1180 = vmatmul.mubr.f32.gmra.mxu0 %v1091
      %v1181 = vpop.f32.mrf.mxu0
      %v1182 = vadd.f32 0.0, %v1181
      %v1183 = vpop.f32.mrf.mxu0
      %1184 = vmatprep.mubr.f32.mxu0 0.0
      %1185 = vmatmul.mubr.f32.gmra.mxu0 %v1092
      %v1186 = vpop.f32.mrf.mxu0
      %v1187 = vadd.f32 0.0, %v1186
      %v1188 = vpop.f32.mrf.mxu0
      %1189 = vmatprep.mubr.f32.mxu0 0.0
      %1190 = vmatmul.mubr.f32.gmra.mxu0 %v1093
      %v1191 = vpop.f32.mrf.mxu0
      %v1192 = vadd.f32 0.0, %v1191
      %v1193 = vpop.f32.mrf.mxu0
      %1194 = vmatprep.mubr.f32.mxu0 0.0
      %1195 = vmatmul.mubr.f32.gmra.mxu0 %v1094
      %v1196 = vpop.f32.mrf.mxu0
      %v1197 = vadd.f32 0.0, %v1196
      %v1198 = vpop.f32.mrf.mxu0
      %1199 = vmatprep.mubr.f32.mxu0 0.0
      %1200 = vmatmul.mubr.f32.gmra.mxu0 %v1095
      %v1201 = vpop.f32.mrf.mxu0
      %v1202 = vadd.f32 0.0, %v1201
      %v1203 = vpop.f32.mrf.mxu0
      %1204 = vmatprep.mubr.f32.mxu0 0.0
      %1205 = vmatmul.mubr.f32.gmra.mxu0 %v1096
      %v1206 = vpop.f32.mrf.mxu0
      %v1207 = vadd.f32 0.0, %v1206
      %v1208 = vpop.f32.mrf.mxu0
      %1209 = vmatprep.mubr.f32.mxu0 0.0
      %1210 = vmatmul.mubr.f32.gmra.mxu0 %v1097
      %v1211 = vpop.f32.mrf.mxu0
      %v1212 = vadd.f32 0.0, %v1211
      %v1213 = vpop.f32.mrf.mxu0
      %1214 = vmatprep.mubr.f32.mxu0 0.0
      %1215 = vmatmul.mubr.f32.gmra.mxu0 %v1098
      %v1216 = vpop.f32.mrf.mxu0
      %v1217 = vadd.f32 0.0, %v1216
      %v1218 = vpop.f32.mrf.mxu0
      %1219 = vdwg.mxu0
      %v1220 = vsub.f32 %v1091, %v1182
      %v1221 = vsub.f32 %v1092, %v1187
      %v1222 = vsub.f32 %v1093, %v1192
      %v1223 = vsub.f32 %v1094, %v1197
      %v1224 = vsub.f32 %v1095, %v1202
      %v1225 = vsub.f32 %v1096, %v1207
      %v1226 = vsub.f32 %v1097, %v1212
      %v1227 = vsub.f32 %v1098, %v1217
      %v1228 = vmul.f32 %v1220, %v1220
      %v1229 = vmul.f32 %v1221, %v1221
      %v1230 = vmul.f32 %v1222, %v1222
      %v1231 = vmul.f32 %v1223, %v1223
      %v1232 = vmul.f32 %v1224, %v1224
      %v1233 = vmul.f32 %v1225, %v1225
      %v1234 = vmul.f32 %v1226, %v1226
      %v1235 = vmul.f32 %v1227, %v1227
      %1236 = vmatprep.subr.mxu0 0.0
      %1237 = vmatpush1.msra.mxu0 %v1114
      %1238 = vmatprep.subr.mxu0 0.0
      %1239 = vmatpush1.msra.mxu0 %v1113
      %1240 = vmatprep.subr.mxu0 0.0
      %1241 = vmatpush1.msra.mxu0 %v1112
      %1242 = vmatprep.subr.mxu0 0.0
      %1243 = vmatpush1.msra.mxu0 %v1111
      %1244 = vmatprep.subr.mxu0 0.0
      %1245 = vmatpush1.msra.mxu0 %v1110
      %1246 = vmatprep.subr.mxu0 0.0
      %1247 = vmatpush1.msra.mxu0 %v1109
      %1248 = vmatprep.subr.mxu0 0.0
      %1249 = vmatpush1.msra.mxu0 %v1108
      %1250 = vmatprep.subr.mxu0 0.0
      %1251 = vmatpush1.msra.mxu0 %v1107
      %1252 = vmatprep.subr.mxu0 0.0
      %1253 = vmatpush1.msra.mxu0 %v1106
      %1254 = vmatprep.subr.mxu0 0.0
      %1255 = vmatpush1.msra.mxu0 %v1105
      %1256 = vmatprep.subr.mxu0 0.0
      %1257 = vmatpush1.msra.mxu0 %v1104
      %1258 = vmatprep.subr.mxu0 0.0
      %1259 = vmatpush1.msra.mxu0 %v1103
      %1260 = vmatprep.subr.mxu0 0.0
      %1261 = vmatpush1.msra.mxu0 %v1102
      %1262 = vmatprep.subr.mxu0 0.0
      %1263 = vmatpush1.msra.mxu0 %v1101
      %1264 = vmatprep.subr.mxu0 0.0
      %1265 = vmatpush1.msra.mxu0 %v1100
      %1266 = vmatprep.subr.mxu0 0.0
      %1267 = vmatpush1.msra.mxu0 %v1099
      %1268 = vmatprep.subr.mxu0 0.0
      %1269 = vmatpush2.msra.mxu0 0.0
      %1270 = vmatprep.subr.mxu0 0.0
      %1271 = vmatpush2.msra.mxu0 0.0
      %1272 = vmatprep.subr.mxu0 0.0
      %1273 = vmatpush2.msra.mxu0 0.0
      %1274 = vmatprep.subr.mxu0 0.0
      %1275 = vmatpush2.msra.mxu0 0.0
      %1276 = vmatprep.subr.mxu0 0.0
      %1277 = vmatpush2.msra.mxu0 0.0
      %1278 = vmatprep.subr.mxu0 0.0
      %1279 = vmatpush2.msra.mxu0 0.0
      %1280 = vmatprep.subr.mxu0 0.0
      %1281 = vmatpush2.msra.mxu0 0.0
      %1282 = vmatprep.subr.mxu0 0.0
      %1283 = vmatpush2.msra.mxu0 0.0
      %1284 = vmatprep.subr.mxu0 0.0
      %1285 = vmatpush2.msra.mxu0 0.0
      %1286 = vmatprep.subr.mxu0 0.0
      %1287 = vmatpush2.msra.mxu0 0.0
      %1288 = vmatprep.subr.mxu0 0.0
      %1289 = vmatpush2.msra.mxu0 0.0
      %1290 = vmatprep.subr.mxu0 0.0
      %1291 = vmatpush2.msra.mxu0 0.0
      %1292 = vmatprep.subr.mxu0 0.0
      %1293 = vmatpush2.msra.mxu0 0.0
      %1294 = vmatprep.subr.mxu0 0.0
      %1295 = vmatpush2.msra.mxu0 0.0
      %1296 = vmatprep.subr.mxu0 0.0
      %1297 = vmatpush2.msra.mxu0 0.0
      %1298 = vmatprep.subr.mxu0 0.0
      %1299 = vmatpush2.msra.mxu0 0.0
      %1300 = vmatprep.mubr.f32.mxu0 0.0
      %1301 = vmatmul.mubr.f32.gmra.mxu0 %v1228
      %v1302 = vpop.f32.mrf.mxu0
      %v1303 = vadd.f32 1e-05, %v1302
      %v1304 = vpop.f32.mrf.mxu0
      %1305 = vmatprep.mubr.f32.mxu0 0.0
      %1306 = vmatmul.mubr.f32.gmra.mxu0 %v1229
      %v1307 = vpop.f32.mrf.mxu0
      %v1308 = vadd.f32 1e-05, %v1307
      %v1309 = vpop.f32.mrf.mxu0
      %1310 = vmatprep.mubr.f32.mxu0 0.0
      %1311 = vmatmul.mubr.f32.gmra.mxu0 %v1230
      %v1312 = vpop.f32.mrf.mxu0
      %v1313 = vadd.f32 1e-05, %v1312
      %v1314 = vpop.f32.mrf.mxu0
      %1315 = vmatprep.mubr.f32.mxu0 0.0
      %1316 = vmatmul.mubr.f32.gmra.mxu0 %v1231
      %v1317 = vpop.f32.mrf.mxu0
      %v1318 = vadd.f32 1e-05, %v1317
      %v1319 = vpop.f32.mrf.mxu0
      %1320 = vmatprep.mubr.f32.mxu0 0.0
      %1321 = vmatmul.mubr.f32.gmra.mxu0 %v1232
      %v1322 = vpop.f32.mrf.mxu0
      %v1323 = vadd.f32 1e-05, %v1322
      %v1324 = vpop.f32.mrf.mxu0
      %1325 = vmatprep.mubr.f32.mxu0 0.0
      %1326 = vmatmul.mubr.f32.gmra.mxu0 %v1233
      %v1327 = vpop.f32.mrf.mxu0
      %v1328 = vadd.f32 1e-05, %v1327
      %v1329 = vpop.f32.mrf.mxu0
      %1330 = vmatprep.mubr.f32.mxu0 0.0
      %1331 = vmatmul.mubr.f32.gmra.mxu0 %v1234
      %v1332 = vpop.f32.mrf.mxu0
      %v1333 = vadd.f32 1e-05, %v1332
      %v1334 = vpop.f32.mrf.mxu0
      %1335 = vmatprep.mubr.f32.mxu0 0.0
      %1336 = vmatmul.mubr.f32.gmra.mxu0 %v1235
      %v1337 = vpop.f32.mrf.mxu0
      %v1338 = vadd.f32 1e-05, %v1337
      %v1339 = vpop.f32.mrf.mxu0
      %1340 = vdwg.mxu0
      %v1341 = vrsqrt.pop %v1303
      %v1342 = vrsqrt.pop %v1308
      %v1343 = vrsqrt.pop %v1313
      %v1344 = vrsqrt.pop %v1318
      %v1345 = vrsqrt.pop %v1323
      %v1346 = vrsqrt.pop %v1328
      %v1347 = vrsqrt.pop %v1333
      %v1348 = vrsqrt.pop %v1338
      %v1349 = vmul.f32 %v1220, %v1341
      %v1350 = vmul.f32 %v1221, %v1342
      %v1351 = vmul.f32 %v1222, %v1343
      %v1352 = vmul.f32 %v1223, %v1344
      %v1353 = vmul.f32 %v1224, %v1345
      %v1354 = vmul.f32 %v1225, %v1346
      %v1355 = vmul.f32 %v1226, %v1347
      %v1356 = vmul.f32 %v1227, %v1348
      %v1357 = vld [vmem:[%s3] sm:$0x1]
      %v1359 = vlaneseq
      %v1360 = vshrl.u32 %v1359, 7
      %v1361 = vsub.s32 0, %v1360
      %v1362 = vrot.slane %v1357, %v1361
      %v1364 = vmul.f32 %v1349, %v1362
      %v1365 = vmul.f32 %v1350, %v1362
      %v1366 = vmul.f32 %v1351, %v1362
      %v1367 = vmul.f32 %v1352, %v1362
      %v1368 = vmul.f32 %v1353, %v1362
      %v1369 = vmul.f32 %v1354, %v1362
      %v1370 = vmul.f32 %v1355, %v1362
      %v1371 = vmul.f32 %v1356, %v1362
      %v1372 = vld [vmem:[%s4] sm:$0x1]
      %v1374 = vlaneseq
      %v1375 = vshrl.u32 %v1374, 7
      %v1376 = vsub.s32 0, %v1375
      %v1377 = vrot.slane %v1372, %v1376
      %v1379 = vadd.f32 %v1364, %v1377
      %v1380 = vadd.f32 %v1365, %v1377
      %v1381 = vadd.f32 %v1366, %v1377
      %v1382 = vadd.f32 %v1367, %v1377
      %v1383 = vadd.f32 %v1368, %v1377
      %v1384 = vadd.f32 %v1369, %v1377
      %v1385 = vadd.f32 %v1370, %v1377
      %v1386 = vadd.f32 %v1371, %v1377
      %v1387 = vld [vmem:[%s5] sm:$0xff]
      %v1388 = vld [vmem:[%s5 + $0x8] sm:$0xff]
      %v1389 = vld [vmem:[%s5 + $0x10] sm:$0xff]
      %v1390 = vld [vmem:[%s5 + $0x18] sm:$0xff]
      %v1391 = vld [vmem:[%s5 + $0x20] sm:$0xff]
      %v1392 = vld [vmem:[%s5 + $0x28] sm:$0xff]
      %v1393 = vld [vmem:[%s5 + $0x30] sm:$0xff]
      %v1394 = vld [vmem:[%s5 + $0x38] sm:$0xff]
      %v1395 = vld [vmem:[%s5 + $0x40] sm:$0xff]
      %v1396 = vld [vmem:[%s5 + $0x48] sm:$0xff]
      %v1397 = vld [vmem:[%s5 + $0x50] sm:$0xff]
      %v1398 = vld [vmem:[%s5 + $0x58] sm:$0xff]
      %v1399 = vld [vmem:[%s5 + $0x60] sm:$0xff]
      %v1400 = vld [vmem:[%s5 + $0x68] sm:$0xff]
      %v1401 = vld [vmem:[%s5 + $0x70] sm:$0xff]
      %v1402 = vld [vmem:[%s5 + $0x78] sm:$0xff]
      %v1403 = vpack.c.bf16 %v1380, %v1379
      %v1404 = vpack.c.bf16 %v1382, %v1381
      %v1405 = vpack.c.bf16 %v1384, %v1383
      %v1406 = vpack.c.bf16 %v1386, %v1385
      %v1407 = vld [vmem:[%s6] sm:$0x3]
      %v1409 = vlaneseq
      %v1410 = vshrl.u32 %v1409, 7
      %v1411 = vsub.s32 0, %v1410
      %v1412 = vrot.slane %v1407, %v1411
      %v1413 = vlaneseq
      %v1414 = vshrl.u32 %v1413, 7
      %v1415 = vsub.s32 1, %v1414
      %v1416 = vrot.slane %v1407, %v1415
      %v1435 = vunpack.c.l.b16 %v1387
      %v1436 = vunpack.c.h.b16 %v1387
      %v1437 = vunpack.c.l.b16 %v1388
      %v1438 = vunpack.c.h.b16 %v1388
      %v1439 = vunpack.c.l.b16 %v1389
      %v1440 = vunpack.c.h.b16 %v1389
      %v1441 = vunpack.c.l.b16 %v1390
      %v1442 = vunpack.c.h.b16 %v1390
      %v1443 = vunpack.c.l.b16 %v1391
      %v1444 = vunpack.c.h.b16 %v1391
      %v1445 = vunpack.c.l.b16 %v1392
      %v1446 = vunpack.c.h.b16 %v1392
      %v1447 = vunpack.c.l.b16 %v1393
      %v1448 = vunpack.c.h.b16 %v1393
      %v1449 = vunpack.c.l.b16 %v1394
      %v1450 = vunpack.c.h.b16 %v1394
      %v1451 = vunpack.c.l.b16 %v1395
      %v1452 = vunpack.c.h.b16 %v1395
      %v1453 = vunpack.c.l.b16 %v1396
      %v1454 = vunpack.c.h.b16 %v1396
      %v1455 = vunpack.c.l.b16 %v1397
      %v1456 = vunpack.c.h.b16 %v1397
      %v1457 = vunpack.c.l.b16 %v1398
      %v1458 = vunpack.c.h.b16 %v1398
      %v1459 = vunpack.c.l.b16 %v1399
      %v1460 = vunpack.c.h.b16 %v1399
      %v1461 = vunpack.c.l.b16 %v1400
      %v1462 = vunpack.c.h.b16 %v1400
      %v1463 = vunpack.c.l.b16 %v1401
      %v1464 = vunpack.c.h.b16 %v1401
      %v1465 = vunpack.c.l.b16 %v1402
      %v1466 = vunpack.c.h.b16 %v1402
      %v1467 = vpack.c.b16 %v1437, %v1435
      %v1468 = vpack.c.b16 %v1438, %v1436
      %v1469 = vpack.c.b16 %v1441, %v1439
      %v1470 = vpack.c.b16 %v1442, %v1440
      %v1471 = vpack.c.b16 %v1445, %v1443
      %v1472 = vpack.c.b16 %v1446, %v1444
      %v1473 = vpack.c.b16 %v1449, %v1447
      %v1474 = vpack.c.b16 %v1450, %v1448
      %v1475 = vpack.c.b16 %v1453, %v1451
      %v1476 = vpack.c.b16 %v1454, %v1452
      %v1477 = vpack.c.b16 %v1457, %v1455
      %v1478 = vpack.c.b16 %v1458, %v1456
      %v1479 = vpack.c.b16 %v1461, %v1459
      %v1480 = vpack.c.b16 %v1462, %v1460
      %v1481 = vpack.c.b16 %v1465, %v1463
      %v1482 = vpack.c.b16 %v1466, %v1464
      %1499 = vmatprep.subr.bf16.mxu0 %v1482
      %1500 = vmatpush1.bf16.msra.mxu0 %v1481
      %1501 = vmatprep.subr.bf16.mxu0 %v1480
      %1502 = vmatpush1.bf16.msra.mxu0 %v1479
      %1503 = vmatprep.subr.bf16.mxu0 %v1478
      %1504 = vmatpush1.bf16.msra.mxu0 %v1477
      %1505 = vmatprep.subr.bf16.mxu0 %v1476
      %1506 = vmatpush1.bf16.msra.mxu0 %v1475
      %1507 = vmatprep.subr.bf16.mxu0 %v1474
      %1508 = vmatpush1.bf16.msra.mxu0 %v1473
      %1509 = vmatprep.subr.bf16.mxu0 %v1472
      %1510 = vmatpush1.bf16.msra.mxu0 %v1471
      %1511 = vmatprep.subr.bf16.mxu0 %v1470
      %1512 = vmatpush1.bf16.msra.mxu0 %v1469
      %1513 = vmatprep.subr.bf16.mxu0 %v1468
      %1514 = vmatpush1.bf16.msra.mxu0 %v1467
      %1515 = vmatprep.subr.bf16.mxu0 0
      %1516 = vmatpush2.bf16.msra.mxu0 0
      %1517 = vmatprep.subr.bf16.mxu0 0
      %1518 = vmatpush2.bf16.msra.mxu0 0
      %1519 = vmatprep.subr.bf16.mxu0 0
      %1520 = vmatpush2.bf16.msra.mxu0 0
      %1521 = vmatprep.subr.bf16.mxu0 0
      %1522 = vmatpush2.bf16.msra.mxu0 0
      %1523 = vmatprep.subr.bf16.mxu0 0
      %1524 = vmatpush2.bf16.msra.mxu0 0
      %1525 = vmatprep.subr.bf16.mxu0 0
      %1526 = vmatpush2.bf16.msra.mxu0 0
      %1527 = vmatprep.subr.bf16.mxu0 0
      %1528 = vmatpush2.bf16.msra.mxu0 0
      %1529 = vmatprep.subr.bf16.mxu0 0
      %1530 = vmatpush2.bf16.msra.mxu0 0
      %1531 = vmatprep.mubr.bf16.mxu0 0
      %1532 = vmatmul.mubr.bf16.gmra.mxu0 %v1403
      %v1533 = vpop.f32.mrf.mxu0
      %v1534 = vadd.f32 %v1412, %v1533
      %v1535 = vpop.f32.mrf.mxu0
      %v1536 = vadd.f32 %v1416, %v1535
      %v1537 = vpop.f32.mrf.mxu0
      %v1538 = vadd.f32 %v1412, %v1537
      %v1539 = vpop.f32.mrf.mxu0
      %v1540 = vadd.f32 %v1416, %v1539
      %1541 = vmatprep.mubr.bf16.mxu0 0
      %1542 = vmatmul.mubr.bf16.gmra.mxu0 %v1404
      %v1543 = vpop.f32.mrf.mxu0
      %v1544 = vadd.f32 %v1412, %v1543
      %v1545 = vpop.f32.mrf.mxu0
      %v1546 = vadd.f32 %v1416, %v1545
      %v1547 = vpop.f32.mrf.mxu0
      %v1548 = vadd.f32 %v1412, %v1547
      %v1549 = vpop.f32.mrf.mxu0
      %v1550 = vadd.f32 %v1416, %v1549
      %1551 = vmatprep.mubr.bf16.mxu0 0
      %1552 = vmatmul.mubr.bf16.gmra.mxu0 %v1405
      %v1553 = vpop.f32.mrf.mxu0
      %v1554 = vadd.f32 %v1412, %v1553
      %v1555 = vpop.f32.mrf.mxu0
      %v1556 = vadd.f32 %v1416, %v1555
      %v1557 = vpop.f32.mrf.mxu0
      %v1558 = vadd.f32 %v1412, %v1557
      %v1559 = vpop.f32.mrf.mxu0
      %v1560 = vadd.f32 %v1416, %v1559
      %1561 = vmatprep.mubr.bf16.mxu0 0
      %1562 = vmatmul.mubr.bf16.gmra.mxu0 %v1406
      %v1563 = vpop.f32.mrf.mxu0
      %v1564 = vadd.f32 %v1412, %v1563
      %v1565 = vpop.f32.mrf.mxu0
      %v1566 = vadd.f32 %v1416, %v1565
      %v1567 = vpop.f32.mrf.mxu0
      %v1568 = vadd.f32 %v1412, %v1567
      %v1569 = vpop.f32.mrf.mxu0
      %v1570 = vadd.f32 %v1416, %v1569
      %1571 = vdwg.mxu0
      %v1572 = vxor.u32 %v1534, 2147483648
      %v1573 = vxor.u32 %v1538, 2147483648
      %v1574 = vxor.u32 %v1544, 2147483648
      %v1575 = vxor.u32 %v1548, 2147483648
      %v1576 = vxor.u32 %v1554, 2147483648
      %v1577 = vxor.u32 %v1558, 2147483648
      %v1578 = vxor.u32 %v1564, 2147483648
      %v1579 = vxor.u32 %v1568, 2147483648
      %v1580 = vmul.f32 %v1572, 1.442695
      %v1581 = vpow.pop %v1580
      %v1582 = vmul.f32 %v1573, 1.442695
      %v1583 = vpow.pop %v1582
      %v1584 = vmul.f32 %v1574, 1.442695
      %v1585 = vpow.pop %v1584
      %v1586 = vmul.f32 %v1575, 1.442695
      %v1587 = vpow.pop %v1586
      %v1588 = vmul.f32 %v1576, 1.442695
      %v1589 = vpow.pop %v1588
      %v1590 = vmul.f32 %v1577, 1.442695
      %v1591 = vpow.pop %v1590
      %v1592 = vmul.f32 %v1578, 1.442695
      %v1593 = vpow.pop %v1592
      %v1594 = vmul.f32 %v1579, 1.442695
      %v1595 = vpow.pop %v1594
      %v1596 = vadd.f32 %v1581, 1.0
      %v1597 = vadd.f32 %v1583, 1.0
      %v1598 = vadd.f32 %v1585, 1.0
      %v1599 = vadd.f32 %v1587, 1.0
      %v1600 = vadd.f32 %v1589, 1.0
      %v1601 = vadd.f32 %v1591, 1.0
      %v1602 = vadd.f32 %v1593, 1.0
      %v1603 = vadd.f32 %v1595, 1.0
      %v1604 = vrcp.pop %v1596
      %v1605 = vmul.f32 1.0, %v1604
      %v1606 = vrcp.pop %v1597
      %v1607 = vmul.f32 1.0, %v1606
      %v1608 = vrcp.pop %v1598
      %v1609 = vmul.f32 1.0, %v1608
      %v1610 = vrcp.pop %v1599
      %v1611 = vmul.f32 1.0, %v1610
      %v1612 = vrcp.pop %v1600
      %v1613 = vmul.f32 1.0, %v1612
      %v1614 = vrcp.pop %v1601
      %v1615 = vmul.f32 1.0, %v1614
      %v1616 = vrcp.pop %v1602
      %v1617 = vmul.f32 1.0, %v1616
      %v1618 = vrcp.pop %v1603
      %v1619 = vmul.f32 1.0, %v1618
      %v1620 = vmul.f32 %v1534, %v1605
      %v1621 = vmul.f32 %v1538, %v1607
      %v1622 = vmul.f32 %v1544, %v1609
      %v1623 = vmul.f32 %v1548, %v1611
      %v1624 = vmul.f32 %v1554, %v1613
      %v1625 = vmul.f32 %v1558, %v1615
      %v1626 = vmul.f32 %v1564, %v1617
      %v1627 = vmul.f32 %v1568, %v1619
      %v1628 = vld [vmem:[%s7] sm:$0xff]
      %v1629 = vld [vmem:[%s7 + $0x8] sm:$0x1]
      %v1630 = vld [vmem:[%s8] sm:$0x1]
      %v1632 = vlaneseq
      %v1633 = vshrl.u32 %v1632, 7
      %v1634 = vsub.s32 0, %v1633
      %v1635 = vrot.slane %v1630, %v1634
      %v1644 = vrot.slane %v1536, 7
      %v1645 = vrot.slane %v1540, 7
      %v1646 = vsel %vm808, %v1644, %v1645
      %v1647 = vrot.slane %v1546, 7
      %v1648 = vsel %vm808, %v1645, %v1647
      %v1649 = vrot.slane %v1550, 7
      %v1650 = vsel %vm808, %v1647, %v1649
      %v1651 = vrot.slane %v1556, 7
      %v1652 = vsel %vm808, %v1649, %v1651
      %v1653 = vrot.slane %v1560, 7
      %v1654 = vsel %vm808, %v1651, %v1653
      %v1655 = vrot.slane %v1566, 7
      %v1656 = vsel %vm808, %v1653, %v1655
      %v1664 = vsel %vm808, 0.0, %v1644
      %v1665 = vmul.f32 %v1664, %v753
      %v1666 = vmul.f32 %v1646, %v754
      %v1667 = vmul.f32 %v1648, %v755
      %v1668 = vmul.f32 %v1650, %v756
      %v1669 = vmul.f32 %v1652, %v757
      %v1670 = vmul.f32 %v1654, %v758
      %v1671 = vmul.f32 %v1656, %v759
      %v1672 = vlaneseq
      %v1673 = vshrl.u32 %v1672, 7
      %v1674 = vsub.s32 0, %v1673
      %v1675 = vrot.slane %v1628, %v1674
      %v1676 = vmul.f32 %v1675, %v830
      %v1677 = vmul.f32 %v1675, %v1665
      %v1678 = vmul.f32 %v1675, %v1666
      %v1679 = vmul.f32 %v1675, %v1667
      %v1680 = vmul.f32 %v1675, %v1668
      %v1681 = vmul.f32 %v1675, %v1669
      %v1682 = vmul.f32 %v1675, %v1670
      %v1683 = vmul.f32 %v1675, %v1671
      %v1684 = vadd.f32 %v1635, %v1676
      %v1685 = vadd.f32 %v1635, %v1677
      %v1686 = vadd.f32 %v1635, %v1678
      %v1687 = vadd.f32 %v1635, %v1679
      %v1688 = vadd.f32 %v1635, %v1680
      %v1689 = vadd.f32 %v1635, %v1681
      %v1690 = vadd.f32 %v1635, %v1682
      %v1691 = vadd.f32 %v1635, %v1683
      %v1692 = vlaneseq
      %v1693 = vshrl.u32 %v1692, 7
      %v1694 = vsub.s32 1, %v1693
      %v1695 = vrot.slane %v1628, %v1694
      %v1696 = vmul.f32 %v1695, 0.0
      %v1697 = vmul.f32 %v1695, %v1536
      %v1698 = vmul.f32 %v1695, %v1540
      %v1699 = vmul.f32 %v1695, %v1546
      %v1700 = vmul.f32 %v1695, %v1550
      %v1701 = vmul.f32 %v1695, %v1556
      %v1702 = vmul.f32 %v1695, %v1560
      %v1703 = vmul.f32 %v1695, %v1566
      %v1704 = vadd.f32 %v1684, %v1696
      %v1705 = vadd.f32 %v1685, %v1697
      %v1706 = vadd.f32 %v1686, %v1698
      %v1707 = vadd.f32 %v1687, %v1699
      %v1708 = vadd.f32 %v1688, %v1700
      %v1709 = vadd.f32 %v1689, %v1701
      %v1710 = vadd.f32 %v1690, %v1702
      %v1711 = vadd.f32 %v1691, %v1703
      %v1713 = vrot.slane %v1536, 1
      %v1714 = vrot.slane %v1540, 1
      %v1715 = vsel %vm879, %v1713, %v1714
      %v1716 = vrot.slane %v1546, 1
      %v1717 = vsel %vm879, %v1714, %v1716
      %v1718 = vrot.slane %v1550, 1
      %v1719 = vsel %vm879, %v1716, %v1718
      %v1720 = vrot.slane %v1556, 1
      %v1721 = vsel %vm879, %v1718, %v1720
      %v1722 = vrot.slane %v1560, 1
      %v1723 = vsel %vm879, %v1720, %v1722
      %v1724 = vrot.slane %v1566, 1
      %v1725 = vsel %vm879, %v1722, %v1724
      %v1726 = vrot.slane %v1570, 1
      %v1727 = vsel %vm879, %v1724, %v1726
      %v1736 = vsel %vm879, 0.0, %v1713
      %v1737 = vmul.f32 %v1736, %v776
      %v1738 = vmul.f32 %v1715, %v777
      %v1739 = vmul.f32 %v1717, %v778
      %v1740 = vmul.f32 %v1719, %v779
      %v1741 = vmul.f32 %v1721, %v780
      %v1742 = vmul.f32 %v1723, %v781
      %v1743 = vmul.f32 %v1725, %v782
      %v1744 = vmul.f32 %v1727, %v783
      %v1745 = vlaneseq
      %v1746 = vshrl.u32 %v1745, 7
      %v1747 = vsub.s32 2, %v1746
      %v1748 = vrot.slane %v1628, %v1747
      %v1749 = vmul.f32 %v1748, %v1737
      %v1750 = vmul.f32 %v1748, %v1738
      %v1751 = vmul.f32 %v1748, %v1739
      %v1752 = vmul.f32 %v1748, %v1740
      %v1753 = vmul.f32 %v1748, %v1741
      %v1754 = vmul.f32 %v1748, %v1742
      %v1755 = vmul.f32 %v1748, %v1743
      %v1756 = vmul.f32 %v1748, %v1744
      %v1757 = vadd.f32 %v1704, %v1749
      %v1758 = vadd.f32 %v1705, %v1750
      %v1759 = vadd.f32 %v1706, %v1751
      %v1760 = vadd.f32 %v1707, %v1752
      %v1761 = vadd.f32 %v1708, %v1753
      %v1762 = vadd.f32 %v1709, %v1754
      %v1763 = vadd.f32 %v1710, %v1755
      %v1764 = vadd.f32 %v1711, %v1756
      %v1765 = vrot.slane %v1570, 7
      %v1766 = vsel %vm808, %v1655, %v1765
      %v1768 = vmul.f32 %v1664, %v752
      %v1769 = vmul.f32 %v1646, %v753
      %v1770 = vmul.f32 %v1648, %v754
      %v1771 = vmul.f32 %v1650, %v755
      %v1772 = vmul.f32 %v1652, %v756
      %v1773 = vmul.f32 %v1654, %v757
      %v1774 = vmul.f32 %v1656, %v758
      %v1775 = vmul.f32 %v1766, %v759
      %v1776 = vlaneseq
      %v1777 = vshrl.u32 %v1776, 7
      %v1778 = vsub.s32 3, %v1777
      %v1779 = vrot.slane %v1628, %v1778
      %v1780 = vmul.f32 %v1779, %v1768
      %v1781 = vmul.f32 %v1779, %v1769
      %v1782 = vmul.f32 %v1779, %v1770
      %v1783 = vmul.f32 %v1779, %v1771
      %v1784 = vmul.f32 %v1779, %v1772
      %v1785 = vmul.f32 %v1779, %v1773
      %v1786 = vmul.f32 %v1779, %v1774
      %v1787 = vmul.f32 %v1779, %v1775
      %v1788 = vadd.f32 %v1757, %v1780
      %v1789 = vadd.f32 %v1758, %v1781
      %v1790 = vadd.f32 %v1759, %v1782
      %v1791 = vadd.f32 %v1760, %v1783
      %v1792 = vadd.f32 %v1761, %v1784
      %v1793 = vadd.f32 %v1762, %v1785
      %v1794 = vadd.f32 %v1763, %v1786
      %v1795 = vadd.f32 %v1764, %v1787
      %v1796 = vlaneseq
      %v1797 = vshrl.u32 %v1796, 7
      %v1798 = vsub.s32 4, %v1797
      %v1799 = vrot.slane %v1628, %v1798
      %v1800 = vmul.f32 %v1799, %v1536
      %v1801 = vmul.f32 %v1799, %v1540
      %v1802 = vmul.f32 %v1799, %v1546
      %v1803 = vmul.f32 %v1799, %v1550
      %v1804 = vmul.f32 %v1799, %v1556
      %v1805 = vmul.f32 %v1799, %v1560
      %v1806 = vmul.f32 %v1799, %v1566
      %v1807 = vmul.f32 %v1799, %v1570
      %v1808 = vadd.f32 %v1788, %v1800
      %v1809 = vadd.f32 %v1789, %v1801
      %v1810 = vadd.f32 %v1790, %v1802
      %v1811 = vadd.f32 %v1791, %v1803
      %v1812 = vadd.f32 %v1792, %v1804
      %v1813 = vadd.f32 %v1793, %v1805
      %v1814 = vadd.f32 %v1794, %v1806
      %v1815 = vadd.f32 %v1795, %v1807
      %v1817 = vsel %vm879, %v1726, 0.0
      %v1818 = vmul.f32 %v1715, %v776
      %v1819 = vmul.f32 %v1717, %v777
      %v1820 = vmul.f32 %v1719, %v778
      %v1821 = vmul.f32 %v1721, %v779
      %v1822 = vmul.f32 %v1723, %v780
      %v1823 = vmul.f32 %v1725, %v781
      %v1824 = vmul.f32 %v1727, %v782
      %v1825 = vmul.f32 %v1817, %v783
      %v1826 = vlaneseq
      %v1827 = vshrl.u32 %v1826, 7
      %v1828 = vsub.s32 5, %v1827
      %v1829 = vrot.slane %v1628, %v1828
      %v1830 = vmul.f32 %v1829, %v1818
      %v1831 = vmul.f32 %v1829, %v1819
      %v1832 = vmul.f32 %v1829, %v1820
      %v1833 = vmul.f32 %v1829, %v1821
      %v1834 = vmul.f32 %v1829, %v1822
      %v1835 = vmul.f32 %v1829, %v1823
      %v1836 = vmul.f32 %v1829, %v1824
      %v1837 = vmul.f32 %v1829, %v1825
      %v1838 = vadd.f32 %v1808, %v1830
      %v1839 = vadd.f32 %v1809, %v1831
      %v1840 = vadd.f32 %v1810, %v1832
      %v1841 = vadd.f32 %v1811, %v1833
      %v1842 = vadd.f32 %v1812, %v1834
      %v1843 = vadd.f32 %v1813, %v1835
      %v1844 = vadd.f32 %v1814, %v1836
      %v1845 = vadd.f32 %v1815, %v1837
      %v1847 = vsel %vm808, %v1765, 0.0
      %v1848 = vmul.f32 %v1646, %v752
      %v1849 = vmul.f32 %v1648, %v753
      %v1850 = vmul.f32 %v1650, %v754
      %v1851 = vmul.f32 %v1652, %v755
      %v1852 = vmul.f32 %v1654, %v756
      %v1853 = vmul.f32 %v1656, %v757
      %v1854 = vmul.f32 %v1766, %v758
      %v1855 = vmul.f32 %v1847, %v759
      %v1856 = vlaneseq
      %v1857 = vshrl.u32 %v1856, 7
      %v1858 = vsub.s32 6, %v1857
      %v1859 = vrot.slane %v1628, %v1858
      %v1860 = vmul.f32 %v1859, %v1848
      %v1861 = vmul.f32 %v1859, %v1849
      %v1862 = vmul.f32 %v1859, %v1850
      %v1863 = vmul.f32 %v1859, %v1851
      %v1864 = vmul.f32 %v1859, %v1852
      %v1865 = vmul.f32 %v1859, %v1853
      %v1866 = vmul.f32 %v1859, %v1854
      %v1867 = vmul.f32 %v1859, %v1855
      %v1868 = vadd.f32 %v1838, %v1860
      %v1869 = vadd.f32 %v1839, %v1861
      %v1870 = vadd.f32 %v1840, %v1862
      %v1871 = vadd.f32 %v1841, %v1863
      %v1872 = vadd.f32 %v1842, %v1864
      %v1873 = vadd.f32 %v1843, %v1865
      %v1874 = vadd.f32 %v1844, %v1866
      %v1875 = vadd.f32 %v1845, %v1867
      %v1876 = vlaneseq
      %v1877 = vshrl.u32 %v1876, 7
      %v1878 = vsub.s32 7, %v1877
      %v1879 = vrot.slane %v1628, %v1878
      %v1880 = vmul.f32 %v1879, %v1540
      %v1881 = vmul.f32 %v1879, %v1546
      %v1882 = vmul.f32 %v1879, %v1550
      %v1883 = vmul.f32 %v1879, %v1556
      %v1884 = vmul.f32 %v1879, %v1560
      %v1885 = vmul.f32 %v1879, %v1566
      %v1886 = vmul.f32 %v1879, %v1570
      %v1887 = vmul.f32 %v1879, 0.0
      %v1888 = vadd.f32 %v1868, %v1880
      %v1889 = vadd.f32 %v1869, %v1881
      %v1890 = vadd.f32 %v1870, %v1882
      %v1891 = vadd.f32 %v1871, %v1883
      %v1892 = vadd.f32 %v1872, %v1884
      %v1893 = vadd.f32 %v1873, %v1885
      %v1894 = vadd.f32 %v1874, %v1886
      %v1895 = vadd.f32 %v1875, %v1887
      %v1896 = vmul.f32 %v1717, %v776
      %v1897 = vmul.f32 %v1719, %v777
      %v1898 = vmul.f32 %v1721, %v778
      %v1899 = vmul.f32 %v1723, %v779
      %v1900 = vmul.f32 %v1725, %v780
      %v1901 = vmul.f32 %v1727, %v781
      %v1902 = vmul.f32 %v1817, %v782
      %v1903 = vlaneseq
      %v1904 = vshrl.u32 %v1903, 7
      %v1905 = vsub.s32 0, %v1904
      %v1906 = vrot.slane %v1629, %v1905
      %v1907 = vmul.f32 %v1906, %v1896
      %v1908 = vmul.f32 %v1906, %v1897
      %v1909 = vmul.f32 %v1906, %v1898
      %v1910 = vmul.f32 %v1906, %v1899
      %v1911 = vmul.f32 %v1906, %v1900
      %v1912 = vmul.f32 %v1906, %v1901
      %v1913 = vmul.f32 %v1906, %v1902
      %v1914 = vmul.f32 %v1906, %v1070
      %v1915 = vadd.f32 %v1888, %v1907
      %v1916 = vadd.f32 %v1889, %v1908
      %v1917 = vadd.f32 %v1890, %v1909
      %v1918 = vadd.f32 %v1891, %v1910
      %v1919 = vadd.f32 %v1892, %v1911
      %v1920 = vadd.f32 %v1893, %v1912
      %v1921 = vadd.f32 %v1894, %v1913
      %v1922 = vadd.f32 %v1895, %v1914
      %v1923 = vxor.u32 %v1915, 2147483648
      %v1924 = vxor.u32 %v1916, 2147483648
      %v1925 = vxor.u32 %v1917, 2147483648
      %v1926 = vxor.u32 %v1918, 2147483648
      %v1927 = vxor.u32 %v1919, 2147483648
      %v1928 = vxor.u32 %v1920, 2147483648
      %v1929 = vxor.u32 %v1921, 2147483648
      %v1930 = vxor.u32 %v1922, 2147483648
      %v1931 = vmul.f32 %v1923, 1.442695
      %v1932 = vpow.pop %v1931
      %v1933 = vmul.f32 %v1924, 1.442695
      %v1934 = vpow.pop %v1933
      %v1935 = vmul.f32 %v1925, 1.442695
      %v1936 = vpow.pop %v1935
      %v1937 = vmul.f32 %v1926, 1.442695
      %v1938 = vpow.pop %v1937
      %v1939 = vmul.f32 %v1927, 1.442695
      %v1940 = vpow.pop %v1939
      %v1941 = vmul.f32 %v1928, 1.442695
      %v1942 = vpow.pop %v1941
      %v1943 = vmul.f32 %v1929, 1.442695
      %v1944 = vpow.pop %v1943
      %v1945 = vmul.f32 %v1930, 1.442695
      %v1946 = vpow.pop %v1945
      %v1947 = vadd.f32 %v1932, 1.0
      %v1948 = vadd.f32 %v1934, 1.0
      %v1949 = vadd.f32 %v1936, 1.0
      %v1950 = vadd.f32 %v1938, 1.0
      %v1951 = vadd.f32 %v1940, 1.0
      %v1952 = vadd.f32 %v1942, 1.0
      %v1953 = vadd.f32 %v1944, 1.0
      %v1954 = vadd.f32 %v1946, 1.0
      %v1955 = vrcp.pop %v1947
      %v1956 = vmul.f32 1.0, %v1955
      %v1957 = vrcp.pop %v1948
      %v1958 = vmul.f32 1.0, %v1957
      %v1959 = vrcp.pop %v1949
      %v1960 = vmul.f32 1.0, %v1959
      %v1961 = vrcp.pop %v1950
      %v1962 = vmul.f32 1.0, %v1961
      %v1963 = vrcp.pop %v1951
      %v1964 = vmul.f32 1.0, %v1963
      %v1965 = vrcp.pop %v1952
      %v1966 = vmul.f32 1.0, %v1965
      %v1967 = vrcp.pop %v1953
      %v1968 = vmul.f32 1.0, %v1967
      %v1969 = vrcp.pop %v1954
      %v1970 = vmul.f32 1.0, %v1969
      %v1971 = vmul.f32 %v1915, %v1956
      %v1972 = vmul.f32 %v1916, %v1958
      %v1973 = vmul.f32 %v1917, %v1960
      %v1974 = vmul.f32 %v1918, %v1962
      %v1975 = vmul.f32 %v1919, %v1964
      %v1976 = vmul.f32 %v1920, %v1966
      %v1977 = vmul.f32 %v1921, %v1968
      %v1978 = vmul.f32 %v1922, %v1970
      %v1979 = vld [vmem:[%s9] sm:$0xff]
      %v1980 = vld [vmem:[%s9 + $0x8] sm:$0xff]
      %v1981 = vld [vmem:[%s9 + $0x10] sm:$0xff]
      %v1982 = vld [vmem:[%s9 + $0x18] sm:$0xff]
      %v1983 = vld [vmem:[%s9 + $0x20] sm:$0xff]
      %v1984 = vld [vmem:[%s9 + $0x28] sm:$0xff]
      %v1985 = vld [vmem:[%s9 + $0x30] sm:$0xff]
      %v1986 = vld [vmem:[%s9 + $0x38] sm:$0xff]
      %v1987 = vld [vmem:[%s9 + $0x40] sm:$0xff]
      %v1988 = vld [vmem:[%s9 + $0x48] sm:$0xff]
      %v1989 = vld [vmem:[%s9 + $0x50] sm:$0xff]
      %v1990 = vld [vmem:[%s9 + $0x58] sm:$0xff]
      %v1991 = vld [vmem:[%s9 + $0x60] sm:$0xff]
      %v1992 = vld [vmem:[%s9 + $0x68] sm:$0xff]
      %v1993 = vld [vmem:[%s9 + $0x70] sm:$0xff]
      %v1994 = vld [vmem:[%s9 + $0x78] sm:$0xff]
      %v1995 = vpack.c.bf16 %v1972, %v1971
      %v1996 = vpack.c.bf16 %v1974, %v1973
      %v1997 = vpack.c.bf16 %v1976, %v1975
      %v1998 = vpack.c.bf16 %v1978, %v1977
      %v1999 = vld [vmem:[%s10] sm:$0x3]
      %v2001 = vlaneseq
      %v2002 = vshrl.u32 %v2001, 7
      %v2003 = vsub.s32 0, %v2002
      %v2004 = vrot.slane %v1999, %v2003
      %v2005 = vlaneseq
      %v2006 = vshrl.u32 %v2005, 7
      %v2007 = vsub.s32 1, %v2006
      %v2008 = vrot.slane %v1999, %v2007
      %v2027 = vunpack.c.l.b16 %v1979
      %v2028 = vunpack.c.h.b16 %v1979
      %v2029 = vunpack.c.l.b16 %v1980
      %v2030 = vunpack.c.h.b16 %v1980
      %v2031 = vunpack.c.l.b16 %v1981
      %v2032 = vunpack.c.h.b16 %v1981
      %v2033 = vunpack.c.l.b16 %v1982
      %v2034 = vunpack.c.h.b16 %v1982
      %v2035 = vunpack.c.l.b16 %v1983
      %v2036 = vunpack.c.h.b16 %v1983
      %v2037 = vunpack.c.l.b16 %v1984
      %v2038 = vunpack.c.h.b16 %v1984
      %v2039 = vunpack.c.l.b16 %v1985
      %v2040 = vunpack.c.h.b16 %v1985
      %v2041 = vunpack.c.l.b16 %v1986
      %v2042 = vunpack.c.h.b16 %v1986
      %v2043 = vunpack.c.l.b16 %v1987
      %v2044 = vunpack.c.h.b16 %v1987
      %v2045 = vunpack.c.l.b16 %v1988
      %v2046 = vunpack.c.h.b16 %v1988
      %v2047 = vunpack.c.l.b16 %v1989
      %v2048 = vunpack.c.h.b16 %v1989
      %v2049 = vunpack.c.l.b16 %v1990
      %v2050 = vunpack.c.h.b16 %v1990
      %v2051 = vunpack.c.l.b16 %v1991
      %v2052 = vunpack.c.h.b16 %v1991
      %v2053 = vunpack.c.l.b16 %v1992
      %v2054 = vunpack.c.h.b16 %v1992
      %v2055 = vunpack.c.l.b16 %v1993
      %v2056 = vunpack.c.h.b16 %v1993
      %v2057 = vunpack.c.l.b16 %v1994
      %v2058 = vunpack.c.h.b16 %v1994
      %v2059 = vpack.c.b16 %v2029, %v2027
      %v2060 = vpack.c.b16 %v2030, %v2028
      %v2061 = vpack.c.b16 %v2033, %v2031
      %v2062 = vpack.c.b16 %v2034, %v2032
      %v2063 = vpack.c.b16 %v2037, %v2035
      %v2064 = vpack.c.b16 %v2038, %v2036
      %v2065 = vpack.c.b16 %v2041, %v2039
      %v2066 = vpack.c.b16 %v2042, %v2040
      %v2067 = vpack.c.b16 %v2045, %v2043
      %v2068 = vpack.c.b16 %v2046, %v2044
      %v2069 = vpack.c.b16 %v2049, %v2047
      %v2070 = vpack.c.b16 %v2050, %v2048
      %v2071 = vpack.c.b16 %v2053, %v2051
      %v2072 = vpack.c.b16 %v2054, %v2052
      %v2073 = vpack.c.b16 %v2057, %v2055
      %v2074 = vpack.c.b16 %v2058, %v2056
      %2091 = vmatprep.subr.bf16.mxu0 %v2074
      %2092 = vmatpush1.bf16.msra.mxu0 %v2073
      %2093 = vmatprep.subr.bf16.mxu0 %v2072
      %2094 = vmatpush1.bf16.msra.mxu0 %v2071
      %2095 = vmatprep.subr.bf16.mxu0 %v2070
      %2096 = vmatpush1.bf16.msra.mxu0 %v2069
      %2097 = vmatprep.subr.bf16.mxu0 %v2068
      %2098 = vmatpush1.bf16.msra.mxu0 %v2067
      %2099 = vmatprep.subr.bf16.mxu0 %v2066
      %2100 = vmatpush1.bf16.msra.mxu0 %v2065
      %2101 = vmatprep.subr.bf16.mxu0 %v2064
      %2102 = vmatpush1.bf16.msra.mxu0 %v2063
      %2103 = vmatprep.subr.bf16.mxu0 %v2062
      %2104 = vmatpush1.bf16.msra.mxu0 %v2061
      %2105 = vmatprep.subr.bf16.mxu0 %v2060
      %2106 = vmatpush1.bf16.msra.mxu0 %v2059
      %2107 = vmatprep.subr.bf16.mxu0 0
      %2108 = vmatpush2.bf16.msra.mxu0 0
      %2109 = vmatprep.subr.bf16.mxu0 0
      %2110 = vmatpush2.bf16.msra.mxu0 0
      %2111 = vmatprep.subr.bf16.mxu0 0
      %2112 = vmatpush2.bf16.msra.mxu0 0
      %2113 = vmatprep.subr.bf16.mxu0 0
      %2114 = vmatpush2.bf16.msra.mxu0 0
      %2115 = vmatprep.subr.bf16.mxu0 0
      %2116 = vmatpush2.bf16.msra.mxu0 0
      %2117 = vmatprep.subr.bf16.mxu0 0
      %2118 = vmatpush2.bf16.msra.mxu0 0
      %2119 = vmatprep.subr.bf16.mxu0 0
      %2120 = vmatpush2.bf16.msra.mxu0 0
      %2121 = vmatprep.subr.bf16.mxu0 0
      %2122 = vmatpush2.bf16.msra.mxu0 0
      %2123 = vmatprep.mubr.bf16.mxu0 0
      %2124 = vmatmul.mubr.bf16.gmra.mxu0 %v1995
      %v2125 = vpop.f32.mrf.mxu0
      %v2126 = vadd.f32 %v2004, %v2125
      %v2127 = vpop.f32.mrf.mxu0
      %v2128 = vadd.f32 %v2008, %v2127
      %v2129 = vpop.f32.mrf.mxu0
      %v2130 = vadd.f32 %v2004, %v2129
      %v2131 = vpop.f32.mrf.mxu0
      %v2132 = vadd.f32 %v2008, %v2131
      %2133 = vmatprep.mubr.bf16.mxu0 0
      %2134 = vmatmul.mubr.bf16.gmra.mxu0 %v1996
      %v2135 = vpop.f32.mrf.mxu0
      %v2136 = vadd.f32 %v2004, %v2135
      %v2137 = vpop.f32.mrf.mxu0
      %v2138 = vadd.f32 %v2008, %v2137
      %v2139 = vpop.f32.mrf.mxu0
      %v2140 = vadd.f32 %v2004, %v2139
      %v2141 = vpop.f32.mrf.mxu0
      %v2142 = vadd.f32 %v2008, %v2141
      %2143 = vmatprep.mubr.bf16.mxu0 0
      %2144 = vmatmul.mubr.bf16.gmra.mxu0 %v1997
      %v2145 = vpop.f32.mrf.mxu0
      %v2146 = vadd.f32 %v2004, %v2145
      %v2147 = vpop.f32.mrf.mxu0
      %v2148 = vadd.f32 %v2008, %v2147
      %v2149 = vpop.f32.mrf.mxu0
      %v2150 = vadd.f32 %v2004, %v2149
      %v2151 = vpop.f32.mrf.mxu0
      %v2152 = vadd.f32 %v2008, %v2151
      %2153 = vmatprep.mubr.bf16.mxu0 0
      %2154 = vmatmul.mubr.bf16.gmra.mxu0 %v1998
      %v2155 = vpop.f32.mrf.mxu0
      %v2156 = vadd.f32 %v2004, %v2155
      %v2157 = vpop.f32.mrf.mxu0
      %v2158 = vadd.f32 %v2008, %v2157
      %v2159 = vpop.f32.mrf.mxu0
      %v2160 = vadd.f32 %v2004, %v2159
      %v2161 = vpop.f32.mrf.mxu0
      %v2162 = vadd.f32 %v2008, %v2161
      %2163 = vdwg.mxu0
      %vm2164 = vcmp.gt.f32.partialorder %v2126, 0.0
      %vm2165 = vcmp.gt.f32.partialorder %v2130, 0.0
      %vm2166 = vcmp.gt.f32.partialorder %v2136, 0.0
      %vm2167 = vcmp.gt.f32.partialorder %v2140, 0.0
      %vm2168 = vcmp.gt.f32.partialorder %v2146, 0.0
      %vm2169 = vcmp.gt.f32.partialorder %v2150, 0.0
      %vm2170 = vcmp.gt.f32.partialorder %v2156, 0.0
      %vm2171 = vcmp.gt.f32.partialorder %v2160, 0.0
      %v2172 = vadd.f32 %v2126, 1.0
      %v2173 = vadd.f32 %v2130, 1.0
      %v2174 = vadd.f32 %v2136, 1.0
      %v2175 = vadd.f32 %v2140, 1.0
      %v2176 = vadd.f32 %v2146, 1.0
      %v2177 = vadd.f32 %v2150, 1.0
      %v2178 = vadd.f32 %v2156, 1.0
      %v2179 = vadd.f32 %v2160, 1.0
      %v2180 = vmin.f32 %v2126, 0.0
      %v2181 = vmin.f32 %v2130, 0.0
      %v2182 = vmin.f32 %v2136, 0.0
      %v2183 = vmin.f32 %v2140, 0.0
      %v2184 = vmin.f32 %v2146, 0.0
      %v2185 = vmin.f32 %v2150, 0.0
      %v2186 = vmin.f32 %v2156, 0.0
      %v2187 = vmin.f32 %v2160, 0.0
      %v2188 = vmul.f32 %v2180, 1.442695
      %v2189 = vpow.pop %v2188
      %v2190 = vmul.f32 %v2181, 1.442695
      %v2191 = vpow.pop %v2190
      %v2192 = vmul.f32 %v2182, 1.442695
      %v2193 = vpow.pop %v2192
      %v2194 = vmul.f32 %v2183, 1.442695
      %v2195 = vpow.pop %v2194
      %v2196 = vmul.f32 %v2184, 1.442695
      %v2197 = vpow.pop %v2196
      %v2198 = vmul.f32 %v2185, 1.442695
      %v2199 = vpow.pop %v2198
      %v2200 = vmul.f32 %v2186, 1.442695
      %v2201 = vpow.pop %v2200
      %v2202 = vmul.f32 %v2187, 1.442695
      %v2203 = vpow.pop %v2202
      %v2204 = vsel %vm2164, %v2172, %v2189
      %v2205 = vsel %vm2165, %v2173, %v2191
      %v2206 = vsel %vm2166, %v2174, %v2193
      %v2207 = vsel %vm2167, %v2175, %v2195
      %v2208 = vsel %vm2168, %v2176, %v2197
      %v2209 = vsel %vm2169, %v2177, %v2199
      %v2210 = vsel %vm2170, %v2178, %v2201
      %v2211 = vsel %vm2171, %v2179, %v2203
      %vm2212 = vcmp.gt.f32.partialorder %v2128, 0.0
      %vm2213 = vcmp.gt.f32.partialorder %v2132, 0.0
      %vm2214 = vcmp.gt.f32.partialorder %v2138, 0.0
      %vm2215 = vcmp.gt.f32.partialorder %v2142, 0.0
      %vm2216 = vcmp.gt.f32.partialorder %v2148, 0.0
      %vm2217 = vcmp.gt.f32.partialorder %v2152, 0.0
      %vm2218 = vcmp.gt.f32.partialorder %v2158, 0.0
      %vm2219 = vcmp.gt.f32.partialorder %v2162, 0.0
      %v2220 = vadd.f32 %v2128, 1.0
      %v2221 = vadd.f32 %v2132, 1.0
      %v2222 = vadd.f32 %v2138, 1.0
      %v2223 = vadd.f32 %v2142, 1.0
      %v2224 = vadd.f32 %v2148, 1.0
      %v2225 = vadd.f32 %v2152, 1.0
      %v2226 = vadd.f32 %v2158, 1.0
      %v2227 = vadd.f32 %v2162, 1.0
      %v2228 = vmin.f32 %v2128, 0.0
      %v2229 = vmin.f32 %v2132, 0.0
      %v2230 = vmin.f32 %v2138, 0.0
      %v2231 = vmin.f32 %v2142, 0.0
      %v2232 = vmin.f32 %v2148, 0.0
      %v2233 = vmin.f32 %v2152, 0.0
      %v2234 = vmin.f32 %v2158, 0.0
      %v2235 = vmin.f32 %v2162, 0.0
      %v2236 = vmul.f32 %v2228, 1.442695
      %v2237 = vpow.pop %v2236
      %v2238 = vmul.f32 %v2229, 1.442695
      %v2239 = vpow.pop %v2238
      %v2240 = vmul.f32 %v2230, 1.442695
      %v2241 = vpow.pop %v2240
      %v2242 = vmul.f32 %v2231, 1.442695
      %v2243 = vpow.pop %v2242
      %v2244 = vmul.f32 %v2232, 1.442695
      %v2245 = vpow.pop %v2244
      %v2246 = vmul.f32 %v2233, 1.442695
      %v2247 = vpow.pop %v2246
      %v2248 = vmul.f32 %v2234, 1.442695
      %v2249 = vpow.pop %v2248
      %v2250 = vmul.f32 %v2235, 1.442695
      %v2251 = vpow.pop %v2250
      %v2252 = vsel %vm2212, %v2220, %v2237
      %v2253 = vsel %vm2213, %v2221, %v2239
      %v2254 = vsel %vm2214, %v2222, %v2241
      %v2255 = vsel %vm2215, %v2223, %v2243
      %v2256 = vsel %vm2216, %v2224, %v2245
      %v2257 = vsel %vm2217, %v2225, %v2247
      %v2258 = vsel %vm2218, %v2226, %v2249
      %v2259 = vsel %vm2219, %v2227, %v2251
      %v2260 = vld [vmem:[%s15] sm:$0xff]
      %v2261 = vld [vmem:[%s15 + $0x8] sm:$0xff]
      %v2262 = vld [vmem:[%s15 + $0x10] sm:$0xff]
      %v2263 = vld [vmem:[%s15 + $0x18] sm:$0xff]
      %v2264 = vld [vmem:[%s15 + $0x20] sm:$0xff]
      %v2265 = vld [vmem:[%s15 + $0x28] sm:$0xff]
      %v2266 = vld [vmem:[%s15 + $0x30] sm:$0xff]
      %v2267 = vld [vmem:[%s15 + $0x38] sm:$0xff]
      %v2268 = vld [vmem:[%s16] sm:$0xff]
      %v2269 = vld [vmem:[%s16 + $0x8] sm:$0xff]
      %v2270 = vld [vmem:[%s16 + $0x10] sm:$0xff]
      %v2271 = vld [vmem:[%s16 + $0x18] sm:$0xff]
      %v2272 = vld [vmem:[%s16 + $0x20] sm:$0xff]
      %v2273 = vld [vmem:[%s16 + $0x28] sm:$0xff]
      %v2274 = vld [vmem:[%s16 + $0x30] sm:$0xff]
      %v2275 = vld [vmem:[%s16 + $0x38] sm:$0xff]
      %v2276 = vld [vmem:[%s17] sm:$0xf]
      %v2277 = vld [vmem:[%s17 + $0x4] sm:$0xf]
      %v2278 = vld [vmem:[%s17 + $0x8] sm:$0xf]
      %v2279 = vld [vmem:[%s17 + $0xc] sm:$0xf]
      %v2280 = vld [vmem:[%s17 + $0x10] sm:$0xf]
      %v2281 = vld [vmem:[%s17 + $0x14] sm:$0xf]
      %v2282 = vld [vmem:[%s17 + $0x18] sm:$0xf]
      %v2283 = vld [vmem:[%s17 + $0x1c] sm:$0xf]
      %v2284 = vld [vmem:[%s17 + $0x20] sm:$0xf]
      %v2285 = vld [vmem:[%s17 + $0x24] sm:$0xf]
      %v2286 = vld [vmem:[%s17 + $0x28] sm:$0xf]
      %v2287 = vld [vmem:[%s17 + $0x2c] sm:$0xf]
      %v2288 = vld [vmem:[%s17 + $0x30] sm:$0xf]
      %v2289 = vld [vmem:[%s17 + $0x34] sm:$0xf]
      %v2290 = vld [vmem:[%s17 + $0x38] sm:$0xf]
      %v2291 = vld [vmem:[%s17 + $0x3c] sm:$0xf]
      %v2292 = vpack.c.bf16 %v2205, %v2204
      %v2293 = vpack.c.bf16 %v2207, %v2206
      %v2294 = vpack.c.bf16 %v2209, %v2208
      %v2295 = vpack.c.bf16 %v2211, %v2210
      %v2296 = vpack.c.bf16 %v2253, %v2252
      %v2297 = vpack.c.bf16 %v2255, %v2254
      %v2298 = vpack.c.bf16 %v2257, %v2256
      %v2299 = vpack.c.bf16 %v2259, %v2258
      %v2316 = vunpack.c.l.b16 %v2276
      %v2317 = vunpack.c.l.b16 %v2277
      %v2318 = vunpack.c.l.b16 %v2278
      %v2319 = vunpack.c.l.b16 %v2279
      %v2320 = vunpack.c.l.b16 %v2280
      %v2321 = vunpack.c.l.b16 %v2281
      %v2322 = vunpack.c.l.b16 %v2282
      %v2323 = vunpack.c.l.b16 %v2283
      %v2324 = vunpack.c.l.b16 %v2284
      %v2325 = vunpack.c.l.b16 %v2285
      %v2326 = vunpack.c.l.b16 %v2286
      %v2327 = vunpack.c.l.b16 %v2287
      %v2328 = vunpack.c.l.b16 %v2288
      %v2329 = vunpack.c.l.b16 %v2289
      %v2330 = vunpack.c.l.b16 %v2290
      %v2331 = vunpack.c.l.b16 %v2291
      %v2332 = vpack.c.b16 %v2317, %v2316
      %v2333 = vpack.c.b16 %v2319, %v2318
      %v2334 = vpack.c.b16 %v2321, %v2320
      %v2335 = vpack.c.b16 %v2323, %v2322
      %v2336 = vpack.c.b16 %v2325, %v2324
      %v2337 = vpack.c.b16 %v2327, %v2326
      %v2338 = vpack.c.b16 %v2329, %v2328
      %v2339 = vpack.c.b16 %v2331, %v2330
      %2348 = vmatprep.subr.bf16.mxu0 0
      %2349 = vmatpush1.bf16.msra.mxu0 %v2339
      %2350 = vmatprep.subr.bf16.mxu0 0
      %2351 = vmatpush1.bf16.msra.mxu0 %v2338
      %2352 = vmatprep.subr.bf16.mxu0 0
      %2353 = vmatpush1.bf16.msra.mxu0 %v2337
      %2354 = vmatprep.subr.bf16.mxu0 0
      %2355 = vmatpush1.bf16.msra.mxu0 %v2336
      %2356 = vmatprep.subr.bf16.mxu0 0
      %2357 = vmatpush1.bf16.msra.mxu0 %v2335
      %2358 = vmatprep.subr.bf16.mxu0 0
      %2359 = vmatpush1.bf16.msra.mxu0 %v2334
      %2360 = vmatprep.subr.bf16.mxu0 0
      %2361 = vmatpush1.bf16.msra.mxu0 %v2333
      %2362 = vmatprep.subr.bf16.mxu0 0
      %2363 = vmatpush1.bf16.msra.mxu0 %v2332
      %2364 = vmatprep.subr.bf16.mxu0 0
      %2365 = vmatpush2.bf16.msra.mxu0 0
      %2366 = vmatprep.subr.bf16.mxu0 0
      %2367 = vmatpush2.bf16.msra.mxu0 0
      %2368 = vmatprep.subr.bf16.mxu0 0
      %2369 = vmatpush2.bf16.msra.mxu0 0
      %2370 = vmatprep.subr.bf16.mxu0 0
      %2371 = vmatpush2.bf16.msra.mxu0 0
      %2372 = vmatprep.subr.bf16.mxu0 0
      %2373 = vmatpush2.bf16.msra.mxu0 0
      %2374 = vmatprep.subr.bf16.mxu0 0
      %2375 = vmatpush2.bf16.msra.mxu0 0
      %2376 = vmatprep.subr.bf16.mxu0 0
      %2377 = vmatpush2.bf16.msra.mxu0 0
      %2378 = vmatprep.subr.bf16.mxu0 0
      %2379 = vmatpush2.bf16.msra.mxu0 0
      %2380 = vmatprep.mubr.bf16.mxu0 0
      %2381 = vmatmul.mubr.bf16.gmra.mxu0 %v2292
      %v2382 = vpop.f32.mrf.mxu0
      %v2383 = vadd.f32 0.0, %v2382
      %v2384 = vpop.f32.mrf.mxu0
      %v2385 = vpop.f32.mrf.mxu0
      %v2386 = vadd.f32 0.0, %v2385
      %v2387 = vpop.f32.mrf.mxu0
      %2388 = vmatprep.mubr.bf16.mxu0 0
      %2389 = vmatmul.mubr.bf16.gmra.mxu0 %v2293
      %v2390 = vpop.f32.mrf.mxu0
      %v2391 = vadd.f32 0.0, %v2390
      %v2392 = vpop.f32.mrf.mxu0
      %v2393 = vpop.f32.mrf.mxu0
      %v2394 = vadd.f32 0.0, %v2393
      %v2395 = vpop.f32.mrf.mxu0
      %2396 = vmatprep.mubr.bf16.mxu0 0
      %2397 = vmatmul.mubr.bf16.gmra.mxu0 %v2294
      %v2398 = vpop.f32.mrf.mxu0
      %v2399 = vadd.f32 0.0, %v2398
      %v2400 = vpop.f32.mrf.mxu0
      %v2401 = vpop.f32.mrf.mxu0
      %v2402 = vadd.f32 0.0, %v2401
      %v2403 = vpop.f32.mrf.mxu0
      %2404 = vmatprep.mubr.bf16.mxu0 0
      %2405 = vmatmul.mubr.bf16.gmra.mxu0 %v2295
      %v2406 = vpop.f32.mrf.mxu0
      %v2407 = vadd.f32 0.0, %v2406
      %v2408 = vpop.f32.mrf.mxu0
      %v2409 = vpop.f32.mrf.mxu0
      %v2410 = vadd.f32 0.0, %v2409
      %v2411 = vpop.f32.mrf.mxu0
      %2412 = vmatprep.mubr.bf16.mxu0 0
      %2413 = vmatmul.mubr.bf16.gmra.mxu0 %v2296
      %v2414 = vpop.f32.mrf.mxu0
      %v2415 = vadd.f32 0.0, %v2414
      %v2416 = vpop.f32.mrf.mxu0
      %v2417 = vpop.f32.mrf.mxu0
      %v2418 = vadd.f32 0.0, %v2417
      %v2419 = vpop.f32.mrf.mxu0
      %2420 = vmatprep.mubr.bf16.mxu0 0
      %2421 = vmatmul.mubr.bf16.gmra.mxu0 %v2297
      %v2422 = vpop.f32.mrf.mxu0
      %v2423 = vadd.f32 0.0, %v2422
      %v2424 = vpop.f32.mrf.mxu0
      %v2425 = vpop.f32.mrf.mxu0
      %v2426 = vadd.f32 0.0, %v2425
      %v2427 = vpop.f32.mrf.mxu0
      %2428 = vmatprep.mubr.bf16.mxu0 0
      %2429 = vmatmul.mubr.bf16.gmra.mxu0 %v2298
      %v2430 = vpop.f32.mrf.mxu0
      %v2431 = vadd.f32 0.0, %v2430
      %v2432 = vpop.f32.mrf.mxu0
      %v2433 = vpop.f32.mrf.mxu0
      %v2434 = vadd.f32 0.0, %v2433
      %v2435 = vpop.f32.mrf.mxu0
      %2436 = vmatprep.mubr.bf16.mxu0 0
      %2437 = vmatmul.mubr.bf16.gmra.mxu0 %v2299
      %v2438 = vpop.f32.mrf.mxu0
      %v2439 = vadd.f32 0.0, %v2438
      %v2440 = vpop.f32.mrf.mxu0
      %v2441 = vpop.f32.mrf.mxu0
      %v2442 = vadd.f32 0.0, %v2441
      %v2443 = vpop.f32.mrf.mxu0
      %2444 = vdwg.mxu0
      %v2445 = vmul.f32 %v2260, %v2204
      %v2446 = vmul.f32 %v2261, %v2205
      %v2447 = vmul.f32 %v2262, %v2206
      %v2448 = vmul.f32 %v2263, %v2207
      %v2449 = vmul.f32 %v2264, %v2208
      %v2450 = vmul.f32 %v2265, %v2209
      %v2451 = vmul.f32 %v2266, %v2210
      %v2452 = vmul.f32 %v2267, %v2211
      %v2453 = vmul.f32 %v2268, %v2383
      %v2454 = vmul.f32 %v2269, %v2386
      %v2455 = vmul.f32 %v2270, %v2391
      %v2456 = vmul.f32 %v2271, %v2394
      %v2457 = vmul.f32 %v2272, %v2399
      %v2458 = vmul.f32 %v2273, %v2402
      %v2459 = vmul.f32 %v2274, %v2407
      %v2460 = vmul.f32 %v2275, %v2410
      %v2461 = vadd.f32 %v2445, %v2453
      %v2462 = vadd.f32 %v2446, %v2454
      %v2463 = vadd.f32 %v2447, %v2455
      %v2464 = vadd.f32 %v2448, %v2456
      %v2465 = vadd.f32 %v2449, %v2457
      %v2466 = vadd.f32 %v2450, %v2458
      %v2467 = vadd.f32 %v2451, %v2459
      %v2468 = vadd.f32 %v2452, %v2460
      %v2469 = vmul.f32 %v2260, %v2252
      %v2470 = vmul.f32 %v2261, %v2253
      %v2471 = vmul.f32 %v2262, %v2254
      %v2472 = vmul.f32 %v2263, %v2255
      %v2473 = vmul.f32 %v2264, %v2256
      %v2474 = vmul.f32 %v2265, %v2257
      %v2475 = vmul.f32 %v2266, %v2258
      %v2476 = vmul.f32 %v2267, %v2259
      %v2477 = vmul.f32 %v2268, %v2415
      %v2478 = vmul.f32 %v2269, %v2418
      %v2479 = vmul.f32 %v2270, %v2423
      %v2480 = vmul.f32 %v2271, %v2426
      %v2481 = vmul.f32 %v2272, %v2431
      %v2482 = vmul.f32 %v2273, %v2434
      %v2483 = vmul.f32 %v2274, %v2439
      %v2484 = vmul.f32 %v2275, %v2442
      %v2485 = vadd.f32 %v2469, %v2477
      %v2486 = vadd.f32 %v2470, %v2478
      %v2487 = vadd.f32 %v2471, %v2479
      %v2488 = vadd.f32 %v2472, %v2480
      %v2489 = vadd.f32 %v2473, %v2481
      %v2490 = vadd.f32 %v2474, %v2482
      %v2491 = vadd.f32 %v2475, %v2483
      %v2492 = vadd.f32 %v2476, %v2484
      %v2493 = vld [vmem:[%s18] sm:$0xff]
      %v2494 = vld [vmem:[%s18 + $0x8] sm:$0xff]
      %v2495 = vld [vmem:[%s18 + $0x10] sm:$0xff]
      %v2496 = vld [vmem:[%s18 + $0x18] sm:$0xff]
      %v2497 = vld [vmem:[%s18 + $0x20] sm:$0xff]
      %v2498 = vld [vmem:[%s18 + $0x28] sm:$0xff]
      %v2499 = vld [vmem:[%s18 + $0x30] sm:$0xff]
      %v2500 = vld [vmem:[%s18 + $0x38] sm:$0xff]
      %v2501 = vld [vmem:[%s18 + $0x40] sm:$0xff]
      %v2502 = vld [vmem:[%s18 + $0x48] sm:$0xff]
      %v2503 = vld [vmem:[%s18 + $0x50] sm:$0xff]
      %v2504 = vld [vmem:[%s18 + $0x58] sm:$0xff]
      %v2505 = vld [vmem:[%s18 + $0x60] sm:$0xff]
      %v2506 = vld [vmem:[%s18 + $0x68] sm:$0xff]
      %v2507 = vld [vmem:[%s18 + $0x70] sm:$0xff]
      %v2508 = vld [vmem:[%s18 + $0x78] sm:$0xff]
      %v2509 = vadd.f32 %v2252, %v2253
      %v2510 = vadd.f32 %v2509, %v2254
      %v2511 = vadd.f32 %v2510, %v2255
      %v2512 = vadd.f32 %v2511, %v2256
      %v2513 = vadd.f32 %v2512, %v2257
      %v2514 = vadd.f32 %v2513, %v2258
      %v2515 = vadd.f32 %v2514, %v2259
      %v2516 = vrot.slane %v2515, 4
      %v2517 = vadd.f32 %v2515, %v2516
      %v2518 = vrot.slane %v2517, 2
      %v2519 = vadd.f32 %v2517, %v2518
      %v2520 = vrot.slane %v2519, 1
      %v2521 = vadd.f32 %v2519, %v2520
      %v2522 = vrcp.pop 64.0
      %v2523 = vmul.f32 %v2521, %v2522
      %v2524 = vmul.f32 %v2204, %v2523
      %v2525 = vmul.f32 %v2205, %v2523
      %v2526 = vmul.f32 %v2206, %v2523
      %v2527 = vmul.f32 %v2207, %v2523
      %v2528 = vmul.f32 %v2208, %v2523
      %v2529 = vmul.f32 %v2209, %v2523
      %v2530 = vmul.f32 %v2210, %v2523
      %v2531 = vmul.f32 %v2211, %v2523
      %v2532 = vpack.c.bf16 %v2525, %v2524
      %v2533 = vpack.c.bf16 %v2527, %v2526
      %v2534 = vpack.c.bf16 %v2529, %v2528
      %v2535 = vpack.c.bf16 %v2531, %v2530
      %v2536 = vpack.c.bf16 %v2494, %v2493
      %v2537 = vpack.c.bf16 %v2496, %v2495
      %v2538 = vpack.c.bf16 %v2498, %v2497
      %v2539 = vpack.c.bf16 %v2500, %v2499
      %v2540 = vpack.c.bf16 %v2502, %v2501
      %v2541 = vpack.c.bf16 %v2504, %v2503
      %v2542 = vpack.c.bf16 %v2506, %v2505
      %v2543 = vpack.c.bf16 %v2508, %v2507
      %2544 = vmatprep.subr.bf16.mxu0 0
      %2545 = vmatpush1.bf16.msra.mxu0 %v2543
      %2546 = vmatprep.subr.bf16.mxu0 0
      %2547 = vmatpush1.bf16.msra.mxu0 %v2542
      %2548 = vmatprep.subr.bf16.mxu0 0
      %2549 = vmatpush1.bf16.msra.mxu0 %v2541
      %2550 = vmatprep.subr.bf16.mxu0 0
      %2551 = vmatpush1.bf16.msra.mxu0 %v2540
      %2552 = vmatprep.subr.bf16.mxu0 0
      %2553 = vmatpush1.bf16.msra.mxu0 %v2539
      %2554 = vmatprep.subr.bf16.mxu0 0
      %2555 = vmatpush1.bf16.msra.mxu0 %v2538
      %2556 = vmatprep.subr.bf16.mxu0 0
      %2557 = vmatpush1.bf16.msra.mxu0 %v2537
      %2558 = vmatprep.subr.bf16.mxu0 0
      %2559 = vmatpush1.bf16.msra.mxu0 %v2536
      %2560 = vmatprep.subr.bf16.mxu0 0
      %2561 = vmatpush2.bf16.msra.mxu0 0
      %2562 = vmatprep.subr.bf16.mxu0 0
      %2563 = vmatpush2.bf16.msra.mxu0 0
      %2564 = vmatprep.subr.bf16.mxu0 0
      %2565 = vmatpush2.bf16.msra.mxu0 0
      %2566 = vmatprep.subr.bf16.mxu0 0
      %2567 = vmatpush2.bf16.msra.mxu0 0
      %2568 = vmatprep.subr.bf16.mxu0 0
      %2569 = vmatpush2.bf16.msra.mxu0 0
      %2570 = vmatprep.subr.bf16.mxu0 0
      %2571 = vmatpush2.bf16.msra.mxu0 0
      %2572 = vmatprep.subr.bf16.mxu0 0
      %2573 = vmatpush2.bf16.msra.mxu0 0
      %2574 = vmatprep.subr.bf16.mxu0 0
      %2575 = vmatpush2.bf16.msra.mxu0 0
      %2576 = vmatprep.mubr.bf16.mxu0 0
      %2577 = vmatmul.mubr.bf16.gmra.mxu0 %v2532
      %v2578 = vpop.f32.mrf.mxu0
      %v2579 = vadd.f32 1e-06, %v2578
      %v2580 = vpop.f32.mrf.mxu0
      %v2581 = vpop.f32.mrf.mxu0
      %v2582 = vadd.f32 1e-06, %v2581
      %v2583 = vpop.f32.mrf.mxu0
      %2584 = vmatprep.mubr.bf16.mxu0 0
      %2585 = vmatmul.mubr.bf16.gmra.mxu0 %v2533
      %v2586 = vpop.f32.mrf.mxu0
      %v2587 = vadd.f32 1e-06, %v2586
      %v2588 = vpop.f32.mrf.mxu0
      %v2589 = vpop.f32.mrf.mxu0
      %v2590 = vadd.f32 1e-06, %v2589
      %v2591 = vpop.f32.mrf.mxu0
      %2592 = vmatprep.mubr.bf16.mxu0 0
      %2593 = vmatmul.mubr.bf16.gmra.mxu0 %v2534
      %v2594 = vpop.f32.mrf.mxu0
      %v2595 = vadd.f32 1e-06, %v2594
      %v2596 = vpop.f32.mrf.mxu0
      %v2597 = vpop.f32.mrf.mxu0
      %v2598 = vadd.f32 1e-06, %v2597
      %v2599 = vpop.f32.mrf.mxu0
      %2600 = vmatprep.mubr.bf16.mxu0 0
      %2601 = vmatmul.mubr.bf16.gmra.mxu0 %v2535
      %v2602 = vpop.f32.mrf.mxu0
      %v2603 = vadd.f32 1e-06, %v2602
      %v2604 = vpop.f32.mrf.mxu0
      %v2605 = vpop.f32.mrf.mxu0
      %v2606 = vadd.f32 1e-06, %v2605
      %v2607 = vpop.f32.mrf.mxu0
      %2608 = vdwg.mxu0
      %v2609 = vrcp.pop %v2579
      %v2610 = vmul.f32 1.0, %v2609
      %v2611 = vrcp.pop %v2582
      %v2612 = vmul.f32 1.0, %v2611
      %v2613 = vrcp.pop %v2587
      %v2614 = vmul.f32 1.0, %v2613
      %v2615 = vrcp.pop %v2590
      %v2616 = vmul.f32 1.0, %v2615
      %v2617 = vrcp.pop %v2595
      %v2618 = vmul.f32 1.0, %v2617
      %v2619 = vrcp.pop %v2598
      %v2620 = vmul.f32 1.0, %v2619
      %v2621 = vrcp.pop %v2603
      %v2622 = vmul.f32 1.0, %v2621
      %v2623 = vrcp.pop %v2606
      %v2624 = vmul.f32 1.0, %v2623
      %v2625 = vmul.f32 %v2485, 0.125
      %v2626 = vmul.f32 %v2486, 0.125
      %v2627 = vmul.f32 %v2487, 0.125
      %v2628 = vmul.f32 %v2488, 0.125
      %v2629 = vmul.f32 %v2489, 0.125
      %v2630 = vmul.f32 %v2490, 0.125
      %v2631 = vmul.f32 %v2491, 0.125
      %v2632 = vmul.f32 %v2492, 0.125
      %v2633 = vpack.c.bf16 %v2626, %v2625
      %v2634 = vpack.c.bf16 %v2628, %v2627
      %v2635 = vpack.c.bf16 %v2630, %v2629
      %v2636 = vpack.c.bf16 %v2632, %v2631
      %v2637 = vmul.f32 %v1971, 0.125
      %v2638 = vmul.f32 %v1972, 0.125
      %v2639 = vmul.f32 %v1973, 0.125
      %v2640 = vmul.f32 %v1974, 0.125
      %v2641 = vmul.f32 %v1975, 0.125
      %v2642 = vmul.f32 %v1976, 0.125
      %v2643 = vmul.f32 %v1977, 0.125
      %v2644 = vmul.f32 %v1978, 0.125
      %v2645 = vpack.c.bf16 %v2638, %v2637
      %v2646 = vpack.c.bf16 %v2640, %v2639
      %v2647 = vpack.c.bf16 %v2642, %v2641
      %v2648 = vpack.c.bf16 %v2644, %v2643
      %2649 = vxpose.xlu0.c.b16.start [1/8] %v2633, 128
      %2650 = vxpose.xlu0.c.b16.cont [2/8] %v2634, 128
      %2651 = vxpose.xlu0.c.b16.cont [3/8] %v2635, 128
      %2652 = vxpose.xlu0.c.b16.cont [4/8] %v2636, 128
      %2653 = vxpose.xlu0.c.b16.cont [5/8] 0, 128
      %2654 = vxpose.xlu0.c.b16.cont [6/8] 0, 128
      %2655 = vxpose.xlu0.c.b16.cont [7/8] 0, 128
      %2656 = vxpose.xlu0.c.b16.end [8/8] 0, 128
      %v2657 = vpop.trf.xlu0
      %v2658 = vpop.trf.xlu0
      %v2659 = vpop.trf.xlu0
      %v2660 = vpop.trf.xlu0
      %v2661 = vpop.trf.xlu0
      %v2662 = vpop.trf.xlu0
      %v2663 = vpop.trf.xlu0
      %v2664 = vpop.trf.xlu0
      %vm2665 = vcmask 523264
      %v2667 = vsel %vm2665, %v2657, 0
      %v2670 = vsel %vm2665, %v2658, 0
      %v2673 = vsel %vm2665, %v2659, 0
      %v2676 = vsel %vm2665, %v2660, 0
      %v2679 = vsel %vm2665, %v2661, 0
      %v2682 = vsel %vm2665, %v2662, 0
      %v2685 = vsel %vm2665, %v2663, 0
      %v2688 = vsel %vm2665, %v2664, 0
      %2690 = vmatprep.subr.bf16.mxu0 0
      %2691 = vmatpush1.bf16.msra.mxu0 0
      %2692 = vmatprep.subr.bf16.mxu0 0
      %2693 = vmatpush1.bf16.msra.mxu0 0
      %2694 = vmatprep.subr.bf16.mxu0 0
      %2695 = vmatpush1.bf16.msra.mxu0 0
      %2696 = vmatprep.subr.bf16.mxu0 0
      %2697 = vmatpush1.bf16.msra.mxu0 0
      %2698 = vmatprep.subr.bf16.mxu0 0
      %2699 = vmatpush1.bf16.msra.mxu0 %v2648
      %2700 = vmatprep.subr.bf16.mxu0 0
      %2701 = vmatpush1.bf16.msra.mxu0 %v2647
      %2702 = vmatprep.subr.bf16.mxu0 0
      %2703 = vmatpush1.bf16.msra.mxu0 %v2646
      %2704 = vmatprep.subr.bf16.mxu0 0
      %2705 = vmatpush1.bf16.msra.mxu0 %v2645
      %2706 = vmatprep.subr.bf16.mxu0 0
      %2707 = vmatpush2.bf16.msra.mxu0 0
      %2708 = vmatprep.subr.bf16.mxu0 0
      %2709 = vmatpush2.bf16.msra.mxu0 0
      %2710 = vmatprep.subr.bf16.mxu0 0
      %2711 = vmatpush2.bf16.msra.mxu0 0
      %2712 = vmatprep.subr.bf16.mxu0 0
      %2713 = vmatpush2.bf16.msra.mxu0 0
      %2714 = vmatprep.subr.bf16.mxu0 0
      %2715 = vmatpush2.bf16.msra.mxu0 0
      %2716 = vmatprep.subr.bf16.mxu0 0
      %2717 = vmatpush2.bf16.msra.mxu0 0
      %2718 = vmatprep.subr.bf16.mxu0 0
      %2719 = vmatpush2.bf16.msra.mxu0 0
      %2720 = vmatprep.subr.bf16.mxu0 0
      %2721 = vmatpush2.bf16.msra.mxu0 0
      %2722 = vmatprep.mubr.bf16.mxu0 0
      %2723 = vmatmul.mubr.bf16.gmra.mxu0 %v2667
      %v2724 = vpop.f32.mrf.mxu0
      %v2725 = vadd.f32 0.0, %v2724
      %v2726 = vpop.f32.mrf.mxu0
      %v2727 = vpop.f32.mrf.mxu0
      %v2728 = vadd.f32 0.0, %v2727
      %v2729 = vpop.f32.mrf.mxu0
      %2730 = vmatprep.mubr.bf16.mxu0 0
      %2731 = vmatmul.mubr.bf16.gmra.mxu0 %v2670
      %v2732 = vpop.f32.mrf.mxu0
      %v2733 = vadd.f32 0.0, %v2732
      %v2734 = vpop.f32.mrf.mxu0
      %v2735 = vpop.f32.mrf.mxu0
      %v2736 = vadd.f32 0.0, %v2735
      %v2737 = vpop.f32.mrf.mxu0
      %2738 = vmatprep.mubr.bf16.mxu0 0
      %2739 = vmatmul.mubr.bf16.gmra.mxu0 %v2673
      %v2740 = vpop.f32.mrf.mxu0
      %v2741 = vadd.f32 0.0, %v2740
      %v2742 = vpop.f32.mrf.mxu0
      %v2743 = vpop.f32.mrf.mxu0
      %v2744 = vadd.f32 0.0, %v2743
      %v2745 = vpop.f32.mrf.mxu0
      %2746 = vmatprep.mubr.bf16.mxu0 0
      %2747 = vmatmul.mubr.bf16.gmra.mxu0 %v2676
      %v2748 = vpop.f32.mrf.mxu0
      %v2749 = vadd.f32 0.0, %v2748
      %v2750 = vpop.f32.mrf.mxu0
      %v2751 = vpop.f32.mrf.mxu0
      %v2752 = vadd.f32 0.0, %v2751
      %v2753 = vpop.f32.mrf.mxu0
      %2754 = vmatprep.mubr.bf16.mxu0 0
      %2755 = vmatmul.mubr.bf16.gmra.mxu0 %v2679
      %v2756 = vpop.f32.mrf.mxu0
      %v2757 = vadd.f32 0.0, %v2756
      %v2758 = vpop.f32.mrf.mxu0
      %v2759 = vpop.f32.mrf.mxu0
      %v2760 = vadd.f32 0.0, %v2759
      %v2761 = vpop.f32.mrf.mxu0
      %2762 = vmatprep.mubr.bf16.mxu0 0
      %2763 = vmatmul.mubr.bf16.gmra.mxu0 %v2682
      %v2764 = vpop.f32.mrf.mxu0
      %v2765 = vadd.f32 0.0, %v2764
      %v2766 = vpop.f32.mrf.mxu0
      %v2767 = vpop.f32.mrf.mxu0
      %v2768 = vadd.f32 0.0, %v2767
      %v2769 = vpop.f32.mrf.mxu0
      %2770 = vmatprep.mubr.bf16.mxu0 0
      %2771 = vmatmul.mubr.bf16.gmra.mxu0 %v2685
      %v2772 = vpop.f32.mrf.mxu0
      %v2773 = vadd.f32 0.0, %v2772
      %v2774 = vpop.f32.mrf.mxu0
      %v2775 = vpop.f32.mrf.mxu0
      %v2776 = vadd.f32 0.0, %v2775
      %v2777 = vpop.f32.mrf.mxu0
      %2778 = vmatprep.mubr.bf16.mxu0 0
      %2779 = vmatmul.mubr.bf16.gmra.mxu0 %v2688
      %v2780 = vpop.f32.mrf.mxu0
      %v2781 = vadd.f32 0.0, %v2780
      %v2782 = vpop.f32.mrf.mxu0
      %v2783 = vpop.f32.mrf.mxu0
      %v2784 = vadd.f32 0.0, %v2783
      %v2785 = vpop.f32.mrf.mxu0
      %2786 = vdwg.mxu0
      %v2787 = vmul.f32 %v2725, %v2493
      %v2788 = vmul.f32 %v2728, %v2494
      %v2789 = vmul.f32 %v2733, %v2495
      %v2790 = vmul.f32 %v2736, %v2496
      %v2791 = vmul.f32 %v2741, %v2497
      %v2792 = vmul.f32 %v2744, %v2498
      %v2793 = vmul.f32 %v2749, %v2499
      %v2794 = vmul.f32 %v2752, %v2500
      %v2795 = vmul.f32 %v2757, %v2501
      %v2796 = vmul.f32 %v2760, %v2502
      %v2797 = vmul.f32 %v2765, %v2503
      %v2798 = vmul.f32 %v2768, %v2504
      %v2799 = vmul.f32 %v2773, %v2505
      %v2800 = vmul.f32 %v2776, %v2506
      %v2801 = vmul.f32 %v2781, %v2507
      %v2802 = vmul.f32 %v2784, %v2508
      %v2803 = vpack.c.bf16 %v2462, %v2461
      %v2804 = vpack.c.bf16 %v2464, %v2463
      %v2805 = vpack.c.bf16 %v2466, %v2465
      %v2806 = vpack.c.bf16 %v2468, %v2467
      %v2807 = vpack.c.bf16 %v2788, %v2787
      %v2808 = vpack.c.bf16 %v2790, %v2789
      %v2809 = vpack.c.bf16 %v2792, %v2791
      %v2810 = vpack.c.bf16 %v2794, %v2793
      %v2811 = vpack.c.bf16 %v2796, %v2795
      %v2812 = vpack.c.bf16 %v2798, %v2797
      %v2813 = vpack.c.bf16 %v2800, %v2799
      %v2814 = vpack.c.bf16 %v2802, %v2801
      %2815 = vmatprep.subr.bf16.mxu0 0
      %2816 = vmatpush1.bf16.msra.mxu0 %v2814
      %2817 = vmatprep.subr.bf16.mxu0 0
      %2818 = vmatpush1.bf16.msra.mxu0 %v2813
      %2819 = vmatprep.subr.bf16.mxu0 0
      %2820 = vmatpush1.bf16.msra.mxu0 %v2812
      %2821 = vmatprep.subr.bf16.mxu0 0
      %2822 = vmatpush1.bf16.msra.mxu0 %v2811
      %2823 = vmatprep.subr.bf16.mxu0 0
      %2824 = vmatpush1.bf16.msra.mxu0 %v2810
      %2825 = vmatprep.subr.bf16.mxu0 0
      %2826 = vmatpush1.bf16.msra.mxu0 %v2809
      %2827 = vmatprep.subr.bf16.mxu0 0
      %2828 = vmatpush1.bf16.msra.mxu0 %v2808
      %2829 = vmatprep.subr.bf16.mxu0 0
      %2830 = vmatpush1.bf16.msra.mxu0 %v2807
      %2831 = vmatprep.subr.bf16.mxu0 0
      %2832 = vmatpush2.bf16.msra.mxu0 0
      %2833 = vmatprep.subr.bf16.mxu0 0
      %2834 = vmatpush2.bf16.msra.mxu0 0
      %2835 = vmatprep.subr.bf16.mxu0 0
      %2836 = vmatpush2.bf16.msra.mxu0 0
      %2837 = vmatprep.subr.bf16.mxu0 0
      %2838 = vmatpush2.bf16.msra.mxu0 0
      %2839 = vmatprep.subr.bf16.mxu0 0
      %2840 = vmatpush2.bf16.msra.mxu0 0
      %2841 = vmatprep.subr.bf16.mxu0 0
      %2842 = vmatpush2.bf16.msra.mxu0 0
      %2843 = vmatprep.subr.bf16.mxu0 0
      %2844 = vmatpush2.bf16.msra.mxu0 0
      %2845 = vmatprep.subr.bf16.mxu0 0
      %2846 = vmatpush2.bf16.msra.mxu0 0
      %2847 = vmatprep.mubr.bf16.mxu0 0
      %2848 = vmatmul.mubr.bf16.gmra.mxu0 %v2803
      %v2849 = vpop.f32.mrf.mxu0
      %v2850 = vadd.f32 0.0, %v2849
      %v2851 = vpop.f32.mrf.mxu0
      %v2852 = vpop.f32.mrf.mxu0
      %v2853 = vadd.f32 0.0, %v2852
      %v2854 = vpop.f32.mrf.mxu0
      %2855 = vmatprep.mubr.bf16.mxu0 0
      %2856 = vmatmul.mubr.bf16.gmra.mxu0 %v2804
      %v2857 = vpop.f32.mrf.mxu0
      %v2858 = vadd.f32 0.0, %v2857
      %v2859 = vpop.f32.mrf.mxu0
      %v2860 = vpop.f32.mrf.mxu0
      %v2861 = vadd.f32 0.0, %v2860
      %v2862 = vpop.f32.mrf.mxu0
      %2863 = vmatprep.mubr.bf16.mxu0 0
      %2864 = vmatmul.mubr.bf16.gmra.mxu0 %v2805
      %v2865 = vpop.f32.mrf.mxu0
      %v2866 = vadd.f32 0.0, %v2865
      %v2867 = vpop.f32.mrf.mxu0
      %v2868 = vpop.f32.mrf.mxu0
      %v2869 = vadd.f32 0.0, %v2868
      %v2870 = vpop.f32.mrf.mxu0
      %2871 = vmatprep.mubr.bf16.mxu0 0
      %2872 = vmatmul.mubr.bf16.gmra.mxu0 %v2806
      %v2873 = vpop.f32.mrf.mxu0
      %v2874 = vadd.f32 0.0, %v2873
      %v2875 = vpop.f32.mrf.mxu0
      %v2876 = vpop.f32.mrf.mxu0
      %v2877 = vadd.f32 0.0, %v2876
      %v2878 = vpop.f32.mrf.mxu0
      %2879 = vdwg.mxu0
      %v2880 = vmul.f32 %v2850, %v2610
      %v2881 = vmul.f32 %v2853, %v2612
      %v2882 = vmul.f32 %v2858, %v2614
      %v2883 = vmul.f32 %v2861, %v2616
      %v2884 = vmul.f32 %v2866, %v2618
      %v2885 = vmul.f32 %v2869, %v2620
      %v2886 = vmul.f32 %v2874, %v2622
      %v2887 = vmul.f32 %v2877, %v2624
      %v2888 = vld [vmem:[%s11] sm:$0xff]
      %v2889 = vld [vmem:[%s11 + $0x8] sm:$0x1]
      %v2890 = vld [vmem:[%s12] sm:$0x1]
      %v2892 = vlaneseq
      %v2893 = vshrl.u32 %v2892, 7
      %v2894 = vsub.s32 0, %v2893
      %v2895 = vrot.slane %v2890, %v2894
      %v2904 = vrot.slane %v1971, 7
      %v2905 = vrot.slane %v1972, 7
      %v2906 = vsel %vm808, %v2904, %v2905
      %v2907 = vrot.slane %v1973, 7
      %v2908 = vsel %vm808, %v2905, %v2907
      %v2909 = vrot.slane %v1974, 7
      %v2910 = vsel %vm808, %v2907, %v2909
      %v2911 = vrot.slane %v1975, 7
      %v2912 = vsel %vm808, %v2909, %v2911
      %v2913 = vrot.slane %v1976, 7
      %v2914 = vsel %vm808, %v2911, %v2913
      %v2915 = vrot.slane %v1977, 7
      %v2916 = vsel %vm808, %v2913, %v2915
      %v2924 = vsel %vm808, 0.0, %v2904
      %v2925 = vmul.f32 %v2924, %v753
      %v2926 = vmul.f32 %v2906, %v754
      %v2927 = vmul.f32 %v2908, %v755
      %v2928 = vmul.f32 %v2910, %v756
      %v2929 = vmul.f32 %v2912, %v757
      %v2930 = vmul.f32 %v2914, %v758
      %v2931 = vmul.f32 %v2916, %v759
      %v2932 = vlaneseq
      %v2933 = vshrl.u32 %v2932, 7
      %v2934 = vsub.s32 0, %v2933
      %v2935 = vrot.slane %v2888, %v2934
      %v2936 = vmul.f32 %v2935, %v830
      %v2937 = vmul.f32 %v2935, %v2925
      %v2938 = vmul.f32 %v2935, %v2926
      %v2939 = vmul.f32 %v2935, %v2927
      %v2940 = vmul.f32 %v2935, %v2928
      %v2941 = vmul.f32 %v2935, %v2929
      %v2942 = vmul.f32 %v2935, %v2930
      %v2943 = vmul.f32 %v2935, %v2931
      %v2944 = vadd.f32 %v2895, %v2936
      %v2945 = vadd.f32 %v2895, %v2937
      %v2946 = vadd.f32 %v2895, %v2938
      %v2947 = vadd.f32 %v2895, %v2939
      %v2948 = vadd.f32 %v2895, %v2940
      %v2949 = vadd.f32 %v2895, %v2941
      %v2950 = vadd.f32 %v2895, %v2942
      %v2951 = vadd.f32 %v2895, %v2943
      %v2952 = vlaneseq
      %v2953 = vshrl.u32 %v2952, 7
      %v2954 = vsub.s32 1, %v2953
      %v2955 = vrot.slane %v2888, %v2954
      %v2956 = vmul.f32 %v2955, 0.0
      %v2957 = vmul.f32 %v2955, %v1971
      %v2958 = vmul.f32 %v2955, %v1972
      %v2959 = vmul.f32 %v2955, %v1973
      %v2960 = vmul.f32 %v2955, %v1974
      %v2961 = vmul.f32 %v2955, %v1975
      %v2962 = vmul.f32 %v2955, %v1976
      %v2963 = vmul.f32 %v2955, %v1977
      %v2964 = vadd.f32 %v2944, %v2956
      %v2965 = vadd.f32 %v2945, %v2957
      %v2966 = vadd.f32 %v2946, %v2958
      %v2967 = vadd.f32 %v2947, %v2959
      %v2968 = vadd.f32 %v2948, %v2960
      %v2969 = vadd.f32 %v2949, %v2961
      %v2970 = vadd.f32 %v2950, %v2962
      %v2971 = vadd.f32 %v2951, %v2963
      %v2973 = vrot.slane %v1971, 1
      %v2974 = vrot.slane %v1972, 1
      %v2975 = vsel %vm879, %v2973, %v2974
      %v2976 = vrot.slane %v1973, 1
      %v2977 = vsel %vm879, %v2974, %v2976
      %v2978 = vrot.slane %v1974, 1
      %v2979 = vsel %vm879, %v2976, %v2978
      %v2980 = vrot.slane %v1975, 1
      %v2981 = vsel %vm879, %v2978, %v2980
      %v2982 = vrot.slane %v1976, 1
      %v2983 = vsel %vm879, %v2980, %v2982
      %v2984 = vrot.slane %v1977, 1
      %v2985 = vsel %vm879, %v2982, %v2984
      %v2986 = vrot.slane %v1978, 1
      %v2987 = vsel %vm879, %v2984, %v2986
      %v2996 = vsel %vm879, 0.0, %v2973
      %v2997 = vmul.f32 %v2996, %v776
      %v2998 = vmul.f32 %v2975, %v777
      %v2999 = vmul.f32 %v2977, %v778
      %v3000 = vmul.f32 %v2979, %v779
      %v3001 = vmul.f32 %v2981, %v780
      %v3002 = vmul.f32 %v2983, %v781
      %v3003 = vmul.f32 %v2985, %v782
      %v3004 = vmul.f32 %v2987, %v783
      %v3005 = vlaneseq
      %v3006 = vshrl.u32 %v3005, 7
      %v3007 = vsub.s32 2, %v3006
      %v3008 = vrot.slane %v2888, %v3007
      %v3009 = vmul.f32 %v3008, %v2997
      %v3010 = vmul.f32 %v3008, %v2998
      %v3011 = vmul.f32 %v3008, %v2999
      %v3012 = vmul.f32 %v3008, %v3000
      %v3013 = vmul.f32 %v3008, %v3001
      %v3014 = vmul.f32 %v3008, %v3002
      %v3015 = vmul.f32 %v3008, %v3003
      %v3016 = vmul.f32 %v3008, %v3004
      %v3017 = vadd.f32 %v2964, %v3009
      %v3018 = vadd.f32 %v2965, %v3010
      %v3019 = vadd.f32 %v2966, %v3011
      %v3020 = vadd.f32 %v2967, %v3012
      %v3021 = vadd.f32 %v2968, %v3013
      %v3022 = vadd.f32 %v2969, %v3014
      %v3023 = vadd.f32 %v2970, %v3015
      %v3024 = vadd.f32 %v2971, %v3016
      %v3025 = vrot.slane %v1978, 7
      %v3026 = vsel %vm808, %v2915, %v3025
      %v3028 = vmul.f32 %v2924, %v752
      %v3029 = vmul.f32 %v2906, %v753
      %v3030 = vmul.f32 %v2908, %v754
      %v3031 = vmul.f32 %v2910, %v755
      %v3032 = vmul.f32 %v2912, %v756
      %v3033 = vmul.f32 %v2914, %v757
      %v3034 = vmul.f32 %v2916, %v758
      %v3035 = vmul.f32 %v3026, %v759
      %v3036 = vlaneseq
      %v3037 = vshrl.u32 %v3036, 7
      %v3038 = vsub.s32 3, %v3037
      %v3039 = vrot.slane %v2888, %v3038
      %v3040 = vmul.f32 %v3039, %v3028
      %v3041 = vmul.f32 %v3039, %v3029
      %v3042 = vmul.f32 %v3039, %v3030
      %v3043 = vmul.f32 %v3039, %v3031
      %v3044 = vmul.f32 %v3039, %v3032
      %v3045 = vmul.f32 %v3039, %v3033
      %v3046 = vmul.f32 %v3039, %v3034
      %v3047 = vmul.f32 %v3039, %v3035
      %v3048 = vadd.f32 %v3017, %v3040
      %v3049 = vadd.f32 %v3018, %v3041
      %v3050 = vadd.f32 %v3019, %v3042
      %v3051 = vadd.f32 %v3020, %v3043
      %v3052 = vadd.f32 %v3021, %v3044
      %v3053 = vadd.f32 %v3022, %v3045
      %v3054 = vadd.f32 %v3023, %v3046
      %v3055 = vadd.f32 %v3024, %v3047
      %v3056 = vlaneseq
      %v3057 = vshrl.u32 %v3056, 7
      %v3058 = vsub.s32 4, %v3057
      %v3059 = vrot.slane %v2888, %v3058
      %v3060 = vmul.f32 %v3059, %v1971
      %v3061 = vmul.f32 %v3059, %v1972
      %v3062 = vmul.f32 %v3059, %v1973
      %v3063 = vmul.f32 %v3059, %v1974
      %v3064 = vmul.f32 %v3059, %v1975
      %v3065 = vmul.f32 %v3059, %v1976
      %v3066 = vmul.f32 %v3059, %v1977
      %v3067 = vmul.f32 %v3059, %v1978
      %v3068 = vadd.f32 %v3048, %v3060
      %v3069 = vadd.f32 %v3049, %v3061
      %v3070 = vadd.f32 %v3050, %v3062
      %v3071 = vadd.f32 %v3051, %v3063
      %v3072 = vadd.f32 %v3052, %v3064
      %v3073 = vadd.f32 %v3053, %v3065
      %v3074 = vadd.f32 %v3054, %v3066
      %v3075 = vadd.f32 %v3055, %v3067
      %v3077 = vsel %vm879, %v2986, 0.0
      %v3078 = vmul.f32 %v2975, %v776
      %v3079 = vmul.f32 %v2977, %v777
      %v3080 = vmul.f32 %v2979, %v778
      %v3081 = vmul.f32 %v2981, %v779
      %v3082 = vmul.f32 %v2983, %v780
      %v3083 = vmul.f32 %v2985, %v781
      %v3084 = vmul.f32 %v2987, %v782
      %v3085 = vmul.f32 %v3077, %v783
      %v3086 = vlaneseq
      %v3087 = vshrl.u32 %v3086, 7
      %v3088 = vsub.s32 5, %v3087
      %v3089 = vrot.slane %v2888, %v3088
      %v3090 = vmul.f32 %v3089, %v3078
      %v3091 = vmul.f32 %v3089, %v3079
      %v3092 = vmul.f32 %v3089, %v3080
      %v3093 = vmul.f32 %v3089, %v3081
      %v3094 = vmul.f32 %v3089, %v3082
      %v3095 = vmul.f32 %v3089, %v3083
      %v3096 = vmul.f32 %v3089, %v3084
      %v3097 = vmul.f32 %v3089, %v3085
      %v3098 = vadd.f32 %v3068, %v3090
      %v3099 = vadd.f32 %v3069, %v3091
      %v3100 = vadd.f32 %v3070, %v3092
      %v3101 = vadd.f32 %v3071, %v3093
      %v3102 = vadd.f32 %v3072, %v3094
      %v3103 = vadd.f32 %v3073, %v3095
      %v3104 = vadd.f32 %v3074, %v3096
      %v3105 = vadd.f32 %v3075, %v3097
      %v3107 = vsel %vm808, %v3025, 0.0
      %v3108 = vmul.f32 %v2906, %v752
      %v3109 = vmul.f32 %v2908, %v753
      %v3110 = vmul.f32 %v2910, %v754
      %v3111 = vmul.f32 %v2912, %v755
      %v3112 = vmul.f32 %v2914, %v756
      %v3113 = vmul.f32 %v2916, %v757
      %v3114 = vmul.f32 %v3026, %v758
      %v3115 = vmul.f32 %v3107, %v759
      %v3116 = vlaneseq
      %v3117 = vshrl.u32 %v3116, 7
      %v3118 = vsub.s32 6, %v3117
      %v3119 = vrot.slane %v2888, %v3118
      %v3120 = vmul.f32 %v3119, %v3108
      %v3121 = vmul.f32 %v3119, %v3109
      %v3122 = vmul.f32 %v3119, %v3110
      %v3123 = vmul.f32 %v3119, %v3111
      %v3124 = vmul.f32 %v3119, %v3112
      %v3125 = vmul.f32 %v3119, %v3113
      %v3126 = vmul.f32 %v3119, %v3114
      %v3127 = vmul.f32 %v3119, %v3115
      %v3128 = vadd.f32 %v3098, %v3120
      %v3129 = vadd.f32 %v3099, %v3121
      %v3130 = vadd.f32 %v3100, %v3122
      %v3131 = vadd.f32 %v3101, %v3123
      %v3132 = vadd.f32 %v3102, %v3124
      %v3133 = vadd.f32 %v3103, %v3125
      %v3134 = vadd.f32 %v3104, %v3126
      %v3135 = vadd.f32 %v3105, %v3127
      %v3136 = vlaneseq
      %v3137 = vshrl.u32 %v3136, 7
      %v3138 = vsub.s32 7, %v3137
      %v3139 = vrot.slane %v2888, %v3138
      %v3140 = vmul.f32 %v3139, %v1972
      %v3141 = vmul.f32 %v3139, %v1973
      %v3142 = vmul.f32 %v3139, %v1974
      %v3143 = vmul.f32 %v3139, %v1975
      %v3144 = vmul.f32 %v3139, %v1976
      %v3145 = vmul.f32 %v3139, %v1977
      %v3146 = vmul.f32 %v3139, %v1978
      %v3147 = vmul.f32 %v3139, 0.0
      %v3148 = vadd.f32 %v3128, %v3140
      %v3149 = vadd.f32 %v3129, %v3141
      %v3150 = vadd.f32 %v3130, %v3142
      %v3151 = vadd.f32 %v3131, %v3143
      %v3152 = vadd.f32 %v3132, %v3144
      %v3153 = vadd.f32 %v3133, %v3145
      %v3154 = vadd.f32 %v3134, %v3146
      %v3155 = vadd.f32 %v3135, %v3147
      %v3156 = vmul.f32 %v2977, %v776
      %v3157 = vmul.f32 %v2979, %v777
      %v3158 = vmul.f32 %v2981, %v778
      %v3159 = vmul.f32 %v2983, %v779
      %v3160 = vmul.f32 %v2985, %v780
      %v3161 = vmul.f32 %v2987, %v781
      %v3162 = vmul.f32 %v3077, %v782
      %v3163 = vlaneseq
      %v3164 = vshrl.u32 %v3163, 7
      %v3165 = vsub.s32 0, %v3164
      %v3166 = vrot.slane %v2889, %v3165
      %v3167 = vmul.f32 %v3166, %v3156
      %v3168 = vmul.f32 %v3166, %v3157
      %v3169 = vmul.f32 %v3166, %v3158
      %v3170 = vmul.f32 %v3166, %v3159
      %v3171 = vmul.f32 %v3166, %v3160
      %v3172 = vmul.f32 %v3166, %v3161
      %v3173 = vmul.f32 %v3166, %v3162
      %v3174 = vmul.f32 %v3166, %v1070
      %v3175 = vadd.f32 %v3148, %v3167
      %v3176 = vadd.f32 %v3149, %v3168
      %v3177 = vadd.f32 %v3150, %v3169
      %v3178 = vadd.f32 %v3151, %v3170
      %v3179 = vadd.f32 %v3152, %v3171
      %v3180 = vadd.f32 %v3153, %v3172
      %v3181 = vadd.f32 %v3154, %v3173
      %v3182 = vadd.f32 %v3155, %v3174
      %v3183 = vadd.f32 %v2880, %v3175
      %v3184 = vadd.f32 %v2881, %v3176
      %v3185 = vadd.f32 %v2882, %v3177
      %v3186 = vadd.f32 %v2883, %v3178
      %v3187 = vadd.f32 %v2884, %v3179
      %v3188 = vadd.f32 %v2885, %v3180
      %v3189 = vadd.f32 %v2886, %v3181
      %v3190 = vadd.f32 %v2887, %v3182
      %v3191 = vmul.f32 %v3183, %v1620
      %v3192 = vmul.f32 %v3184, %v1621
      %v3193 = vmul.f32 %v3185, %v1622
      %v3194 = vmul.f32 %v3186, %v1623
      %v3195 = vmul.f32 %v3187, %v1624
      %v3196 = vmul.f32 %v3188, %v1625
      %v3197 = vmul.f32 %v3189, %v1626
      %v3198 = vmul.f32 %v3190, %v1627
      %v3199 = vld [vmem:[%s13] sm:$0xf]
      %v3200 = vld [vmem:[%s13 + $0x4] sm:$0xf]
      %v3201 = vld [vmem:[%s13 + $0x8] sm:$0xf]
      %v3202 = vld [vmem:[%s13 + $0xc] sm:$0xf]
      %v3203 = vld [vmem:[%s13 + $0x10] sm:$0xf]
      %v3204 = vld [vmem:[%s13 + $0x14] sm:$0xf]
      %v3205 = vld [vmem:[%s13 + $0x18] sm:$0xf]
      %v3206 = vld [vmem:[%s13 + $0x1c] sm:$0xf]
      %v3207 = vld [vmem:[%s13 + $0x20] sm:$0xf]
      %v3208 = vld [vmem:[%s13 + $0x24] sm:$0xf]
      %v3209 = vld [vmem:[%s13 + $0x28] sm:$0xf]
      %v3210 = vld [vmem:[%s13 + $0x2c] sm:$0xf]
      %v3211 = vld [vmem:[%s13 + $0x30] sm:$0xf]
      %v3212 = vld [vmem:[%s13 + $0x34] sm:$0xf]
      %v3213 = vld [vmem:[%s13 + $0x38] sm:$0xf]
      %v3214 = vld [vmem:[%s13 + $0x3c] sm:$0xf]
      %v3215 = vpack.c.bf16 %v3192, %v3191
      %v3216 = vpack.c.bf16 %v3194, %v3193
      %v3217 = vpack.c.bf16 %v3196, %v3195
      %v3218 = vpack.c.bf16 %v3198, %v3197
      %v3219 = vld [vmem:[%s14] sm:$0x1]
      %v3221 = vlaneseq
      %v3222 = vshrl.u32 %v3221, 7
      %v3223 = vsub.s32 0, %v3222
      %v3224 = vrot.slane %v3219, %v3223
      %v3242 = vunpack.c.l.b16 %v3199
      %v3243 = vunpack.c.l.b16 %v3200
      %v3244 = vunpack.c.l.b16 %v3201
      %v3245 = vunpack.c.l.b16 %v3202
      %v3246 = vunpack.c.l.b16 %v3203
      %v3247 = vunpack.c.l.b16 %v3204
      %v3248 = vunpack.c.l.b16 %v3205
      %v3249 = vunpack.c.l.b16 %v3206
      %v3250 = vunpack.c.l.b16 %v3207
      %v3251 = vunpack.c.l.b16 %v3208
      %v3252 = vunpack.c.l.b16 %v3209
      %v3253 = vunpack.c.l.b16 %v3210
      %v3254 = vunpack.c.l.b16 %v3211
      %v3255 = vunpack.c.l.b16 %v3212
      %v3256 = vunpack.c.l.b16 %v3213
      %v3257 = vunpack.c.l.b16 %v3214
      %v3258 = vpack.c.b16 %v3243, %v3242
      %v3259 = vpack.c.b16 %v3245, %v3244
      %v3260 = vpack.c.b16 %v3247, %v3246
      %v3261 = vpack.c.b16 %v3249, %v3248
      %v3262 = vpack.c.b16 %v3251, %v3250
      %v3263 = vpack.c.b16 %v3253, %v3252
      %v3264 = vpack.c.b16 %v3255, %v3254
      %v3265 = vpack.c.b16 %v3257, %v3256
      %3274 = vmatprep.subr.bf16.mxu0 0
      %3275 = vmatpush1.bf16.msra.mxu0 %v3265
      %3276 = vmatprep.subr.bf16.mxu0 0
      %3277 = vmatpush1.bf16.msra.mxu0 %v3264
      %3278 = vmatprep.subr.bf16.mxu0 0
      %3279 = vmatpush1.bf16.msra.mxu0 %v3263
      %3280 = vmatprep.subr.bf16.mxu0 0
      %3281 = vmatpush1.bf16.msra.mxu0 %v3262
      %3282 = vmatprep.subr.bf16.mxu0 0
      %3283 = vmatpush1.bf16.msra.mxu0 %v3261
      %3284 = vmatprep.subr.bf16.mxu0 0
      %3285 = vmatpush1.bf16.msra.mxu0 %v3260
      %3286 = vmatprep.subr.bf16.mxu0 0
      %3287 = vmatpush1.bf16.msra.mxu0 %v3259
      %3288 = vmatprep.subr.bf16.mxu0 0
      %3289 = vmatpush1.bf16.msra.mxu0 %v3258
      %3290 = vmatprep.subr.bf16.mxu0 0
      %3291 = vmatpush2.bf16.msra.mxu0 0
      %3292 = vmatprep.subr.bf16.mxu0 0
      %3293 = vmatpush2.bf16.msra.mxu0 0
      %3294 = vmatprep.subr.bf16.mxu0 0
      %3295 = vmatpush2.bf16.msra.mxu0 0
      %3296 = vmatprep.subr.bf16.mxu0 0
      %3297 = vmatpush2.bf16.msra.mxu0 0
      %3298 = vmatprep.subr.bf16.mxu0 0
      %3299 = vmatpush2.bf16.msra.mxu0 0
      %3300 = vmatprep.subr.bf16.mxu0 0
      %3301 = vmatpush2.bf16.msra.mxu0 0
      %3302 = vmatprep.subr.bf16.mxu0 0
      %3303 = vmatpush2.bf16.msra.mxu0 0
      %3304 = vmatprep.subr.bf16.mxu0 0
      %3305 = vmatpush2.bf16.msra.mxu0 0
      %3306 = vmatprep.mubr.bf16.mxu0 0
      %3307 = vmatmul.mubr.bf16.gmra.mxu0 %v3215
      %v3308 = vpop.f32.mrf.mxu0
      %v3309 = vadd.f32 %v3224, %v3308
      %v3310 = vpop.f32.mrf.mxu0
      %v3311 = vpop.f32.mrf.mxu0
      %v3312 = vadd.f32 %v3224, %v3311
      %v3313 = vpop.f32.mrf.mxu0
      %3314 = vmatprep.mubr.bf16.mxu0 0
      %3315 = vmatmul.mubr.bf16.gmra.mxu0 %v3216
      %v3316 = vpop.f32.mrf.mxu0
      %v3317 = vadd.f32 %v3224, %v3316
      %v3318 = vpop.f32.mrf.mxu0
      %v3319 = vpop.f32.mrf.mxu0
      %v3320 = vadd.f32 %v3224, %v3319
      %v3321 = vpop.f32.mrf.mxu0
      %3322 = vmatprep.mubr.bf16.mxu0 0
      %3323 = vmatmul.mubr.bf16.gmra.mxu0 %v3217
      %v3324 = vpop.f32.mrf.mxu0
      %v3325 = vadd.f32 %v3224, %v3324
      %v3326 = vpop.f32.mrf.mxu0
      %v3327 = vpop.f32.mrf.mxu0
      %v3328 = vadd.f32 %v3224, %v3327
      %v3329 = vpop.f32.mrf.mxu0
      %3330 = vmatprep.mubr.bf16.mxu0 0
      %3331 = vmatmul.mubr.bf16.gmra.mxu0 %v3218
      %v3332 = vpop.f32.mrf.mxu0
      %v3333 = vadd.f32 %v3224, %v3332
      %v3334 = vpop.f32.mrf.mxu0
      %v3335 = vpop.f32.mrf.mxu0
      %v3336 = vadd.f32 %v3224, %v3335
      %v3337 = vpop.f32.mrf.mxu0
      %3338 = vdwg.mxu0
      %3339 = vst [vmem:[%s629] sm:$0xff] %v3309
      %3340 = vst [vmem:[%s629 + $0x8] sm:$0xff] %v3312
      %3341 = vst [vmem:[%s629 + $0x10] sm:$0xff] %v3317
      %3342 = vst [vmem:[%s629 + $0x18] sm:$0xff] %v3320
      %3343 = vst [vmem:[%s629 + $0x20] sm:$0xff] %v3325
      %3344 = vst [vmem:[%s629 + $0x28] sm:$0xff] %v3328
      %3345 = vst [vmem:[%s629 + $0x30] sm:$0xff] %v3333
      %3346 = vst [vmem:[%s629 + $0x38] sm:$0xff] %v3336
      %p3347 = scmp.lt.s32.totalorder %s31, 1
      %s3348 = scalar_select %p3347, %s31, 1
      %s3349 = smul.addr %s3348, 8
      %s3350 = smul.addr %s3349, 8
      %s3351 = scalar_lea.vmem %s20, %s3350
      // Predicated region
      $region101: #{_lambda_.1} parent=99 // pred_check
        %p3352 = pneg %p474
      $region102: #{_lambda_.1} parent=99 // pred_check_branch
        %3354 = sbr.rel (%p3352) target = $region104
      $region103: #{_lambda_.1} parent=99 // pred_region
        _
      $region104: #{_lambda_.1} parent=99 // pred_fallthru
        _
    $region100: #{_lambda_.1} parent=5 // pred_fallthru
      _
    %p3355 = scmp.le.s32.totalorder 2, %s26
    // Predicated region
    $region105: #{_lambda_.1} parent=5 // pred_check
      %p3356 = pneg %p3355
    $region106: #{_lambda_.1} parent=5 // pred_check_branch
      %3358 = sbr.rel (%p3356) target = $region108
    $region107: #{_lambda_.1} parent=5 // pred_region
      %s3359 = ssub.s32 %s26, 2
      // Predicated region
      $region109: #{_lambda_.1} parent=107 // pred_check
        %p3360 = pneg %p480
      $region110: #{_lambda_.1} parent=107 // pred_check_branch
        %3362 = sbr.rel (%p3360) target = $region112
      $region111: #{_lambda_.1} parent=107 // pred_region
        %p3363 = scmp.lt.s32.totalorder %s32, 1
        %s3364 = scalar_select %p3363, %s32, 1
        %s3365 = smul.addr %s3364, 8
        %s3366 = smul.addr %s3365, 8
        %s3367 = scalar_lea.vmem %s20, %s3366
      $region112: #{_lambda_.1} parent=107 // pred_fallthru
        _
    $region108: #{_lambda_.1} parent=5 // pred_fallthru
      _
  $region6: #{_lambda_.1} parent=0 // loop_footer
    %s30 = sadd.s32 1, %s26
  $region7: #{_lambda_.1} parent=0 // loop_footer_branch
    %25 = sbr.rel target = $region3
  $region8: #{_lambda_.1} parent=0 // loop_exit
    _

</llo_original>
